<compile_context>
chip_gen: v7x
topology: tpu7x:2x2x1
jax: 0.10.0
libtpu: 0.0.40
codegen_flags: <defaults>
</compile_context>

<pallas_src>
import jax
import jax.numpy as jnp
from jax import lax
from jax.experimental import pallas as pl
from jax.experimental.pallas import tpu as pltpu

GEN_EPS = 1e-7       # GENConv message eps
BN_EPS = 1e-5        # torch BatchNorm1d eps (training-mode batch statistics)
LN_EPS = 1e-5        # pyg LayerNorm eps
LEAKY_SLOPE = 0.01   # torch.nn.LeakyReLU default negative_slope
DEN_TINY = 1e-12     # guard for the softmax-aggregation denominator
LANE = 128           # TPU lane width -> lane-dense output slab


# ----------------------------------------------------------------------------- kernel
def _genconv_core(h_src, x_dst, A, w1, b1, w2, b2):
    """GENConv(aggr='softmax') body once src/dst are already in out_channels space.

    A is the dense adjacency A[dst, src] in {0,1} (bf16: exact).  Numerator and
    denominator of the softmax aggregation come from a single MXU pass on
    [m*e | e]; the A-row push count is half that of two separate matmuls.
    """
    f = h_src.shape[-1]
    m = jnp.maximum(h_src, 0.0) + GEN_EPS                      # message relu(x_j)+eps
    # Subtracting the per-feature *global* max is the same constant shift inside
    # every softmax group, so it cancels in num/den and matches PyG's per-group shift.
    e = jnp.exp(m - jnp.max(m, axis=0, keepdims=True))
    rhs = jnp.concatenate([m * e, e], axis=-1).astype(A.dtype)  # [N, 2F] (bf16)
    agg2 = jnp.dot(A, rhs, preferred_element_type=jnp.float32)  # one MXU pass
    num = agg2[:, :f]
    den = agg2[:, f:]
    # isolated dst rows: num == den == 0 exactly -> agg == 0 (no NaN/Inf)
    agg = num * pl.reciprocal(den + DEN_TINY, approx=True)      # EUP, ~2^-12 rel err
    out = agg + x_dst                                           # + self (dst) term
    # MLP: Linear -> BatchNorm1d (batch stats, gamma=1, beta=0) -> ReLU -> Linear
    z = jnp.dot(out.astype(w1.dtype), w1, preferred_element_type=jnp.float32) + b1
    mu = jnp.mean(z, axis=0, keepdims=True)
    var = jnp.mean((z - mu) ** 2, axis=0, keepdims=True)
    z = jnp.maximum((z - mu) * lax.rsqrt(var + BN_EPS), 0.0)
    return jnp.dot(z.astype(w2.dtype), w2, preferred_element_type=jnp.float32) + b2


def _graphnet_kernel(xp_ref, A_ref, win_ref, bin_ref,
                     lnw_ref, lnb_ref, w1_ref, b1_ref, w2_ref, b2_ref,
                     wsd_ref, bsd_ref, ow1_ref, ob1_ref, ow2_ref, ob2_ref,
                     o_ref):
    A = A_ref[...]                                              # VMEM-resident for all layers
    # fused input projection: [x | pos] @ [W_node ; W_elem] + (b_node + b_elem)
    h0 = jnp.dot(xp_ref[...], win_ref[...],
                 preferred_element_type=jnp.float32) + bin_ref[...]

    num_layers = w1_ref.shape[0]

    def layer(l, x):
        # pyg LayerNorm mode='graph' (batch=None): scalar mean / population std,
        # denominator (std + eps), then per-feature affine.
        mu = jnp.mean(x, keepdims=True)                         # [1, 1]
        var = jnp.mean((x - mu) ** 2, keepdims=True)
        inv = 1.0 / (jnp.sqrt(var) + LN_EPS)                    # scalar divide, negligible
        g = (x - mu) * inv * lnw_ref[l] + lnb_ref[l]
        g = jnp.maximum(g, LEAKY_SLOPE * g)                     # LeakyReLU
        y = _genconv_core(g, g, A, w1_ref[l], b1_ref[l], w2_ref[l], b2_ref[l])
        return x + y                                            # DeepGCNLayer 'res+'

    # compact layer loop (bounded live ranges for deep nets); fully unrolled here.
    h = lax.fori_loop(0, num_layers, layer, h0, unroll=True)

    # output GENConv head: fused lin_src|lin_dst -> one matmul, then lane split
    out_dim = ow1_ref.shape[0]
    sd = jnp.dot(h.astype(wsd_ref.dtype), wsd_ref[...],
                 preferred_element_type=jnp.float32) + bsd_ref[...]
    h_src = sd[:, :out_dim]
    x_dst = sd[:, out_dim:]
    # ow2 / ob2 are zero-padded to 128 output columns -> lane-dense [N, 128] store
    o_ref[...] = _genconv_core(h_src, x_dst, A, ow1_ref[...], ob1_ref[...],
                               ow2_ref[...], ob2_ref[...])


# --------------------------------------------------------------------------- glue
def _vmem_limit_bytes():
    """Generation-aware scoped-VMEM budget (v5e/v6e: 128 MiB, v7x: 64 MiB per TC)."""
    cap = None
    try:
        info = pltpu.get_tpu_info()
        for name in ("vmem_capacity_bytes", "vmem_size_bytes"):
            cap = getattr(info, name, None)
            if cap:
                break
    except Exception:
        cap = None
    if not cap:
        cap = 64 * 1024 * 1024                        # conservative fallback (v7x size)
    # leave ~25% headroom for Mosaic-internal scratch, hard ceiling 100 MiB
    return int(min(cap * 3 // 4, 100 * 1024 * 1024))


def build_adjacency(edge_index, num_nodes):
    """Dense A[dst, src] in {0,1}, bf16 ({0,1} exact; halves DMA/VMEM vs f32).

    Build ONCE per graph and reuse across forwards.  If bit-tight validation of
    the softmax aggregation against an f32 PyG reference is required, return f32
    instead (the kernel follows A.dtype for the aggregation matmul operands).
    """
    A = jnp.zeros((num_nodes, num_nodes), jnp.float32)
    A = A.at[edge_index[1], edge_index[0]].set(1.0)
    return A.astype(jnp.bfloat16)
    # TODO(synk): for large N (esp. v7x's 64 MiB VMEM / 2 TensorCores) replace the
    # resident dense A with a dst-row-tiled "parallel" grid axis or stream row chunks
    # of A from HBM (memory_space=pl.ANY + pltpu.emit_pipeline); for production sizes
    # batch several graphs block-diagonally so every matmul fills an MXU tile.


@jax.jit
def graphnet_forward(params, x, pos, A):
    num_nodes = x.shape[0]
    op = params["out"]
    out_dim = op["w1"].shape[0]

    # fuse the two input Linears into a single bf16 matmul operand: [x | pos]
    xp = jnp.concatenate([x, pos], axis=1).astype(jnp.bfloat16)

    args = (xp, A, params["in_w"], params["in_b"],
            params["ln_w"], params["ln_b"],
            params["w1"], params["b1"], params["w2"], params["b2"],
            op["wsd"], op["bsd"], op["w1"], op["b1"], op["w2"], op["b2"])

    out_pad = pl.pallas_call(
        _graphnet_kernel,
        # lane-dense [N, 128] output slab (unmasked full-lane stores); sliced below
        out_shape=jax.ShapeDtypeStruct((num_nodes, LANE), jnp.float32),
        # no grid: whole arrays live in single (non-double-buffered) VMEM buffers
        in_specs=[pl.BlockSpec(memory_space=pltpu.MemorySpace.VMEM)] * len(args),
        out_specs=pl.BlockSpec(memory_space=pltpu.MemorySpace.VMEM),
        compiler_params=pltpu.CompilerParams(vmem_limit_bytes=_vmem_limit_bytes()),
    )(*args)
    return out_pad[:, :out_dim]


def _linear_init(key, fan_in, fan_out):
    kw, kb = jax.random.split(key)
    bound = float(fan_in) ** -0.5
    w = jax.random.uniform(kw, (fan_in, fan_out), jnp.float32, -bound, bound)
    b = jax.random.uniform(kb, (1, fan_out), jnp.float32, -bound, bound)
    return w, b


def init_params(key, in_node, in_elem, hidden, out_dim, num_layers):
    def nxt():
        nonlocal key
        key, sub = jax.random.split(key)
        return sub

    bf16 = jnp.bfloat16
    p = {}
    node_w, node_b = _linear_init(nxt(), in_node, hidden)
    elem_w, elem_b = _linear_init(nxt(), in_elem, hidden)
    # fused input projection (node | element); weights pre-cast to bf16, biases f32
    p["in_w"] = jnp.concatenate([node_w, elem_w], axis=0).astype(bf16)
    p["in_b"] = node_b + elem_b

    w1s, b1s, w2s, b2s = [], [], [], []
    for _ in range(num_layers):
        w1, b1 = _linear_init(nxt(), hidden, 2 * hidden)
        w2, b2 = _linear_init(nxt(), 2 * hidden, hidden)
        w1s.append(w1); b1s.append(b1); w2s.append(w2); b2s.append(b2)
    # per-layer weights stacked along a leading L axis -> one VMEM-resident block
    p["ln_w"] = jnp.ones((num_layers, 1, hidden), jnp.float32)
    p["ln_b"] = jnp.zeros((num_layers, 1, hidden), jnp.float32)
    p["w1"] = jnp.stack(w1s).astype(bf16); p["b1"] = jnp.stack(b1s)
    p["w2"] = jnp.stack(w2s).astype(bf16); p["b2"] = jnp.stack(b2s)

    ws, bs = _linear_init(nxt(), hidden, out_dim)      # GENConv lin_src
    wd, bd = _linear_init(nxt(), hidden, out_dim)      # GENConv lin_dst
    ow1, ob1 = _linear_init(nxt(), out_dim, 2 * out_dim)
    ow2, ob2 = _linear_init(nxt(), 2 * out_dim, out_dim)
    # final Linear zero-padded to 128 output columns -> lane-dense kernel output;
    # padded columns carry zero weight/bias so they produce exact zeros.
    ow2_pad = jnp.zeros((2 * out_dim, LANE), jnp.float32).at[:, :out_dim].set(ow2)
    ob2_pad = jnp.zeros((1, LANE), jnp.float32).at[:, :out_dim].set(ob2)
    p["out"] = dict(wsd=jnp.concatenate([ws, wd], axis=1).astype(bf16),  # fused src|dst
                    bsd=jnp.concatenate([bs, bd], axis=1),
                    w1=ow1.astype(bf16), b1=ob1,
                    w2=ow2_pad.astype(bf16), b2=ob2_pad)
    return p


if __name__ == "__main__":
    N = 256              # nodes (modest size; fills MXU M-dim better than 64)
    IN_NODE = 8          # input_dim_node
    IN_ELEM = 3          # input_dim_element (pos = 3-D coordinates)
    HIDDEN = 32          # hidden_dim
    OUT_DIM = 8          # output_dim
    NUM_LAYERS = 2       # num_layers
    # GraphNet.dropout is stored by the module but never applied in forward -> unused

    key = jax.random.PRNGKey(0)
    k_x, k_pos, k_params = jax.random.split(key, 3)
    x = jax.random.normal(k_x, (N, IN_NODE), jnp.float32)
    pos = jax.random.normal(k_pos, (N, IN_ELEM), jnp.float32)

    # deterministic bidirectional ring graph -> edge_index [2, 2N]
    src = jnp.arange(N, dtype=jnp.int32)
    dst = (src + 1) % N
    edge_index = jnp.concatenate(
        [jnp.stack([src, dst]), jnp.stack([dst, src])], axis=1)

    params = init_params(k_params, IN_NODE, IN_ELEM, HIDDEN, OUT_DIM, NUM_LAYERS)

    A = build_adjacency(edge_index, N)      # built once, reused for every forward
    out = graphnet_forward(params, x, pos, A)
    out = jax.block_until_ready(out)
    assert out.shape == (N, OUT_DIM)
    assert bool(jnp.all(jnp.isfinite(out)))
    print("KERNEL_OK")
</pallas_src>

<mosaic_0001>
module attributes {stable_mosaic.version = 11 : i64} {
  func.func @_graphnet_kernel(%arg0: memref<256x11xbf16, #tpu.memory_space<vmem>>, %arg1: memref<256x256xbf16, #tpu.memory_space<vmem>>, %arg2: memref<11x32xbf16, #tpu.memory_space<vmem>>, %arg3: memref<1x32xf32, #tpu.memory_space<vmem>>, %arg4: memref<2x1x32xf32, #tpu.memory_space<vmem>>, %arg5: memref<2x1x32xf32, #tpu.memory_space<vmem>>, %arg6: memref<2x32x64xbf16, #tpu.memory_space<vmem>>, %arg7: memref<2x1x64xf32, #tpu.memory_space<vmem>>, %arg8: memref<2x64x32xbf16, #tpu.memory_space<vmem>>, %arg9: memref<2x1x32xf32, #tpu.memory_space<vmem>>, %arg10: memref<32x16xbf16, #tpu.memory_space<vmem>>, %arg11: memref<1x16xf32, #tpu.memory_space<vmem>>, %arg12: memref<8x16xbf16, #tpu.memory_space<vmem>>, %arg13: memref<1x16xf32, #tpu.memory_space<vmem>>, %arg14: memref<16x128xbf16, #tpu.memory_space<vmem>>, %arg15: memref<1x128xf32, #tpu.memory_space<vmem>>, %arg16: memref<256x128xf32, #tpu.memory_space<vmem>>) attributes {dimension_semantics = [], scalar_prefetch = 0 : i64, scratch_operands = 0 : i64, tpu.core_type = #tpu.core_type<tc>} {
    %c0 = arith.constant 0 : index
    %c0_0 = arith.constant 0 : index
    %0 = vector.load %arg1[%c0, %c0_0] : memref<256x256xbf16, #tpu.memory_space<vmem>>, vector<256x256xbf16>
    %c0_1 = arith.constant 0 : index
    %c0_2 = arith.constant 0 : index
    %1 = vector.load %arg0[%c0_1, %c0_2] : memref<256x11xbf16, #tpu.memory_space<vmem>>, vector<256x11xbf16>
    %c0_3 = arith.constant 0 : index
    %c0_4 = arith.constant 0 : index
    %2 = vector.load %arg2[%c0_3, %c0_4] : memref<11x32xbf16, #tpu.memory_space<vmem>>, vector<11x32xbf16>
    %cst = arith.constant dense<0.000000e+00> : vector<256x32xf32>
    %3 = tpu.matmul %1, %2, %cst {dimension_numbers = #tpu.dot_dimension_numbers<[1], [0], [0], [1], [0, 0, 1, 1], [], []>} : vector<256x11xbf16>, vector<11x32xbf16>, vector<256x32xf32> -> vector<256x32xf32>
    %c0_5 = arith.constant 0 : index
    %c0_6 = arith.constant 0 : index
    %4 = vector.load %arg3[%c0_5, %c0_6] : memref<1x32xf32, #tpu.memory_space<vmem>>, vector<1x32xf32>
    %5 = vector.broadcast %4 : vector<1x32xf32> to vector<256x32xf32>
    %6 = arith.addf %3, %5 : vector<256x32xf32>
    %c0_i32 = arith.constant 0 : i32
    %7 = vector.shape_cast %6 : vector<256x32xf32> to vector<1x256x32xf32>
    %cst_7 = arith.constant dense<0.000000e+00> : vector<1xf32>
    %8 = vector.multi_reduction <add>, %7, %cst_7 [1, 2] : vector<1x256x32xf32> to vector<1xf32>
    %9 = vector.shape_cast %8 : vector<1xf32> to vector<1x1x1xf32>
    %10 = vector.extract %9[0, 0, 0] : f32 from vector<1x1x1xf32>
    %11 = vector.broadcast %10 : f32 to vector<1x1xf32>
    %cst_8 = arith.constant 8.192000e+03 : f32
    %12 = vector.broadcast %cst_8 : f32 to vector<1x1xf32>
    %13 = arith.divf %11, %12 : vector<1x1xf32>
    %14 = vector.broadcast %13 : vector<1x1xf32> to vector<256x32xf32>
    %15 = arith.subf %6, %14 : vector<256x32xf32>
    %16 = arith.mulf %15, %15 : vector<256x32xf32>
    %17 = vector.shape_cast %16 : vector<256x32xf32> to vector<1x256x32xf32>
    %cst_9 = arith.constant dense<0.000000e+00> : vector<1xf32>
    %18 = vector.multi_reduction <add>, %17, %cst_9 [1, 2] : vector<1x256x32xf32> to vector<1xf32>
    %19 = vector.shape_cast %18 : vector<1xf32> to vector<1x1x1xf32>
    %20 = vector.extract %19[0, 0, 0] : f32 from vector<1x1x1xf32>
    %21 = vector.broadcast %20 : f32 to vector<1x1xf32>
    %cst_10 = arith.constant 8.192000e+03 : f32
    %22 = vector.broadcast %cst_10 : f32 to vector<1x1xf32>
    %23 = arith.divf %21, %22 : vector<1x1xf32>
    %24 = math.sqrt %23 : vector<1x1xf32>
    %cst_11 = arith.constant 9.99999974E-6 : f32
    %25 = vector.broadcast %cst_11 : f32 to vector<1x1xf32>
    %26 = arith.addf %24, %25 : vector<1x1xf32>
    %cst_12 = arith.constant 1.000000e+00 : f32
    %27 = vector.broadcast %cst_12 : f32 to vector<1x1xf32>
    %28 = arith.divf %27, %26 : vector<1x1xf32>
    %29 = vector.broadcast %13 : vector<1x1xf32> to vector<256x32xf32>
    %30 = arith.subf %6, %29 : vector<256x32xf32>
    %31 = vector.broadcast %28 : vector<1x1xf32> to vector<256x32xf32>
    %32 = arith.mulf %30, %31 : vector<256x32xf32>
    %33 = arith.index_cast %c0_i32 : i32 to index
    %c0_13 = arith.constant 0 : index
    %c0_14 = arith.constant 0 : index
    %34 = vector.load %arg4[%33, %c0_13, %c0_14] : memref<2x1x32xf32, #tpu.memory_space<vmem>>, vector<1x1x32xf32>
    %35 = vector.shape_cast %34 : vector<1x1x32xf32> to vector<1x32xf32>
    %36 = vector.broadcast %35 : vector<1x32xf32> to vector<256x32xf32>
    %37 = arith.mulf %32, %36 : vector<256x32xf32>
    %38 = arith.index_cast %c0_i32 : i32 to index
    %c0_15 = arith.constant 0 : index
    %c0_16 = arith.constant 0 : index
    %39 = vector.load %arg5[%38, %c0_15, %c0_16] : memref<2x1x32xf32, #tpu.memory_space<vmem>>, vector<1x1x32xf32>
    %40 = vector.shape_cast %39 : vector<1x1x32xf32> to vector<1x32xf32>
    %41 = vector.broadcast %40 : vector<1x32xf32> to vector<256x32xf32>
    %42 = arith.addf %37, %41 : vector<256x32xf32>
    %cst_17 = arith.constant 0.00999999977 : f32
    %43 = vector.broadcast %cst_17 : f32 to vector<256x32xf32>
    %44 = arith.mulf %43, %42 : vector<256x32xf32>
    %45 = arith.maximumf %42, %44 : vector<256x32xf32>
    %46 = arith.index_cast %c0_i32 : i32 to index
    %c0_18 = arith.constant 0 : index
    %c0_19 = arith.constant 0 : index
    %47 = vector.load %arg6[%46, %c0_18, %c0_19] : memref<2x32x64xbf16, #tpu.memory_space<vmem>>, vector<1x32x64xbf16>
    %48 = vector.shape_cast %47 : vector<1x32x64xbf16> to vector<32x64xbf16>
    %49 = arith.index_cast %c0_i32 : i32 to index
    %c0_20 = arith.constant 0 : index
    %c0_21 = arith.constant 0 : index
    %50 = vector.load %arg7[%49, %c0_20, %c0_21] : memref<2x1x64xf32, #tpu.memory_space<vmem>>, vector<1x1x64xf32>
    %51 = vector.shape_cast %50 : vector<1x1x64xf32> to vector<1x64xf32>
    %52 = arith.index_cast %c0_i32 : i32 to index
    %c0_22 = arith.constant 0 : index
    %c0_23 = arith.constant 0 : index
    %53 = vector.load %arg8[%52, %c0_22, %c0_23] : memref<2x64x32xbf16, #tpu.memory_space<vmem>>, vector<1x64x32xbf16>
    %54 = vector.shape_cast %53 : vector<1x64x32xbf16> to vector<64x32xbf16>
    %55 = arith.index_cast %c0_i32 : i32 to index
    %c0_24 = arith.constant 0 : index
    %c0_25 = arith.constant 0 : index
    %56 = vector.load %arg9[%55, %c0_24, %c0_25] : memref<2x1x32xf32, #tpu.memory_space<vmem>>, vector<1x1x32xf32>
    %57 = vector.shape_cast %56 : vector<1x1x32xf32> to vector<1x32xf32>
    %cst_26 = arith.constant 0.000000e+00 : f32
    %58 = vector.broadcast %cst_26 : f32 to vector<256x32xf32>
    %59 = arith.maximumf %45, %58 : vector<256x32xf32>
    %cst_27 = arith.constant 1.000000e-07 : f32
    %60 = vector.broadcast %cst_27 : f32 to vector<256x32xf32>
    %61 = arith.addf %59, %60 : vector<256x32xf32>
    %cst_28 = arith.constant dense<0xFF800000> : vector<32xf32>
    %62 = vector.multi_reduction <maximumf>, %61, %cst_28 [0] : vector<256x32xf32> to vector<32xf32>
    %63 = vector.shape_cast %62 : vector<32xf32> to vector<1x32xf32>
    %64 = vector.broadcast %63 : vector<1x32xf32> to vector<256x32xf32>
    %65 = arith.subf %61, %64 : vector<256x32xf32>
    %66 = math.exp %65 : vector<256x32xf32>
    %67 = arith.mulf %61, %66 : vector<256x32xf32>
    %68 = tpu.concatenate %67, %66 in 1 : vector<256x32xf32>, vector<256x32xf32> -> vector<256x64xf32>
    %69 = arith.truncf %68 : vector<256x64xf32> to vector<256x64xbf16>
    %cst_29 = arith.constant dense<0.000000e+00> : vector<256x64xf32>
    %70 = tpu.matmul %0, %69, %cst_29 {dimension_numbers = #tpu.dot_dimension_numbers<[1], [0], [0], [1], [0, 0, 1, 1], [], []>} : vector<256x256xbf16>, vector<256x64xbf16>, vector<256x64xf32> -> vector<256x64xf32>
    %71 = vector.extract_strided_slice %70 {offsets = [0, 0], sizes = [256, 32], strides = [1, 1]} : vector<256x64xf32> to vector<256x32xf32>
    %72 = vector.extract_strided_slice %70 {offsets = [0, 32], sizes = [256, 32], strides = [1, 1]} : vector<256x64xf32> to vector<256x32xf32>
    %cst_30 = arith.constant 9.99999996E-13 : f32
    %73 = vector.broadcast %cst_30 : f32 to vector<256x32xf32>
    %74 = arith.addf %72, %73 : vector<256x32xf32>
    %75 = tpu.reciprocal %74 {approx = true} : vector<256x32xf32> -> vector<256x32xf32>
    %76 = arith.mulf %71, %75 : vector<256x32xf32>
    %77 = arith.addf %76, %45 : vector<256x32xf32>
    %78 = arith.truncf %77 : vector<256x32xf32> to vector<256x32xbf16>
    %cst_31 = arith.constant dense<0.000000e+00> : vector<256x64xf32>
    %79 = tpu.matmul %78, %48, %cst_31 {dimension_numbers = #tpu.dot_dimension_numbers<[1], [0], [0], [1], [0, 0, 1, 1], [], []>} : vector<256x32xbf16>, vector<32x64xbf16>, vector<256x64xf32> -> vector<256x64xf32>
    %80 = vector.broadcast %51 : vector<1x64xf32> to vector<256x64xf32>
    %81 = arith.addf %79, %80 : vector<256x64xf32>
    %cst_32 = arith.constant dense<0.000000e+00> : vector<64xf32>
    %82 = vector.multi_reduction <add>, %81, %cst_32 [0] : vector<256x64xf32> to vector<64xf32>
    %83 = vector.shape_cast %82 : vector<64xf32> to vector<1x64xf32>
    %cst_33 = arith.constant 2.560000e+02 : f32
    %84 = vector.broadcast %cst_33 : f32 to vector<1x64xf32>
    %85 = arith.divf %83, %84 : vector<1x64xf32>
    %86 = vector.broadcast %85 : vector<1x64xf32> to vector<256x64xf32>
    %87 = arith.subf %81, %86 : vector<256x64xf32>
    %88 = arith.mulf %87, %87 : vector<256x64xf32>
    %cst_34 = arith.constant dense<0.000000e+00> : vector<64xf32>
    %89 = vector.multi_reduction <add>, %88, %cst_34 [0] : vector<256x64xf32> to vector<64xf32>
    %90 = vector.shape_cast %89 : vector<64xf32> to vector<1x64xf32>
    %cst_35 = arith.constant 2.560000e+02 : f32
    %91 = vector.broadcast %cst_35 : f32 to vector<1x64xf32>
    %92 = arith.divf %90, %91 : vector<1x64xf32>
    %93 = vector.broadcast %85 : vector<1x64xf32> to vector<256x64xf32>
    %94 = arith.subf %81, %93 : vector<256x64xf32>
    %cst_36 = arith.constant 9.99999974E-6 : f32
    %95 = vector.broadcast %cst_36 : f32 to vector<1x64xf32>
    %96 = arith.addf %92, %95 : vector<1x64xf32>
    %97 = math.rsqrt %96 : vector<1x64xf32>
    %98 = vector.broadcast %97 : vector<1x64xf32> to vector<256x64xf32>
    %99 = arith.mulf %94, %98 : vector<256x64xf32>
    %cst_37 = arith.constant 0.000000e+00 : f32
    %100 = vector.broadcast %cst_37 : f32 to vector<256x64xf32>
    %101 = arith.maximumf %99, %100 : vector<256x64xf32>
    %102 = arith.truncf %101 : vector<256x64xf32> to vector<256x64xbf16>
    %cst_38 = arith.constant dense<0.000000e+00> : vector<256x32xf32>
    %103 = tpu.matmul %102, %54, %cst_38 {dimension_numbers = #tpu.dot_dimension_numbers<[1], [0], [0], [1], [0, 0, 1, 1], [], []>} : vector<256x64xbf16>, vector<64x32xbf16>, vector<256x32xf32> -> vector<256x32xf32>
    %104 = vector.broadcast %57 : vector<1x32xf32> to vector<256x32xf32>
    %105 = arith.addf %103, %104 : vector<256x32xf32>
    %106 = arith.addf %6, %105 : vector<256x32xf32>
    %c1_i32 = arith.constant 1 : i32
    %107 = vector.shape_cast %106 : vector<256x32xf32> to vector<1x256x32xf32>
    %cst_39 = arith.constant dense<0.000000e+00> : vector<1xf32>
    %108 = vector.multi_reduction <add>, %107, %cst_39 [1, 2] : vector<1x256x32xf32> to vector<1xf32>
    %109 = vector.shape_cast %108 : vector<1xf32> to vector<1x1x1xf32>
    %110 = vector.extract %109[0, 0, 0] : f32 from vector<1x1x1xf32>
    %111 = vector.broadcast %110 : f32 to vector<1x1xf32>
    %cst_40 = arith.constant 8.192000e+03 : f32
    %112 = vector.broadcast %cst_40 : f32 to vector<1x1xf32>
    %113 = arith.divf %111, %112 : vector<1x1xf32>
    %114 = vector.broadcast %113 : vector<1x1xf32> to vector<256x32xf32>
    %115 = arith.subf %106, %114 : vector<256x32xf32>
    %116 = arith.mulf %115, %115 : vector<256x32xf32>
    %117 = vector.shape_cast %116 : vector<256x32xf32> to vector<1x256x32xf32>
    %cst_41 = arith.constant dense<0.000000e+00> : vector<1xf32>
    %118 = vector.multi_reduction <add>, %117, %cst_41 [1, 2] : vector<1x256x32xf32> to vector<1xf32>
    %119 = vector.shape_cast %118 : vector<1xf32> to vector<1x1x1xf32>
    %120 = vector.extract %119[0, 0, 0] : f32 from vector<1x1x1xf32>
    %121 = vector.broadcast %120 : f32 to vector<1x1xf32>
    %cst_42 = arith.constant 8.192000e+03 : f32
    %122 = vector.broadcast %cst_42 : f32 to vector<1x1xf32>
    %123 = arith.divf %121, %122 : vector<1x1xf32>
    %124 = math.sqrt %123 : vector<1x1xf32>
    %cst_43 = arith.constant 9.99999974E-6 : f32
    %125 = vector.broadcast %cst_43 : f32 to vector<1x1xf32>
    %126 = arith.addf %124, %125 : vector<1x1xf32>
    %cst_44 = arith.constant 1.000000e+00 : f32
    %127 = vector.broadcast %cst_44 : f32 to vector<1x1xf32>
    %128 = arith.divf %127, %126 : vector<1x1xf32>
    %129 = vector.broadcast %113 : vector<1x1xf32> to vector<256x32xf32>
    %130 = arith.subf %106, %129 : vector<256x32xf32>
    %131 = vector.broadcast %128 : vector<1x1xf32> to vector<256x32xf32>
    %132 = arith.mulf %130, %131 : vector<256x32xf32>
    %133 = arith.index_cast %c1_i32 : i32 to index
    %c0_45 = arith.constant 0 : index
    %c0_46 = arith.constant 0 : index
    %134 = vector.load %arg4[%133, %c0_45, %c0_46] : memref<2x1x32xf32, #tpu.memory_space<vmem>>, vector<1x1x32xf32>
    %135 = vector.shape_cast %134 : vector<1x1x32xf32> to vector<1x32xf32>
    %136 = vector.broadcast %135 : vector<1x32xf32> to vector<256x32xf32>
    %137 = arith.mulf %132, %136 : vector<256x32xf32>
    %138 = arith.index_cast %c1_i32 : i32 to index
    %c0_47 = arith.constant 0 : index
    %c0_48 = arith.constant 0 : index
    %139 = vector.load %arg5[%138, %c0_47, %c0_48] : memref<2x1x32xf32, #tpu.memory_space<vmem>>, vector<1x1x32xf32>
    %140 = vector.shape_cast %139 : vector<1x1x32xf32> to vector<1x32xf32>
    %141 = vector.broadcast %140 : vector<1x32xf32> to vector<256x32xf32>
    %142 = arith.addf %137, %141 : vector<256x32xf32>
    %cst_49 = arith.constant 0.00999999977 : f32
    %143 = vector.broadcast %cst_49 : f32 to vector<256x32xf32>
    %144 = arith.mulf %143, %142 : vector<256x32xf32>
    %145 = arith.maximumf %142, %144 : vector<256x32xf32>
    %146 = arith.index_cast %c1_i32 : i32 to index
    %c0_50 = arith.constant 0 : index
    %c0_51 = arith.constant 0 : index
    %147 = vector.load %arg6[%146, %c0_50, %c0_51] : memref<2x32x64xbf16, #tpu.memory_space<vmem>>, vector<1x32x64xbf16>
    %148 = vector.shape_cast %147 : vector<1x32x64xbf16> to vector<32x64xbf16>
    %149 = arith.index_cast %c1_i32 : i32 to index
    %c0_52 = arith.constant 0 : index
    %c0_53 = arith.constant 0 : index
    %150 = vector.load %arg7[%149, %c0_52, %c0_53] : memref<2x1x64xf32, #tpu.memory_space<vmem>>, vector<1x1x64xf32>
    %151 = vector.shape_cast %150 : vector<1x1x64xf32> to vector<1x64xf32>
    %152 = arith.index_cast %c1_i32 : i32 to index
    %c0_54 = arith.constant 0 : index
    %c0_55 = arith.constant 0 : index
    %153 = vector.load %arg8[%152, %c0_54, %c0_55] : memref<2x64x32xbf16, #tpu.memory_space<vmem>>, vector<1x64x32xbf16>
    %154 = vector.shape_cast %153 : vector<1x64x32xbf16> to vector<64x32xbf16>
    %155 = arith.index_cast %c1_i32 : i32 to index
    %c0_56 = arith.constant 0 : index
    %c0_57 = arith.constant 0 : index
    %156 = vector.load %arg9[%155, %c0_56, %c0_57] : memref<2x1x32xf32, #tpu.memory_space<vmem>>, vector<1x1x32xf32>
    %157 = vector.shape_cast %156 : vector<1x1x32xf32> to vector<1x32xf32>
    %cst_58 = arith.constant 0.000000e+00 : f32
    %158 = vector.broadcast %cst_58 : f32 to vector<256x32xf32>
    %159 = arith.maximumf %145, %158 : vector<256x32xf32>
    %cst_59 = arith.constant 1.000000e-07 : f32
    %160 = vector.broadcast %cst_59 : f32 to vector<256x32xf32>
    %161 = arith.addf %159, %160 : vector<256x32xf32>
    %cst_60 = arith.constant dense<0xFF800000> : vector<32xf32>
    %162 = vector.multi_reduction <maximumf>, %161, %cst_60 [0] : vector<256x32xf32> to vector<32xf32>
    %163 = vector.shape_cast %162 : vector<32xf32> to vector<1x32xf32>
    %164 = vector.broadcast %163 : vector<1x32xf32> to vector<256x32xf32>
    %165 = arith.subf %161, %164 : vector<256x32xf32>
    %166 = math.exp %165 : vector<256x32xf32>
    %167 = arith.mulf %161, %166 : vector<256x32xf32>
    %168 = tpu.concatenate %167, %166 in 1 : vector<256x32xf32>, vector<256x32xf32> -> vector<256x64xf32>
    %169 = arith.truncf %168 : vector<256x64xf32> to vector<256x64xbf16>
    %cst_61 = arith.constant dense<0.000000e+00> : vector<256x64xf32>
    %170 = tpu.matmul %0, %169, %cst_61 {dimension_numbers = #tpu.dot_dimension_numbers<[1], [0], [0], [1], [0, 0, 1, 1], [], []>} : vector<256x256xbf16>, vector<256x64xbf16>, vector<256x64xf32> -> vector<256x64xf32>
    %171 = vector.extract_strided_slice %170 {offsets = [0, 0], sizes = [256, 32], strides = [1, 1]} : vector<256x64xf32> to vector<256x32xf32>
    %172 = vector.extract_strided_slice %170 {offsets = [0, 32], sizes = [256, 32], strides = [1, 1]} : vector<256x64xf32> to vector<256x32xf32>
    %cst_62 = arith.constant 9.99999996E-13 : f32
    %173 = vector.broadcast %cst_62 : f32 to vector<256x32xf32>
    %174 = arith.addf %172, %173 : vector<256x32xf32>
    %175 = tpu.reciprocal %174 {approx = true} : vector<256x32xf32> -> vector<256x32xf32>
    %176 = arith.mulf %171, %175 : vector<256x32xf32>
    %177 = arith.addf %176, %145 : vector<256x32xf32>
    %178 = arith.truncf %177 : vector<256x32xf32> to vector<256x32xbf16>
    %cst_63 = arith.constant dense<0.000000e+00> : vector<256x64xf32>
    %179 = tpu.matmul %178, %148, %cst_63 {dimension_numbers = #tpu.dot_dimension_numbers<[1], [0], [0], [1], [0, 0, 1, 1], [], []>} : vector<256x32xbf16>, vector<32x64xbf16>, vector<256x64xf32> -> vector<256x64xf32>
    %180 = vector.broadcast %151 : vector<1x64xf32> to vector<256x64xf32>
    %181 = arith.addf %179, %180 : vector<256x64xf32>
    %cst_64 = arith.constant dense<0.000000e+00> : vector<64xf32>
    %182 = vector.multi_reduction <add>, %181, %cst_64 [0] : vector<256x64xf32> to vector<64xf32>
    %183 = vector.shape_cast %182 : vector<64xf32> to vector<1x64xf32>
    %cst_65 = arith.constant 2.560000e+02 : f32
    %184 = vector.broadcast %cst_65 : f32 to vector<1x64xf32>
    %185 = arith.divf %183, %184 : vector<1x64xf32>
    %186 = vector.broadcast %185 : vector<1x64xf32> to vector<256x64xf32>
    %187 = arith.subf %181, %186 : vector<256x64xf32>
    %188 = arith.mulf %187, %187 : vector<256x64xf32>
    %cst_66 = arith.constant dense<0.000000e+00> : vector<64xf32>
    %189 = vector.multi_reduction <add>, %188, %cst_66 [0] : vector<256x64xf32> to vector<64xf32>
    %190 = vector.shape_cast %189 : vector<64xf32> to vector<1x64xf32>
    %cst_67 = arith.constant 2.560000e+02 : f32
    %191 = vector.broadcast %cst_67 : f32 to vector<1x64xf32>
    %192 = arith.divf %190, %191 : vector<1x64xf32>
    %193 = vector.broadcast %185 : vector<1x64xf32> to vector<256x64xf32>
    %194 = arith.subf %181, %193 : vector<256x64xf32>
    %cst_68 = arith.constant 9.99999974E-6 : f32
    %195 = vector.broadcast %cst_68 : f32 to vector<1x64xf32>
    %196 = arith.addf %192, %195 : vector<1x64xf32>
    %197 = math.rsqrt %196 : vector<1x64xf32>
    %198 = vector.broadcast %197 : vector<1x64xf32> to vector<256x64xf32>
    %199 = arith.mulf %194, %198 : vector<256x64xf32>
    %cst_69 = arith.constant 0.000000e+00 : f32
    %200 = vector.broadcast %cst_69 : f32 to vector<256x64xf32>
    %201 = arith.maximumf %199, %200 : vector<256x64xf32>
    %202 = arith.truncf %201 : vector<256x64xf32> to vector<256x64xbf16>
    %cst_70 = arith.constant dense<0.000000e+00> : vector<256x32xf32>
    %203 = tpu.matmul %202, %154, %cst_70 {dimension_numbers = #tpu.dot_dimension_numbers<[1], [0], [0], [1], [0, 0, 1, 1], [], []>} : vector<256x64xbf16>, vector<64x32xbf16>, vector<256x32xf32> -> vector<256x32xf32>
    %204 = vector.broadcast %157 : vector<1x32xf32> to vector<256x32xf32>
    %205 = arith.addf %203, %204 : vector<256x32xf32>
    %206 = arith.addf %106, %205 : vector<256x32xf32>
    %c2_i32 = arith.constant 2 : i32
    %207 = arith.truncf %206 : vector<256x32xf32> to vector<256x32xbf16>
    %c0_71 = arith.constant 0 : index
    %c0_72 = arith.constant 0 : index
    %208 = vector.load %arg10[%c0_71, %c0_72] : memref<32x16xbf16, #tpu.memory_space<vmem>>, vector<32x16xbf16>
    %cst_73 = arith.constant dense<0.000000e+00> : vector<256x16xf32>
    %209 = tpu.matmul %207, %208, %cst_73 {dimension_numbers = #tpu.dot_dimension_numbers<[1], [0], [0], [1], [0, 0, 1, 1], [], []>} : vector<256x32xbf16>, vector<32x16xbf16>, vector<256x16xf32> -> vector<256x16xf32>
    %c0_74 = arith.constant 0 : index
    %c0_75 = arith.constant 0 : index
    %210 = vector.load %arg11[%c0_74, %c0_75] : memref<1x16xf32, #tpu.memory_space<vmem>>, vector<1x16xf32>
    %211 = vector.broadcast %210 : vector<1x16xf32> to vector<256x16xf32>
    %212 = arith.addf %209, %211 : vector<256x16xf32>
    %213 = vector.extract_strided_slice %212 {offsets = [0, 0], sizes = [256, 8], strides = [1, 1]} : vector<256x16xf32> to vector<256x8xf32>
    %214 = vector.extract_strided_slice %212 {offsets = [0, 8], sizes = [256, 8], strides = [1, 1]} : vector<256x16xf32> to vector<256x8xf32>
    %c0_76 = arith.constant 0 : index
    %c0_77 = arith.constant 0 : index
    %215 = vector.load %arg12[%c0_76, %c0_77] : memref<8x16xbf16, #tpu.memory_space<vmem>>, vector<8x16xbf16>
    %c0_78 = arith.constant 0 : index
    %c0_79 = arith.constant 0 : index
    %216 = vector.load %arg13[%c0_78, %c0_79] : memref<1x16xf32, #tpu.memory_space<vmem>>, vector<1x16xf32>
    %c0_80 = arith.constant 0 : index
    %c0_81 = arith.constant 0 : index
    %217 = vector.load %arg14[%c0_80, %c0_81] : memref<16x128xbf16, #tpu.memory_space<vmem>>, vector<16x128xbf16>
    %c0_82 = arith.constant 0 : index
    %c0_83 = arith.constant 0 : index
    %218 = vector.load %arg15[%c0_82, %c0_83] : memref<1x128xf32, #tpu.memory_space<vmem>>, vector<1x128xf32>
    %cst_84 = arith.constant 0.000000e+00 : f32
    %219 = vector.broadcast %cst_84 : f32 to vector<256x8xf32>
    %220 = arith.maximumf %213, %219 : vector<256x8xf32>
    %cst_85 = arith.constant 1.000000e-07 : f32
    %221 = vector.broadcast %cst_85 : f32 to vector<256x8xf32>
    %222 = arith.addf %220, %221 : vector<256x8xf32>
    %cst_86 = arith.constant dense<0xFF800000> : vector<8xf32>
    %223 = vector.multi_reduction <maximumf>, %222, %cst_86 [0] : vector<256x8xf32> to vector<8xf32>
    %224 = vector.shape_cast %223 : vector<8xf32> to vector<1x8xf32>
    %225 = vector.broadcast %224 : vector<1x8xf32> to vector<256x8xf32>
    %226 = arith.subf %222, %225 : vector<256x8xf32>
    %227 = math.exp %226 : vector<256x8xf32>
    %228 = arith.mulf %222, %227 : vector<256x8xf32>
    %229 = tpu.concatenate %228, %227 in 1 : vector<256x8xf32>, vector<256x8xf32> -> vector<256x16xf32>
    %230 = arith.truncf %229 : vector<256x16xf32> to vector<256x16xbf16>
    %cst_87 = arith.constant dense<0.000000e+00> : vector<256x16xf32>
    %231 = tpu.matmul %0, %230, %cst_87 {dimension_numbers = #tpu.dot_dimension_numbers<[1], [0], [0], [1], [0, 0, 1, 1], [], []>} : vector<256x256xbf16>, vector<256x16xbf16>, vector<256x16xf32> -> vector<256x16xf32>
    %232 = vector.extract_strided_slice %231 {offsets = [0, 0], sizes = [256, 8], strides = [1, 1]} : vector<256x16xf32> to vector<256x8xf32>
    %233 = vector.extract_strided_slice %231 {offsets = [0, 8], sizes = [256, 8], strides = [1, 1]} : vector<256x16xf32> to vector<256x8xf32>
    %cst_88 = arith.constant 9.99999996E-13 : f32
    %234 = vector.broadcast %cst_88 : f32 to vector<256x8xf32>
    %235 = arith.addf %233, %234 : vector<256x8xf32>
    %236 = tpu.reciprocal %235 {approx = true} : vector<256x8xf32> -> vector<256x8xf32>
    %237 = arith.mulf %232, %236 : vector<256x8xf32>
    %238 = arith.addf %237, %214 : vector<256x8xf32>
    %239 = arith.truncf %238 : vector<256x8xf32> to vector<256x8xbf16>
    %cst_89 = arith.constant dense<0.000000e+00> : vector<256x16xf32>
    %240 = tpu.matmul %239, %215, %cst_89 {dimension_numbers = #tpu.dot_dimension_numbers<[1], [0], [0], [1], [0, 0, 1, 1], [], []>} : vector<256x8xbf16>, vector<8x16xbf16>, vector<256x16xf32> -> vector<256x16xf32>
    %241 = vector.broadcast %216 : vector<1x16xf32> to vector<256x16xf32>
    %242 = arith.addf %240, %241 : vector<256x16xf32>
    %cst_90 = arith.constant dense<0.000000e+00> : vector<16xf32>
    %243 = vector.multi_reduction <add>, %242, %cst_90 [0] : vector<256x16xf32> to vector<16xf32>
    %244 = vector.shape_cast %243 : vector<16xf32> to vector<1x16xf32>
    %cst_91 = arith.constant 2.560000e+02 : f32
    %245 = vector.broadcast %cst_91 : f32 to vector<1x16xf32>
    %246 = arith.divf %244, %245 : vector<1x16xf32>
    %247 = vector.broadcast %246 : vector<1x16xf32> to vector<256x16xf32>
    %248 = arith.subf %242, %247 : vector<256x16xf32>
    %249 = arith.mulf %248, %248 : vector<256x16xf32>
    %cst_92 = arith.constant dense<0.000000e+00> : vector<16xf32>
    %250 = vector.multi_reduction <add>, %249, %cst_92 [0] : vector<256x16xf32> to vector<16xf32>
    %251 = vector.shape_cast %250 : vector<16xf32> to vector<1x16xf32>
    %cst_93 = arith.constant 2.560000e+02 : f32
    %252 = vector.broadcast %cst_93 : f32 to vector<1x16xf32>
    %253 = arith.divf %251, %252 : vector<1x16xf32>
    %254 = vector.broadcast %246 : vector<1x16xf32> to vector<256x16xf32>
    %255 = arith.subf %242, %254 : vector<256x16xf32>
    %cst_94 = arith.constant 9.99999974E-6 : f32
    %256 = vector.broadcast %cst_94 : f32 to vector<1x16xf32>
    %257 = arith.addf %253, %256 : vector<1x16xf32>
    %258 = math.rsqrt %257 : vector<1x16xf32>
    %259 = vector.broadcast %258 : vector<1x16xf32> to vector<256x16xf32>
    %260 = arith.mulf %255, %259 : vector<256x16xf32>
    %cst_95 = arith.constant 0.000000e+00 : f32
    %261 = vector.broadcast %cst_95 : f32 to vector<256x16xf32>
    %262 = arith.maximumf %260, %261 : vector<256x16xf32>
    %263 = arith.truncf %262 : vector<256x16xf32> to vector<256x16xbf16>
    %cst_96 = arith.constant dense<0.000000e+00> : vector<256x128xf32>
    %264 = tpu.matmul %263, %217, %cst_96 {dimension_numbers = #tpu.dot_dimension_numbers<[1], [0], [0], [1], [0, 0, 1, 1], [], []>} : vector<256x16xbf16>, vector<16x128xbf16>, vector<256x128xf32> -> vector<256x128xf32>
    %265 = vector.broadcast %218 : vector<1x128xf32> to vector<256x128xf32>
    %266 = arith.addf %264, %265 : vector<256x128xf32>
    %c0_97 = arith.constant 0 : index
    %c0_98 = arith.constant 0 : index
    %267 = vector.load %arg16[%c0_97, %c0_98] : memref<256x128xf32, #tpu.memory_space<vmem>>, vector<256x128xf32>
    tpu.vector_store %arg16[%c0_97, %c0_98], %266 {strides = array<i32>} : memref<256x128xf32, #tpu.memory_space<vmem>>, vector<256x128xf32>,
    return
  }
}

</mosaic_0001>

<llo_original>
// kernel: graphnet_forward.1
$region0: #{graphnet_forward.1}
  #allocation0 [shape = 'u32[]', space=smem, size = 0x4, offset = 0x4, fixed_abs, tag = 'smem constant byte address 0x4 - core index']
  #allocation1 [shape = 'u32[144,128]{1,0:T(1,128)}', space=vmem, size = 0x12000, scoped, tag = 'internal scratch']
  %s0 = inlined_call_operand.vmem [shape: bf16[256,11], index: 0, kind: input, shape index: {}]
  %s1 = inlined_call_operand.vmem [shape: bf16[256,256], index: 1, kind: input, shape index: {}]
  %s2 = inlined_call_operand.vmem [shape: bf16[11,32], index: 2, kind: input, shape index: {}]
  %s3 = inlined_call_operand.vmem [shape: f32[1,32], index: 3, kind: input, shape index: {}]
  %s4 = inlined_call_operand.vmem [shape: f32[2,1,32], index: 4, kind: input, shape index: {}]
  %s5 = inlined_call_operand.vmem [shape: f32[2,1,32], index: 5, kind: input, shape index: {}]
  %s6 = inlined_call_operand.vmem [shape: bf16[2,32,64], index: 6, kind: input, shape index: {}]
  %s7 = inlined_call_operand.vmem [shape: f32[2,1,64], index: 7, kind: input, shape index: {}]
  %s8 = inlined_call_operand.vmem [shape: bf16[2,64,32], index: 8, kind: input, shape index: {}]
  %s9 = inlined_call_operand.vmem [shape: f32[2,1,32], index: 9, kind: input, shape index: {}]
  %s10 = inlined_call_operand.vmem [shape: bf16[32,16], index: 10, kind: input, shape index: {}]
  %s11 = inlined_call_operand.vmem [shape: f32[1,16], index: 11, kind: input, shape index: {}]
  %s12 = inlined_call_operand.vmem [shape: bf16[8,16], index: 12, kind: input, shape index: {}]
  %s13 = inlined_call_operand.vmem [shape: f32[1,16], index: 13, kind: input, shape index: {}]
  %s14 = inlined_call_operand.vmem [shape: bf16[16,128], index: 14, kind: input, shape index: {}]
  %s15 = inlined_call_operand.vmem [shape: f32[1,128], index: 15, kind: input, shape index: {}]
  %s16 = inlined_call_operand.vmem [shape: f32[256,128], index: 16, kind: output, shape index: {}]
  %s17 = sld [smem:[#allocation0]]
  $region74: #{graphnet_forward.1} parent=0
    _
  %s19 = ssub.s32 1, %s17
  %s20 = scalar_select 0, %s19, %s17
  // Predicated region
  $region2: #{graphnet_forward.1} parent=0 // pred_check
    _
  $region3: #{graphnet_forward.1} parent=0 // pred_check_branch
    %22 = sbr.rel (0) target = $region5
  $region4: #{graphnet_forward.1} parent=0 // pred_region
    _
  $region5: #{graphnet_forward.1} parent=0 // pred_fallthru
    _
  // Predicated region
  $region6: #{graphnet_forward.1} parent=0 // pred_check
    _
  $region7: #{graphnet_forward.1} parent=0 // pred_check_branch
    %24 = sbr.rel (0) target = $region9
  $region8: #{graphnet_forward.1} parent=0 // pred_region
    _
  $region9: #{graphnet_forward.1} parent=0 // pred_fallthru
    _
  // Predicated region
  $region10: #{graphnet_forward.1} parent=0 // pred_check
    _
  $region11: #{graphnet_forward.1} parent=0 // pred_check_branch
    %26 = sbr.rel (0) target = $region13
  $region12: #{graphnet_forward.1} parent=0 // pred_region
    _
  $region13: #{graphnet_forward.1} parent=0 // pred_fallthru
    _
  // Predicated region
  $region14: #{graphnet_forward.1} parent=0 // pred_check
    _
  $region15: #{graphnet_forward.1} parent=0 // pred_check_branch
    %28 = sbr.rel (0) target = $region17
  $region16: #{graphnet_forward.1} parent=0 // pred_region
    _
  $region17: #{graphnet_forward.1} parent=0 // pred_fallthru
    _
  // Predicated region
  $region18: #{graphnet_forward.1} parent=0 // pred_check
    _
  $region19: #{graphnet_forward.1} parent=0 // pred_check_branch
    %30 = sbr.rel (0) target = $region21
  $region20: #{graphnet_forward.1} parent=0 // pred_region
    _
  $region21: #{graphnet_forward.1} parent=0 // pred_fallthru
    _
  // Predicated region
  $region22: #{graphnet_forward.1} parent=0 // pred_check
    _
  $region23: #{graphnet_forward.1} parent=0 // pred_check_branch
    %32 = sbr.rel (0) target = $region25
  $region24: #{graphnet_forward.1} parent=0 // pred_region
    _
  $region25: #{graphnet_forward.1} parent=0 // pred_fallthru
    _
  // Predicated region
  $region26: #{graphnet_forward.1} parent=0 // pred_check
    _
  $region27: #{graphnet_forward.1} parent=0 // pred_check_branch
    %34 = sbr.rel (0) target = $region29
  $region28: #{graphnet_forward.1} parent=0 // pred_region
    _
  $region29: #{graphnet_forward.1} parent=0 // pred_fallthru
    _
  // Predicated region
  $region30: #{graphnet_forward.1} parent=0 // pred_check
    _
  $region31: #{graphnet_forward.1} parent=0 // pred_check_branch
    %36 = sbr.rel (0) target = $region33
  $region32: #{graphnet_forward.1} parent=0 // pred_region
    _
  $region33: #{graphnet_forward.1} parent=0 // pred_fallthru
    _
  // Predicated region
  $region34: #{graphnet_forward.1} parent=0 // pred_check
    _
  $region35: #{graphnet_forward.1} parent=0 // pred_check_branch
    %38 = sbr.rel (0) target = $region37
  $region36: #{graphnet_forward.1} parent=0 // pred_region
    _
  $region37: #{graphnet_forward.1} parent=0 // pred_fallthru
    _
  // Predicated region
  $region38: #{graphnet_forward.1} parent=0 // pred_check
    _
  $region39: #{graphnet_forward.1} parent=0 // pred_check_branch
    %40 = sbr.rel (0) target = $region41
  $region40: #{graphnet_forward.1} parent=0 // pred_region
    _
  $region41: #{graphnet_forward.1} parent=0 // pred_fallthru
    _
  // Predicated region
  $region42: #{graphnet_forward.1} parent=0 // pred_check
    _
  $region43: #{graphnet_forward.1} parent=0 // pred_check_branch
    %42 = sbr.rel (0) target = $region45
  $region44: #{graphnet_forward.1} parent=0 // pred_region
    _
  $region45: #{graphnet_forward.1} parent=0 // pred_fallthru
    _
  // Predicated region
  $region46: #{graphnet_forward.1} parent=0 // pred_check
    _
  $region47: #{graphnet_forward.1} parent=0 // pred_check_branch
    %44 = sbr.rel (0) target = $region49
  $region48: #{graphnet_forward.1} parent=0 // pred_region
    _
  $region49: #{graphnet_forward.1} parent=0 // pred_fallthru
    _
  // Predicated region
  $region50: #{graphnet_forward.1} parent=0 // pred_check
    _
  $region51: #{graphnet_forward.1} parent=0 // pred_check_branch
    %46 = sbr.rel (0) target = $region53
  $region52: #{graphnet_forward.1} parent=0 // pred_region
    _
  $region53: #{graphnet_forward.1} parent=0 // pred_fallthru
    _
  // Predicated region
  $region54: #{graphnet_forward.1} parent=0 // pred_check
    _
  $region55: #{graphnet_forward.1} parent=0 // pred_check_branch
    %48 = sbr.rel (0) target = $region57
  $region56: #{graphnet_forward.1} parent=0 // pred_region
    _
  $region57: #{graphnet_forward.1} parent=0 // pred_fallthru
    _
  // Predicated region
  $region58: #{graphnet_forward.1} parent=0 // pred_check
    _
  $region59: #{graphnet_forward.1} parent=0 // pred_check_branch
    %50 = sbr.rel (0) target = $region61
  $region60: #{graphnet_forward.1} parent=0 // pred_region
    _
  $region61: #{graphnet_forward.1} parent=0 // pred_fallthru
    _
  // Predicated region
  $region62: #{graphnet_forward.1} parent=0 // pred_check
    _
  $region63: #{graphnet_forward.1} parent=0 // pred_check_branch
    %52 = sbr.rel (0) target = $region65
  $region64: #{graphnet_forward.1} parent=0 // pred_region
    _
  $region65: #{graphnet_forward.1} parent=0 // pred_fallthru
    _
  %v54 = vld [vmem:[%s1] sm:$0xff]
  %v55 = vld [vmem:[%s1 + $0x8] sm:$0xff]
  %v56 = vld [vmem:[%s1 + $0x10] sm:$0xff]
  %v57 = vld [vmem:[%s1 + $0x18] sm:$0xff]
  %v58 = vld [vmem:[%s1 + $0x20] sm:$0xff]
  %v59 = vld [vmem:[%s1 + $0x28] sm:$0xff]
  %v60 = vld [vmem:[%s1 + $0x30] sm:$0xff]
  %v61 = vld [vmem:[%s1 + $0x38] sm:$0xff]
  %v62 = vld [vmem:[%s1 + $0x40] sm:$0xff]
  %v63 = vld [vmem:[%s1 + $0x48] sm:$0xff]
  %v64 = vld [vmem:[%s1 + $0x50] sm:$0xff]
  %v65 = vld [vmem:[%s1 + $0x58] sm:$0xff]
  %v66 = vld [vmem:[%s1 + $0x60] sm:$0xff]
  %v67 = vld [vmem:[%s1 + $0x68] sm:$0xff]
  %v68 = vld [vmem:[%s1 + $0x70] sm:$0xff]
  %v69 = vld [vmem:[%s1 + $0x78] sm:$0xff]
  %v70 = vld [vmem:[%s1 + $0x80] sm:$0xff]
  %v71 = vld [vmem:[%s1 + $0x88] sm:$0xff]
  %v72 = vld [vmem:[%s1 + $0x90] sm:$0xff]
  %v73 = vld [vmem:[%s1 + $0x98] sm:$0xff]
  %v74 = vld [vmem:[%s1 + $0xa0] sm:$0xff]
  %v75 = vld [vmem:[%s1 + $0xa8] sm:$0xff]
  %v76 = vld [vmem:[%s1 + $0xb0] sm:$0xff]
  %v77 = vld [vmem:[%s1 + $0xb8] sm:$0xff]
  %v78 = vld [vmem:[%s1 + $0xc0] sm:$0xff]
  %v79 = vld [vmem:[%s1 + $0xc8] sm:$0xff]
  %v80 = vld [vmem:[%s1 + $0xd0] sm:$0xff]
  %v81 = vld [vmem:[%s1 + $0xd8] sm:$0xff]
  %v82 = vld [vmem:[%s1 + $0xe0] sm:$0xff]
  %v83 = vld [vmem:[%s1 + $0xe8] sm:$0xff]
  %v84 = vld [vmem:[%s1 + $0xf0] sm:$0xff]
  %v85 = vld [vmem:[%s1 + $0xf8] sm:$0xff]
  %v86 = vld [vmem:[%s0] sm:$0xf]
  %v87 = vld [vmem:[%s0 + $0x4] sm:$0xf]
  %v88 = vld [vmem:[%s0 + $0x8] sm:$0xf]
  %v89 = vld [vmem:[%s0 + $0xc] sm:$0xf]
  %v90 = vld [vmem:[%s0 + $0x10] sm:$0xf]
  %v91 = vld [vmem:[%s0 + $0x14] sm:$0xf]
  %v92 = vld [vmem:[%s0 + $0x18] sm:$0xf]
  %v93 = vld [vmem:[%s0 + $0x1c] sm:$0xf]
  %v94 = vld [vmem:[%s0 + $0x20] sm:$0xf]
  %v95 = vld [vmem:[%s0 + $0x24] sm:$0xf]
  %v96 = vld [vmem:[%s0 + $0x28] sm:$0xf]
  %v97 = vld [vmem:[%s0 + $0x2c] sm:$0xf]
  %v98 = vld [vmem:[%s0 + $0x30] sm:$0xf]
  %v99 = vld [vmem:[%s0 + $0x34] sm:$0xf]
  %v100 = vld [vmem:[%s0 + $0x38] sm:$0xf]
  %v101 = vld [vmem:[%s0 + $0x3c] sm:$0xf]
  %v102 = vld [vmem:[%s0 + $0x40] sm:$0xf]
  %v103 = vld [vmem:[%s0 + $0x44] sm:$0xf]
  %v104 = vld [vmem:[%s0 + $0x48] sm:$0xf]
  %v105 = vld [vmem:[%s0 + $0x4c] sm:$0xf]
  %v106 = vld [vmem:[%s0 + $0x50] sm:$0xf]
  %v107 = vld [vmem:[%s0 + $0x54] sm:$0xf]
  %v108 = vld [vmem:[%s0 + $0x58] sm:$0xf]
  %v109 = vld [vmem:[%s0 + $0x5c] sm:$0xf]
  %v110 = vld [vmem:[%s0 + $0x60] sm:$0xf]
  %v111 = vld [vmem:[%s0 + $0x64] sm:$0xf]
  %v112 = vld [vmem:[%s0 + $0x68] sm:$0xf]
  %v113 = vld [vmem:[%s0 + $0x6c] sm:$0xf]
  %v114 = vld [vmem:[%s0 + $0x70] sm:$0xf]
  %v115 = vld [vmem:[%s0 + $0x74] sm:$0xf]
  %v116 = vld [vmem:[%s0 + $0x78] sm:$0xf]
  %v117 = vld [vmem:[%s0 + $0x7c] sm:$0xf]
  %v118 = vld [vmem:[%s2] sm:$0xf]
  %v119 = vld [vmem:[%s2 + $0x4] sm:$0x3]
  %v120 = vld [vmem:[%s3] sm:$0x1]
  %v122 = vlaneseq
  %v123 = vshrl.u32 %v122, 7
  %v124 = vsub.s32 0, %v123
  %v125 = vrot.slane %v120, %v124
  %v159 = vunpack.c.l.b16 %v86
  %v160 = vunpack.c.l.b16 %v87
  %v161 = vunpack.c.l.b16 %v88
  %v162 = vunpack.c.l.b16 %v89
  %v163 = vunpack.c.l.b16 %v90
  %v164 = vunpack.c.l.b16 %v91
  %v165 = vunpack.c.l.b16 %v92
  %v166 = vunpack.c.l.b16 %v93
  %v167 = vunpack.c.l.b16 %v94
  %v168 = vunpack.c.l.b16 %v95
  %v169 = vunpack.c.l.b16 %v96
  %v170 = vunpack.c.l.b16 %v97
  %v171 = vunpack.c.l.b16 %v98
  %v172 = vunpack.c.l.b16 %v99
  %v173 = vunpack.c.l.b16 %v100
  %v174 = vunpack.c.l.b16 %v101
  %v175 = vunpack.c.l.b16 %v102
  %v176 = vunpack.c.l.b16 %v103
  %v177 = vunpack.c.l.b16 %v104
  %v178 = vunpack.c.l.b16 %v105
  %v179 = vunpack.c.l.b16 %v106
  %v180 = vunpack.c.l.b16 %v107
  %v181 = vunpack.c.l.b16 %v108
  %v182 = vunpack.c.l.b16 %v109
  %v183 = vunpack.c.l.b16 %v110
  %v184 = vunpack.c.l.b16 %v111
  %v185 = vunpack.c.l.b16 %v112
  %v186 = vunpack.c.l.b16 %v113
  %v187 = vunpack.c.l.b16 %v114
  %v188 = vunpack.c.l.b16 %v115
  %v189 = vunpack.c.l.b16 %v116
  %v190 = vunpack.c.l.b16 %v117
  %v191 = vpack.c.b16 %v160, %v159
  %v192 = vpack.c.b16 %v162, %v161
  %v193 = vpack.c.b16 %v164, %v163
  %v194 = vpack.c.b16 %v166, %v165
  %v195 = vpack.c.b16 %v168, %v167
  %v196 = vpack.c.b16 %v170, %v169
  %v197 = vpack.c.b16 %v172, %v171
  %v198 = vpack.c.b16 %v174, %v173
  %v199 = vpack.c.b16 %v176, %v175
  %v200 = vpack.c.b16 %v178, %v177
  %v201 = vpack.c.b16 %v180, %v179
  %v202 = vpack.c.b16 %v182, %v181
  %v203 = vpack.c.b16 %v184, %v183
  %v204 = vpack.c.b16 %v186, %v185
  %v205 = vpack.c.b16 %v188, %v187
  %v206 = vpack.c.b16 %v190, %v189
  %v209 = vunpack.c.l.b16 %v118
  %v210 = vunpack.c.l.b16 %v119
  %v211 = vpack.c.b16 %v210, %v209
  %vm212 = vcmask 89088
  %v214 = vsel %vm212, %v191, 0
  %v217 = vsel %vm212, %v192, 0
  %v220 = vsel %vm212, %v193, 0
  %v223 = vsel %vm212, %v194, 0
  %v226 = vsel %vm212, %v195, 0
  %v229 = vsel %vm212, %v196, 0
  %v232 = vsel %vm212, %v197, 0
  %v235 = vsel %vm212, %v198, 0
  %v238 = vsel %vm212, %v199, 0
  %v241 = vsel %vm212, %v200, 0
  %v244 = vsel %vm212, %v201, 0
  %v247 = vsel %vm212, %v202, 0
  %v250 = vsel %vm212, %v203, 0
  %v253 = vsel %vm212, %v204, 0
  %v256 = vsel %vm212, %v205, 0
  %v259 = vsel %vm212, %v206, 0
  %vm261 = vcmask 1044480
  %vm262 = vcmask 1045504
  %v263 = vsel %vm261, 4294967295, 65535
  %v264 = vsel %vm262, %v263, 0
  %v266 = vand.u32 %v211, %v264
  %268 = vmatprep.subr.bf16.mxu0 0
  %269 = vmatpush1.bf16.msra.mxu0 %v266
  %270 = vmatprep.subr.bf16.mxu0 0
  %271 = vmatpush1.bf16.msra.mxu0 0
  %272 = vmatprep.subr.bf16.mxu0 0
  %273 = vmatpush1.bf16.msra.mxu0 0
  %274 = vmatprep.subr.bf16.mxu0 0
  %275 = vmatpush1.bf16.msra.mxu0 0
  %276 = vmatprep.subr.bf16.mxu0 0
  %277 = vmatpush1.bf16.msra.mxu0 0
  %278 = vmatprep.subr.bf16.mxu0 0
  %279 = vmatpush1.bf16.msra.mxu0 0
  %280 = vmatprep.subr.bf16.mxu0 0
  %281 = vmatpush1.bf16.msra.mxu0 0
  %282 = vmatprep.subr.bf16.mxu0 0
  %283 = vmatpush1.bf16.msra.mxu0 0
  %284 = vmatprep.subr.bf16.mxu0 0
  %285 = vmatpush1.bf16.msra.mxu0 0
  %286 = vmatprep.subr.bf16.mxu0 0
  %287 = vmatpush1.bf16.msra.mxu0 0
  %288 = vmatprep.subr.bf16.mxu0 0
  %289 = vmatpush1.bf16.msra.mxu0 0
  %290 = vmatprep.subr.bf16.mxu0 0
  %291 = vmatpush1.bf16.msra.mxu0 0
  %292 = vmatprep.subr.bf16.mxu0 0
  %293 = vmatpush1.bf16.msra.mxu0 0
  %294 = vmatprep.subr.bf16.mxu0 0
  %295 = vmatpush1.bf16.msra.mxu0 0
  %296 = vmatprep.subr.bf16.mxu0 0
  %297 = vmatpush1.bf16.msra.mxu0 0
  %298 = vmatprep.subr.bf16.mxu0 0
  %299 = vmatpush1.bf16.msra.mxu0 0
  %300 = vmatprep.mubr.bf16.mxu0 0
  %301 = vmatmul.mubr.bf16.gmra.mrb[0].mxu0 %v214
  %v302 = vpop.f32.mrb[0].mxu0
  %v303 = vadd.f32 %v125, %v302
  %v304 = vpop.f32.mrb[0].mxu0
  %v305 = vpop.f32.mrb[0].mxu0
  %v306 = vadd.f32 %v125, %v305
  %v307 = vpop.f32.mrb[0].mxu0
  %308 = vmatprep.mubr.bf16.mxu0 0
  %309 = vmatmul.mubr.bf16.gmra.mrb[0].mxu0 %v217
  %v310 = vpop.f32.mrb[0].mxu0
  %v311 = vadd.f32 %v125, %v310
  %v312 = vpop.f32.mrb[0].mxu0
  %v313 = vpop.f32.mrb[0].mxu0
  %v314 = vadd.f32 %v125, %v313
  %v315 = vpop.f32.mrb[0].mxu0
  %316 = vmatprep.mubr.bf16.mxu0 0
  %317 = vmatmul.mubr.bf16.gmra.mrb[0].mxu0 %v220
  %v318 = vpop.f32.mrb[0].mxu0
  %v319 = vadd.f32 %v125, %v318
  %v320 = vpop.f32.mrb[0].mxu0
  %v321 = vpop.f32.mrb[0].mxu0
  %v322 = vadd.f32 %v125, %v321
  %v323 = vpop.f32.mrb[0].mxu0
  %324 = vmatprep.mubr.bf16.mxu0 0
  %325 = vmatmul.mubr.bf16.gmra.mrb[0].mxu0 %v223
  %v326 = vpop.f32.mrb[0].mxu0
  %v327 = vadd.f32 %v125, %v326
  %v328 = vpop.f32.mrb[0].mxu0
  %v329 = vpop.f32.mrb[0].mxu0
  %v330 = vadd.f32 %v125, %v329
  %v331 = vpop.f32.mrb[0].mxu0
  %332 = vmatprep.mubr.bf16.mxu0 0
  %333 = vmatmul.mubr.bf16.gmra.mrb[0].mxu0 %v226
  %v334 = vpop.f32.mrb[0].mxu0
  %v335 = vadd.f32 %v125, %v334
  %v336 = vpop.f32.mrb[0].mxu0
  %v337 = vpop.f32.mrb[0].mxu0
  %v338 = vadd.f32 %v125, %v337
  %v339 = vpop.f32.mrb[0].mxu0
  %340 = vmatprep.mubr.bf16.mxu0 0
  %341 = vmatmul.mubr.bf16.gmra.mrb[0].mxu0 %v229
  %v342 = vpop.f32.mrb[0].mxu0
  %v343 = vadd.f32 %v125, %v342
  %v344 = vpop.f32.mrb[0].mxu0
  %v345 = vpop.f32.mrb[0].mxu0
  %v346 = vadd.f32 %v125, %v345
  %v347 = vpop.f32.mrb[0].mxu0
  %348 = vmatprep.mubr.bf16.mxu0 0
  %349 = vmatmul.mubr.bf16.gmra.mrb[0].mxu0 %v232
  %v350 = vpop.f32.mrb[0].mxu0
  %v351 = vadd.f32 %v125, %v350
  %v352 = vpop.f32.mrb[0].mxu0
  %v353 = vpop.f32.mrb[0].mxu0
  %v354 = vadd.f32 %v125, %v353
  %v355 = vpop.f32.mrb[0].mxu0
  %356 = vmatprep.mubr.bf16.mxu0 0
  %357 = vmatmul.mubr.bf16.gmra.mrb[0].mxu0 %v235
  %v358 = vpop.f32.mrb[0].mxu0
  %v359 = vadd.f32 %v125, %v358
  %v360 = vpop.f32.mrb[0].mxu0
  %v361 = vpop.f32.mrb[0].mxu0
  %v362 = vadd.f32 %v125, %v361
  %v363 = vpop.f32.mrb[0].mxu0
  %364 = vmatprep.mubr.bf16.mxu0 0
  %365 = vmatmul.mubr.bf16.gmra.mrb[0].mxu0 %v238
  %v366 = vpop.f32.mrb[0].mxu0
  %v367 = vadd.f32 %v125, %v366
  %v368 = vpop.f32.mrb[0].mxu0
  %v369 = vpop.f32.mrb[0].mxu0
  %v370 = vadd.f32 %v125, %v369
  %v371 = vpop.f32.mrb[0].mxu0
  %372 = vmatprep.mubr.bf16.mxu0 0
  %373 = vmatmul.mubr.bf16.gmra.mrb[0].mxu0 %v241
  %v374 = vpop.f32.mrb[0].mxu0
  %v375 = vadd.f32 %v125, %v374
  %v376 = vpop.f32.mrb[0].mxu0
  %v377 = vpop.f32.mrb[0].mxu0
  %v378 = vadd.f32 %v125, %v377
  %v379 = vpop.f32.mrb[0].mxu0
  %380 = vmatprep.mubr.bf16.mxu0 0
  %381 = vmatmul.mubr.bf16.gmra.mrb[0].mxu0 %v244
  %v382 = vpop.f32.mrb[0].mxu0
  %v383 = vadd.f32 %v125, %v382
  %v384 = vpop.f32.mrb[0].mxu0
  %v385 = vpop.f32.mrb[0].mxu0
  %v386 = vadd.f32 %v125, %v385
  %v387 = vpop.f32.mrb[0].mxu0
  %388 = vmatprep.mubr.bf16.mxu0 0
  %389 = vmatmul.mubr.bf16.gmra.mrb[0].mxu0 %v247
  %v390 = vpop.f32.mrb[0].mxu0
  %v391 = vadd.f32 %v125, %v390
  %v392 = vpop.f32.mrb[0].mxu0
  %v393 = vpop.f32.mrb[0].mxu0
  %v394 = vadd.f32 %v125, %v393
  %v395 = vpop.f32.mrb[0].mxu0
  %396 = vmatprep.mubr.bf16.mxu0 0
  %397 = vmatmul.mubr.bf16.gmra.mrb[0].mxu0 %v250
  %v398 = vpop.f32.mrb[0].mxu0
  %v399 = vadd.f32 %v125, %v398
  %v400 = vpop.f32.mrb[0].mxu0
  %v401 = vpop.f32.mrb[0].mxu0
  %v402 = vadd.f32 %v125, %v401
  %v403 = vpop.f32.mrb[0].mxu0
  %404 = vmatprep.mubr.bf16.mxu0 0
  %405 = vmatmul.mubr.bf16.gmra.mrb[0].mxu0 %v253
  %v406 = vpop.f32.mrb[0].mxu0
  %v407 = vadd.f32 %v125, %v406
  %v408 = vpop.f32.mrb[0].mxu0
  %v409 = vpop.f32.mrb[0].mxu0
  %v410 = vadd.f32 %v125, %v409
  %v411 = vpop.f32.mrb[0].mxu0
  %412 = vmatprep.mubr.bf16.mxu0 0
  %413 = vmatmul.mubr.bf16.gmra.mrb[0].mxu0 %v256
  %v414 = vpop.f32.mrb[0].mxu0
  %v415 = vadd.f32 %v125, %v414
  %v416 = vpop.f32.mrb[0].mxu0
  %v417 = vpop.f32.mrb[0].mxu0
  %v418 = vadd.f32 %v125, %v417
  %v419 = vpop.f32.mrb[0].mxu0
  %420 = vmatprep.mubr.bf16.mxu0 0
  %421 = vmatmul.mubr.bf16.gmra.mrb[0].mxu0 %v259
  %v422 = vpop.f32.mrb[0].mxu0
  %v423 = vadd.f32 %v125, %v422
  %v424 = vpop.f32.mrb[0].mxu0
  %v425 = vpop.f32.mrb[0].mxu0
  %v426 = vadd.f32 %v125, %v425
  %v427 = vpop.f32.mrb[0].mxu0
  %428 = vdwg.mxu0
  %vm429 = vcmask 261120
  %v430 = vsel %vm429, %v303, 0.0
  %v431 = vsel %vm429, %v306, 0.0
  %v432 = vadd.f32 %v430, %v431
  %v433 = vsel %vm429, %v311, 0.0
  %v434 = vadd.f32 %v432, %v433
  %v435 = vsel %vm429, %v314, 0.0
  %v436 = vadd.f32 %v434, %v435
  %v437 = vsel %vm429, %v319, 0.0
  %v438 = vadd.f32 %v436, %v437
  %v439 = vsel %vm429, %v322, 0.0
  %v440 = vadd.f32 %v438, %v439
  %v441 = vsel %vm429, %v327, 0.0
  %v442 = vadd.f32 %v440, %v441
  %v443 = vsel %vm429, %v330, 0.0
  %v444 = vadd.f32 %v442, %v443
  %v445 = vsel %vm429, %v335, 0.0
  %v446 = vadd.f32 %v444, %v445
  %v447 = vsel %vm429, %v338, 0.0
  %v448 = vadd.f32 %v446, %v447
  %v449 = vsel %vm429, %v343, 0.0
  %v450 = vadd.f32 %v448, %v449
  %v451 = vsel %vm429, %v346, 0.0
  %v452 = vadd.f32 %v450, %v451
  %v453 = vsel %vm429, %v351, 0.0
  %v454 = vadd.f32 %v452, %v453
  %v455 = vsel %vm429, %v354, 0.0
  %v456 = vadd.f32 %v454, %v455
  %v457 = vsel %vm429, %v359, 0.0
  %v458 = vadd.f32 %v456, %v457
  %v459 = vsel %vm429, %v362, 0.0
  %v460 = vadd.f32 %v458, %v459
  %v461 = vsel %vm429, %v367, 0.0
  %v462 = vadd.f32 %v460, %v461
  %v463 = vsel %vm429, %v370, 0.0
  %v464 = vadd.f32 %v462, %v463
  %v465 = vsel %vm429, %v375, 0.0
  %v466 = vadd.f32 %v464, %v465
  %v467 = vsel %vm429, %v378, 0.0
  %v468 = vadd.f32 %v466, %v467
  %v469 = vsel %vm429, %v383, 0.0
  %v470 = vadd.f32 %v468, %v469
  %v471 = vsel %vm429, %v386, 0.0
  %v472 = vadd.f32 %v470, %v471
  %v473 = vsel %vm429, %v391, 0.0
  %v474 = vadd.f32 %v472, %v473
  %v475 = vsel %vm429, %v394, 0.0
  %v476 = vadd.f32 %v474, %v475
  %v477 = vsel %vm429, %v399, 0.0
  %v478 = vadd.f32 %v476, %v477
  %v479 = vsel %vm429, %v402, 0.0
  %v480 = vadd.f32 %v478, %v479
  %v481 = vsel %vm429, %v407, 0.0
  %v482 = vadd.f32 %v480, %v481
  %v483 = vsel %vm429, %v410, 0.0
  %v484 = vadd.f32 %v482, %v483
  %v485 = vsel %vm429, %v415, 0.0
  %v486 = vadd.f32 %v484, %v485
  %v487 = vsel %vm429, %v418, 0.0
  %v488 = vadd.f32 %v486, %v487
  %v489 = vsel %vm429, %v423, 0.0
  %v490 = vadd.f32 %v488, %v489
  %v491 = vsel %vm429, %v426, 0.0
  %v492 = vadd.f32 %v490, %v491
  %493 = vadd.xlane.f32.xlu0 %v492
  %v494 = vpop.xlane.xlu0 %493
  %v495 = vrot.slane %v494, 4
  %v496 = vadd.f32 %v494, %v495
  %v497 = vrot.slane %v496, 2
  %v498 = vadd.f32 %v496, %v497
  %v499 = vrot.slane %v498, 1
  %v500 = vadd.f32 %v498, %v499
  %s501 = vtos %v500
  %v502 = vstv %s501
  %v503 = vrcp.pop 8192.0
  %v504 = vmul.f32 %v502, %v503
  %v505 = vsub.f32 %v303, %v504
  %v506 = vsub.f32 %v306, %v504
  %v507 = vsub.f32 %v311, %v504
  %v508 = vsub.f32 %v314, %v504
  %v509 = vsub.f32 %v319, %v504
  %v510 = vsub.f32 %v322, %v504
  %v511 = vsub.f32 %v327, %v504
  %v512 = vsub.f32 %v330, %v504
  %v513 = vsub.f32 %v335, %v504
  %v514 = vsub.f32 %v338, %v504
  %v515 = vsub.f32 %v343, %v504
  %v516 = vsub.f32 %v346, %v504
  %v517 = vsub.f32 %v351, %v504
  %v518 = vsub.f32 %v354, %v504
  %v519 = vsub.f32 %v359, %v504
  %v520 = vsub.f32 %v362, %v504
  %v521 = vsub.f32 %v367, %v504
  %v522 = vsub.f32 %v370, %v504
  %v523 = vsub.f32 %v375, %v504
  %v524 = vsub.f32 %v378, %v504
  %v525 = vsub.f32 %v383, %v504
  %v526 = vsub.f32 %v386, %v504
  %v527 = vsub.f32 %v391, %v504
  %v528 = vsub.f32 %v394, %v504
  %v529 = vsub.f32 %v399, %v504
  %v530 = vsub.f32 %v402, %v504
  %v531 = vsub.f32 %v407, %v504
  %v532 = vsub.f32 %v410, %v504
  %v533 = vsub.f32 %v415, %v504
  %v534 = vsub.f32 %v418, %v504
  %v535 = vsub.f32 %v423, %v504
  %v536 = vsub.f32 %v426, %v504
  %v537 = vmul.f32 %v505, %v505
  %v538 = vmul.f32 %v506, %v506
  %v539 = vmul.f32 %v507, %v507
  %v540 = vmul.f32 %v508, %v508
  %v541 = vmul.f32 %v509, %v509
  %v542 = vmul.f32 %v510, %v510
  %v543 = vmul.f32 %v511, %v511
  %v544 = vmul.f32 %v512, %v512
  %v545 = vmul.f32 %v513, %v513
  %v546 = vmul.f32 %v514, %v514
  %v547 = vmul.f32 %v515, %v515
  %v548 = vmul.f32 %v516, %v516
  %v549 = vmul.f32 %v517, %v517
  %v550 = vmul.f32 %v518, %v518
  %v551 = vmul.f32 %v519, %v519
  %v552 = vmul.f32 %v520, %v520
  %v553 = vmul.f32 %v521, %v521
  %v554 = vmul.f32 %v522, %v522
  %v555 = vmul.f32 %v523, %v523
  %v556 = vmul.f32 %v524, %v524
  %v557 = vmul.f32 %v525, %v525
  %v558 = vmul.f32 %v526, %v526
  %v559 = vmul.f32 %v527, %v527
  %v560 = vmul.f32 %v528, %v528
  %v561 = vmul.f32 %v529, %v529
  %v562 = vmul.f32 %v530, %v530
  %v563 = vmul.f32 %v531, %v531
  %v564 = vmul.f32 %v532, %v532
  %v565 = vmul.f32 %v533, %v533
  %v566 = vmul.f32 %v534, %v534
  %v567 = vmul.f32 %v535, %v535
  %v568 = vmul.f32 %v536, %v536
  %v569 = vsel %vm429, %v537, 0.0
  %v570 = vsel %vm429, %v538, 0.0
  %v571 = vadd.f32 %v569, %v570
  %v572 = vsel %vm429, %v539, 0.0
  %v573 = vadd.f32 %v571, %v572
  %v574 = vsel %vm429, %v540, 0.0
  %v575 = vadd.f32 %v573, %v574
  %v576 = vsel %vm429, %v541, 0.0
  %v577 = vadd.f32 %v575, %v576
  %v578 = vsel %vm429, %v542, 0.0
  %v579 = vadd.f32 %v577, %v578
  %v580 = vsel %vm429, %v543, 0.0
  %v581 = vadd.f32 %v579, %v580
  %v582 = vsel %vm429, %v544, 0.0
  %v583 = vadd.f32 %v581, %v582
  %v584 = vsel %vm429, %v545, 0.0
  %v585 = vadd.f32 %v583, %v584
  %v586 = vsel %vm429, %v546, 0.0
  %v587 = vadd.f32 %v585, %v586
  %v588 = vsel %vm429, %v547, 0.0
  %v589 = vadd.f32 %v587, %v588
  %v590 = vsel %vm429, %v548, 0.0
  %v591 = vadd.f32 %v589, %v590
  %v592 = vsel %vm429, %v549, 0.0
  %v593 = vadd.f32 %v591, %v592
  %v594 = vsel %vm429, %v550, 0.0
  %v595 = vadd.f32 %v593, %v594
  %v596 = vsel %vm429, %v551, 0.0
  %v597 = vadd.f32 %v595, %v596
  %v598 = vsel %vm429, %v552, 0.0
  %v599 = vadd.f32 %v597, %v598
  %v600 = vsel %vm429, %v553, 0.0
  %v601 = vadd.f32 %v599, %v600
  %v602 = vsel %vm429, %v554, 0.0
  %v603 = vadd.f32 %v601, %v602
  %v604 = vsel %vm429, %v555, 0.0
  %v605 = vadd.f32 %v603, %v604
  %v606 = vsel %vm429, %v556, 0.0
  %v607 = vadd.f32 %v605, %v606
  %v608 = vsel %vm429, %v557, 0.0
  %v609 = vadd.f32 %v607, %v608
  %v610 = vsel %vm429, %v558, 0.0
  %v611 = vadd.f32 %v609, %v610
  %v612 = vsel %vm429, %v559, 0.0
  %v613 = vadd.f32 %v611, %v612
  %v614 = vsel %vm429, %v560, 0.0
  %v615 = vadd.f32 %v613, %v614
  %v616 = vsel %vm429, %v561, 0.0
  %v617 = vadd.f32 %v615, %v616
  %v618 = vsel %vm429, %v562, 0.0
  %v619 = vadd.f32 %v617, %v618
  %v620 = vsel %vm429, %v563, 0.0
  %v621 = vadd.f32 %v619, %v620
  %v622 = vsel %vm429, %v564, 0.0
  %v623 = vadd.f32 %v621, %v622
  %v624 = vsel %vm429, %v565, 0.0
  %v625 = vadd.f32 %v623, %v624
  %v626 = vsel %vm429, %v566, 0.0
  %v627 = vadd.f32 %v625, %v626
  %v628 = vsel %vm429, %v567, 0.0
  %v629 = vadd.f32 %v627, %v628
  %v630 = vsel %vm429, %v568, 0.0
  %v631 = vadd.f32 %v629, %v630
  %632 = vadd.xlane.f32.xlu0 %v631
  %v633 = vpop.xlane.xlu0 %632
  %v634 = vrot.slane %v633, 4
  %v635 = vadd.f32 %v633, %v634
  %v636 = vrot.slane %v635, 2
  %v637 = vadd.f32 %v635, %v636
  %v638 = vrot.slane %v637, 1
  %v639 = vadd.f32 %v637, %v638
  %s640 = vtos %v639
  %v641 = vstv %s640
  %v642 = vmul.f32 %v641, %v503
  %v643 = vrsqrt.pop %v642
  %v644 = vmul.f32 %v642, %v643
  %vm645 = vcmp.eq.f32.partialorder %v642, inf
  %v646 = vsel %vm645, %v642, %v644
  %vm647 = vcmp.eq.f32.partialorder %v642, 0.0
  %v648 = vand.u32 %v642, 2147483648
  %v649 = vsel %vm647, %v648, %v646
  %v650 = vadd.f32 %v649, 1e-05
  %v651 = vrcp.pop %v650
  %v652 = vmul.f32 1.0, %v651
  %v653 = vmul.f32 %v505, %v652
  %v654 = vmul.f32 %v506, %v652
  %v655 = vmul.f32 %v507, %v652
  %v656 = vmul.f32 %v508, %v652
  %v657 = vmul.f32 %v509, %v652
  %v658 = vmul.f32 %v510, %v652
  %v659 = vmul.f32 %v511, %v652
  %v660 = vmul.f32 %v512, %v652
  %v661 = vmul.f32 %v513, %v652
  %v662 = vmul.f32 %v514, %v652
  %v663 = vmul.f32 %v515, %v652
  %v664 = vmul.f32 %v516, %v652
  %v665 = vmul.f32 %v517, %v652
  %v666 = vmul.f32 %v518, %v652
  %v667 = vmul.f32 %v519, %v652
  %v668 = vmul.f32 %v520, %v652
  %v669 = vmul.f32 %v521, %v652
  %v670 = vmul.f32 %v522, %v652
  %v671 = vmul.f32 %v523, %v652
  %v672 = vmul.f32 %v524, %v652
  %v673 = vmul.f32 %v525, %v652
  %v674 = vmul.f32 %v526, %v652
  %v675 = vmul.f32 %v527, %v652
  %v676 = vmul.f32 %v528, %v652
  %v677 = vmul.f32 %v529, %v652
  %v678 = vmul.f32 %v530, %v652
  %v679 = vmul.f32 %v531, %v652
  %v680 = vmul.f32 %v532, %v652
  %v681 = vmul.f32 %v533, %v652
  %v682 = vmul.f32 %v534, %v652
  %v683 = vmul.f32 %v535, %v652
  %v684 = vmul.f32 %v536, %v652
  %v685 = vld [vmem:[%s4] sm:$0x1]
  %v687 = vlaneseq
  %v688 = vshrl.u32 %v687, 7
  %v689 = vsub.s32 0, %v688
  %v690 = vrot.slane %v685, %v689
  %v692 = vmul.f32 %v653, %v690
  %v693 = vmul.f32 %v654, %v690
  %v694 = vmul.f32 %v655, %v690
  %v695 = vmul.f32 %v656, %v690
  %v696 = vmul.f32 %v657, %v690
  %v697 = vmul.f32 %v658, %v690
  %v698 = vmul.f32 %v659, %v690
  %v699 = vmul.f32 %v660, %v690
  %v700 = vmul.f32 %v661, %v690
  %v701 = vmul.f32 %v662, %v690
  %v702 = vmul.f32 %v663, %v690
  %v703 = vmul.f32 %v664, %v690
  %v704 = vmul.f32 %v665, %v690
  %v705 = vmul.f32 %v666, %v690
  %v706 = vmul.f32 %v667, %v690
  %v707 = vmul.f32 %v668, %v690
  %v708 = vmul.f32 %v669, %v690
  %v709 = vmul.f32 %v670, %v690
  %v710 = vmul.f32 %v671, %v690
  %v711 = vmul.f32 %v672, %v690
  %v712 = vmul.f32 %v673, %v690
  %v713 = vmul.f32 %v674, %v690
  %v714 = vmul.f32 %v675, %v690
  %v715 = vmul.f32 %v676, %v690
  %v716 = vmul.f32 %v677, %v690
  %v717 = vmul.f32 %v678, %v690
  %v718 = vmul.f32 %v679, %v690
  %v719 = vmul.f32 %v680, %v690
  %v720 = vmul.f32 %v681, %v690
  %v721 = vmul.f32 %v682, %v690
  %v722 = vmul.f32 %v683, %v690
  %v723 = vmul.f32 %v684, %v690
  %v724 = vld [vmem:[%s5] sm:$0x1]
  %v726 = vlaneseq
  %v727 = vshrl.u32 %v726, 7
  %v728 = vsub.s32 0, %v727
  %v729 = vrot.slane %v724, %v728
  %v731 = vadd.f32 %v692, %v729
  %v732 = vadd.f32 %v693, %v729
  %v733 = vadd.f32 %v694, %v729
  %v734 = vadd.f32 %v695, %v729
  %v735 = vadd.f32 %v696, %v729
  %v736 = vadd.f32 %v697, %v729
  %v737 = vadd.f32 %v698, %v729
  %v738 = vadd.f32 %v699, %v729
  %v739 = vadd.f32 %v700, %v729
  %v740 = vadd.f32 %v701, %v729
  %v741 = vadd.f32 %v702, %v729
  %v742 = vadd.f32 %v703, %v729
  %v743 = vadd.f32 %v704, %v729
  %v744 = vadd.f32 %v705, %v729
  %v745 = vadd.f32 %v706, %v729
  %v746 = vadd.f32 %v707, %v729
  %v747 = vadd.f32 %v708, %v729
  %v748 = vadd.f32 %v709, %v729
  %v749 = vadd.f32 %v710, %v729
  %v750 = vadd.f32 %v711, %v729
  %v751 = vadd.f32 %v712, %v729
  %v752 = vadd.f32 %v713, %v729
  %v753 = vadd.f32 %v714, %v729
  %v754 = vadd.f32 %v715, %v729
  %v755 = vadd.f32 %v716, %v729
  %v756 = vadd.f32 %v717, %v729
  %v757 = vadd.f32 %v718, %v729
  %v758 = vadd.f32 %v719, %v729
  %v759 = vadd.f32 %v720, %v729
  %v760 = vadd.f32 %v721, %v729
  %v761 = vadd.f32 %v722, %v729
  %v762 = vadd.f32 %v723, %v729
  %v763 = vmul.f32 %v731, 0.01
  %v764 = vmul.f32 %v732, 0.01
  %v765 = vmul.f32 %v733, 0.01
  %v766 = vmul.f32 %v734, 0.01
  %v767 = vmul.f32 %v735, 0.01
  %v768 = vmul.f32 %v736, 0.01
  %v769 = vmul.f32 %v737, 0.01
  %v770 = vmul.f32 %v738, 0.01
  %v771 = vmul.f32 %v739, 0.01
  %v772 = vmul.f32 %v740, 0.01
  %v773 = vmul.f32 %v741, 0.01
  %v774 = vmul.f32 %v742, 0.01
  %v775 = vmul.f32 %v743, 0.01
  %v776 = vmul.f32 %v744, 0.01
  %v777 = vmul.f32 %v745, 0.01
  %v778 = vmul.f32 %v746, 0.01
  %v779 = vmul.f32 %v747, 0.01
  %v780 = vmul.f32 %v748, 0.01
  %v781 = vmul.f32 %v749, 0.01
  %v782 = vmul.f32 %v750, 0.01
  %v783 = vmul.f32 %v751, 0.01
  %v784 = vmul.f32 %v752, 0.01
  %v785 = vmul.f32 %v753, 0.01
  %v786 = vmul.f32 %v754, 0.01
  %v787 = vmul.f32 %v755, 0.01
  %v788 = vmul.f32 %v756, 0.01
  %v789 = vmul.f32 %v757, 0.01
  %v790 = vmul.f32 %v758, 0.01
  %v791 = vmul.f32 %v759, 0.01
  %v792 = vmul.f32 %v760, 0.01
  %v793 = vmul.f32 %v761, 0.01
  %v794 = vmul.f32 %v762, 0.01
  %v795 = vmax.f32 %v731, %v763
  %v796 = vmax.f32 %v732, %v764
  %v797 = vmax.f32 %v733, %v765
  %v798 = vmax.f32 %v734, %v766
  %v799 = vmax.f32 %v735, %v767
  %v800 = vmax.f32 %v736, %v768
  %v801 = vmax.f32 %v737, %v769
  %v802 = vmax.f32 %v738, %v770
  %v803 = vmax.f32 %v739, %v771
  %v804 = vmax.f32 %v740, %v772
  %v805 = vmax.f32 %v741, %v773
  %v806 = vmax.f32 %v742, %v774
  %v807 = vmax.f32 %v743, %v775
  %v808 = vmax.f32 %v744, %v776
  %v809 = vmax.f32 %v745, %v777
  %v810 = vmax.f32 %v746, %v778
  %v811 = vmax.f32 %v747, %v779
  %v812 = vmax.f32 %v748, %v780
  %v813 = vmax.f32 %v749, %v781
  %v814 = vmax.f32 %v750, %v782
  %v815 = vmax.f32 %v751, %v783
  %v816 = vmax.f32 %v752, %v784
  %v817 = vmax.f32 %v753, %v785
  %v818 = vmax.f32 %v754, %v786
  %v819 = vmax.f32 %v755, %v787
  %v820 = vmax.f32 %v756, %v788
  %v821 = vmax.f32 %v757, %v789
  %v822 = vmax.f32 %v758, %v790
  %v823 = vmax.f32 %v759, %v791
  %v824 = vmax.f32 %v760, %v792
  %v825 = vmax.f32 %v761, %v793
  %v826 = vmax.f32 %v762, %v794
  %v827 = vld [vmem:[%s6] sm:$0xf]
  %v828 = vld [vmem:[%s6 + $0x4] sm:$0xf]
  %v829 = vld [vmem:[%s6 + $0x8] sm:$0xf]
  %v830 = vld [vmem:[%s6 + $0xc] sm:$0xf]
  %v831 = vld [vmem:[%s7] sm:$0x1]
  %v832 = vld [vmem:[%s8] sm:$0xf]
  %v833 = vld [vmem:[%s8 + $0x4] sm:$0xf]
  %v834 = vld [vmem:[%s8 + $0x8] sm:$0xf]
  %v835 = vld [vmem:[%s8 + $0xc] sm:$0xf]
  %v836 = vld [vmem:[%s8 + $0x10] sm:$0xf]
  %v837 = vld [vmem:[%s8 + $0x14] sm:$0xf]
  %v838 = vld [vmem:[%s8 + $0x18] sm:$0xf]
  %v839 = vld [vmem:[%s8 + $0x1c] sm:$0xf]
  %v840 = vld [vmem:[%s9] sm:$0x1]
  %v841 = vmax.f32 %v795, 0.0
  %v842 = vmax.f32 %v796, 0.0
  %v843 = vmax.f32 %v797, 0.0
  %v844 = vmax.f32 %v798, 0.0
  %v845 = vmax.f32 %v799, 0.0
  %v846 = vmax.f32 %v800, 0.0
  %v847 = vmax.f32 %v801, 0.0
  %v848 = vmax.f32 %v802, 0.0
  %v849 = vmax.f32 %v803, 0.0
  %v850 = vmax.f32 %v804, 0.0
  %v851 = vmax.f32 %v805, 0.0
  %v852 = vmax.f32 %v806, 0.0
  %v853 = vmax.f32 %v807, 0.0
  %v854 = vmax.f32 %v808, 0.0
  %v855 = vmax.f32 %v809, 0.0
  %v856 = vmax.f32 %v810, 0.0
  %v857 = vmax.f32 %v811, 0.0
  %v858 = vmax.f32 %v812, 0.0
  %v859 = vmax.f32 %v813, 0.0
  %v860 = vmax.f32 %v814, 0.0
  %v861 = vmax.f32 %v815, 0.0
  %v862 = vmax.f32 %v816, 0.0
  %v863 = vmax.f32 %v817, 0.0
  %v864 = vmax.f32 %v818, 0.0
  %v865 = vmax.f32 %v819, 0.0
  %v866 = vmax.f32 %v820, 0.0
  %v867 = vmax.f32 %v821, 0.0
  %v868 = vmax.f32 %v822, 0.0
  %v869 = vmax.f32 %v823, 0.0
  %v870 = vmax.f32 %v824, 0.0
  %v871 = vmax.f32 %v825, 0.0
  %v872 = vmax.f32 %v826, 0.0
  %v873 = vadd.f32 %v841, 1e-07
  %v874 = vadd.f32 %v842, 1e-07
  %v875 = vadd.f32 %v843, 1e-07
  %v876 = vadd.f32 %v844, 1e-07
  %v877 = vadd.f32 %v845, 1e-07
  %v878 = vadd.f32 %v846, 1e-07
  %v879 = vadd.f32 %v847, 1e-07
  %v880 = vadd.f32 %v848, 1e-07
  %v881 = vadd.f32 %v849, 1e-07
  %v882 = vadd.f32 %v850, 1e-07
  %v883 = vadd.f32 %v851, 1e-07
  %v884 = vadd.f32 %v852, 1e-07
  %v885 = vadd.f32 %v853, 1e-07
  %v886 = vadd.f32 %v854, 1e-07
  %v887 = vadd.f32 %v855, 1e-07
  %v888 = vadd.f32 %v856, 1e-07
  %v889 = vadd.f32 %v857, 1e-07
  %v890 = vadd.f32 %v858, 1e-07
  %v891 = vadd.f32 %v859, 1e-07
  %v892 = vadd.f32 %v860, 1e-07
  %v893 = vadd.f32 %v861, 1e-07
  %v894 = vadd.f32 %v862, 1e-07
  %v895 = vadd.f32 %v863, 1e-07
  %v896 = vadd.f32 %v864, 1e-07
  %v897 = vadd.f32 %v865, 1e-07
  %v898 = vadd.f32 %v866, 1e-07
  %v899 = vadd.f32 %v867, 1e-07
  %v900 = vadd.f32 %v868, 1e-07
  %v901 = vadd.f32 %v869, 1e-07
  %v902 = vadd.f32 %v870, 1e-07
  %v903 = vadd.f32 %v871, 1e-07
  %v904 = vadd.f32 %v872, 1e-07
  %v905 = vsel %vm429, %v873, -inf
  %v906 = vsel %vm429, %v874, -inf
  %v907 = vsel %vm429, %v875, -inf
  %v908 = vsel %vm429, %v876, -inf
  %v909 = vsel %vm429, %v877, -inf
  %v910 = vmax.f32 %v905, %v909
  %v911 = vsel %vm429, %v878, -inf
  %v912 = vmax.f32 %v906, %v911
  %v913 = vsel %vm429, %v879, -inf
  %v914 = vmax.f32 %v907, %v913
  %v915 = vsel %vm429, %v880, -inf
  %v916 = vmax.f32 %v908, %v915
  %v917 = vsel %vm429, %v881, -inf
  %v918 = vmax.f32 %v910, %v917
  %v919 = vsel %vm429, %v882, -inf
  %v920 = vmax.f32 %v912, %v919
  %v921 = vsel %vm429, %v883, -inf
  %v922 = vmax.f32 %v914, %v921
  %v923 = vsel %vm429, %v884, -inf
  %v924 = vmax.f32 %v916, %v923
  %v925 = vsel %vm429, %v885, -inf
  %v926 = vmax.f32 %v918, %v925
  %v927 = vsel %vm429, %v886, -inf
  %v928 = vmax.f32 %v920, %v927
  %v929 = vsel %vm429, %v887, -inf
  %v930 = vmax.f32 %v922, %v929
  %v931 = vsel %vm429, %v888, -inf
  %v932 = vmax.f32 %v924, %v931
  %v933 = vsel %vm429, %v889, -inf
  %v934 = vmax.f32 %v926, %v933
  %v935 = vsel %vm429, %v890, -inf
  %v936 = vmax.f32 %v928, %v935
  %v937 = vsel %vm429, %v891, -inf
  %v938 = vmax.f32 %v930, %v937
  %v939 = vsel %vm429, %v892, -inf
  %v940 = vmax.f32 %v932, %v939
  %v941 = vsel %vm429, %v893, -inf
  %v942 = vmax.f32 %v934, %v941
  %v943 = vsel %vm429, %v894, -inf
  %v944 = vmax.f32 %v936, %v943
  %v945 = vsel %vm429, %v895, -inf
  %v946 = vmax.f32 %v938, %v945
  %v947 = vsel %vm429, %v896, -inf
  %v948 = vmax.f32 %v940, %v947
  %v949 = vsel %vm429, %v897, -inf
  %v950 = vmax.f32 %v942, %v949
  %v951 = vsel %vm429, %v898, -inf
  %v952 = vmax.f32 %v944, %v951
  %v953 = vsel %vm429, %v899, -inf
  %v954 = vmax.f32 %v946, %v953
  %v955 = vsel %vm429, %v900, -inf
  %v956 = vmax.f32 %v948, %v955
  %v957 = vsel %vm429, %v901, -inf
  %v958 = vmax.f32 %v950, %v957
  %v959 = vsel %vm429, %v902, -inf
  %v960 = vmax.f32 %v952, %v959
  %v961 = vsel %vm429, %v903, -inf
  %v962 = vmax.f32 %v954, %v961
  %v963 = vsel %vm429, %v904, -inf
  %v964 = vmax.f32 %v956, %v963
  %v965 = vmax.f32 %v958, %v960
  %v966 = vmax.f32 %v962, %v964
  %v967 = vmax.f32 %v965, %v966
  %v968 = vrot.slane %v967, 4
  %v969 = vmax.f32 %v967, %v968
  %v970 = vrot.slane %v969, 2
  %v971 = vmax.f32 %v969, %v970
  %v972 = vrot.slane %v971, 1
  %v973 = vmax.f32 %v971, %v972
  %v974 = vsub.f32 %v873, %v973
  %v975 = vsub.f32 %v874, %v973
  %v976 = vsub.f32 %v875, %v973
  %v977 = vsub.f32 %v876, %v973
  %v978 = vsub.f32 %v877, %v973
  %v979 = vsub.f32 %v878, %v973
  %v980 = vsub.f32 %v879, %v973
  %v981 = vsub.f32 %v880, %v973
  %v982 = vsub.f32 %v881, %v973
  %v983 = vsub.f32 %v882, %v973
  %v984 = vsub.f32 %v883, %v973
  %v985 = vsub.f32 %v884, %v973
  %v986 = vsub.f32 %v885, %v973
  %v987 = vsub.f32 %v886, %v973
  %v988 = vsub.f32 %v887, %v973
  %v989 = vsub.f32 %v888, %v973
  %v990 = vsub.f32 %v889, %v973
  %v991 = vsub.f32 %v890, %v973
  %v992 = vsub.f32 %v891, %v973
  %v993 = vsub.f32 %v892, %v973
  %v994 = vsub.f32 %v893, %v973
  %v995 = vsub.f32 %v894, %v973
  %v996 = vsub.f32 %v895, %v973
  %v997 = vsub.f32 %v896, %v973
  %v998 = vsub.f32 %v897, %v973
  %v999 = vsub.f32 %v898, %v973
  %v1000 = vsub.f32 %v899, %v973
  %v1001 = vsub.f32 %v900, %v973
  %v1002 = vsub.f32 %v901, %v973
  %v1003 = vsub.f32 %v902, %v973
  %v1004 = vsub.f32 %v903, %v973
  %v1005 = vsub.f32 %v904, %v973
  %v1006 = vmul.f32 %v974, 1.442695
  %v1007 = vpow.pop %v1006
  %v1008 = vmul.f32 %v975, 1.442695
  %v1009 = vpow.pop %v1008
  %v1010 = vmul.f32 %v976, 1.442695
  %v1011 = vpow.pop %v1010
  %v1012 = vmul.f32 %v977, 1.442695
  %v1013 = vpow.pop %v1012
  %v1014 = vmul.f32 %v978, 1.442695
  %v1015 = vpow.pop %v1014
  %v1016 = vmul.f32 %v979, 1.442695
  %v1017 = vpow.pop %v1016
  %v1018 = vmul.f32 %v980, 1.442695
  %v1019 = vpow.pop %v1018
  %v1020 = vmul.f32 %v981, 1.442695
  %v1021 = vpow.pop %v1020
  %v1022 = vmul.f32 %v982, 1.442695
  %v1023 = vpow.pop %v1022
  %v1024 = vmul.f32 %v983, 1.442695
  %v1025 = vpow.pop %v1024
  %v1026 = vmul.f32 %v984, 1.442695
  %v1027 = vpow.pop %v1026
  %v1028 = vmul.f32 %v985, 1.442695
  %v1029 = vpow.pop %v1028
  %v1030 = vmul.f32 %v986, 1.442695
  %v1031 = vpow.pop %v1030
  %v1032 = vmul.f32 %v987, 1.442695
  %v1033 = vpow.pop %v1032
  %v1034 = vmul.f32 %v988, 1.442695
  %v1035 = vpow.pop %v1034
  %v1036 = vmul.f32 %v989, 1.442695
  %v1037 = vpow.pop %v1036
  %v1038 = vmul.f32 %v990, 1.442695
  %v1039 = vpow.pop %v1038
  %v1040 = vmul.f32 %v991, 1.442695
  %v1041 = vpow.pop %v1040
  %v1042 = vmul.f32 %v992, 1.442695
  %v1043 = vpow.pop %v1042
  %v1044 = vmul.f32 %v993, 1.442695
  %v1045 = vpow.pop %v1044
  %v1046 = vmul.f32 %v994, 1.442695
  %v1047 = vpow.pop %v1046
  %v1048 = vmul.f32 %v995, 1.442695
  %v1049 = vpow.pop %v1048
  %v1050 = vmul.f32 %v996, 1.442695
  %v1051 = vpow.pop %v1050
  %v1052 = vmul.f32 %v997, 1.442695
  %v1053 = vpow.pop %v1052
  %v1054 = vmul.f32 %v998, 1.442695
  %v1055 = vpow.pop %v1054
  %v1056 = vmul.f32 %v999, 1.442695
  %v1057 = vpow.pop %v1056
  %v1058 = vmul.f32 %v1000, 1.442695
  %v1059 = vpow.pop %v1058
  %v1060 = vmul.f32 %v1001, 1.442695
  %v1061 = vpow.pop %v1060
  %v1062 = vmul.f32 %v1002, 1.442695
  %v1063 = vpow.pop %v1062
  %v1064 = vmul.f32 %v1003, 1.442695
  %v1065 = vpow.pop %v1064
  %v1066 = vmul.f32 %v1004, 1.442695
  %v1067 = vpow.pop %v1066
  %v1068 = vmul.f32 %v1005, 1.442695
  %v1069 = vpow.pop %v1068
  %v1070 = vmul.f32 %v873, %v1007
  %v1071 = vmul.f32 %v874, %v1009
  %v1072 = vmul.f32 %v875, %v1011
  %v1073 = vmul.f32 %v876, %v1013
  %v1074 = vmul.f32 %v877, %v1015
  %v1075 = vmul.f32 %v878, %v1017
  %v1076 = vmul.f32 %v879, %v1019
  %v1077 = vmul.f32 %v880, %v1021
  %v1078 = vmul.f32 %v881, %v1023
  %v1079 = vmul.f32 %v882, %v1025
  %v1080 = vmul.f32 %v883, %v1027
  %v1081 = vmul.f32 %v884, %v1029
  %v1082 = vmul.f32 %v885, %v1031
  %v1083 = vmul.f32 %v886, %v1033
  %v1084 = vmul.f32 %v887, %v1035
  %v1085 = vmul.f32 %v888, %v1037
  %v1086 = vmul.f32 %v889, %v1039
  %v1087 = vmul.f32 %v890, %v1041
  %v1088 = vmul.f32 %v891, %v1043
  %v1089 = vmul.f32 %v892, %v1045
  %v1090 = vmul.f32 %v893, %v1047
  %v1091 = vmul.f32 %v894, %v1049
  %v1092 = vmul.f32 %v895, %v1051
  %v1093 = vmul.f32 %v896, %v1053
  %v1094 = vmul.f32 %v897, %v1055
  %v1095 = vmul.f32 %v898, %v1057
  %v1096 = vmul.f32 %v899, %v1059
  %v1097 = vmul.f32 %v900, %v1061
  %v1098 = vmul.f32 %v901, %v1063
  %v1099 = vmul.f32 %v902, %v1065
  %v1100 = vmul.f32 %v903, %v1067
  %v1101 = vmul.f32 %v904, %v1069
  %1134 = vrot.lane.b32.xlu0 %v1007, 32
  %v1135 = vpop.permute.xlu0 %1134
  %1136 = vrot.lane.b32.xlu0 %v1009, 32
  %v1137 = vpop.permute.xlu0 %1136
  %1138 = vrot.lane.b32.xlu0 %v1011, 32
  %v1139 = vpop.permute.xlu0 %1138
  %1140 = vrot.lane.b32.xlu0 %v1013, 32
  %v1141 = vpop.permute.xlu0 %1140
  %1142 = vrot.lane.b32.xlu0 %v1015, 32
  %v1143 = vpop.permute.xlu0 %1142
  %1144 = vrot.lane.b32.xlu0 %v1017, 32
  %v1145 = vpop.permute.xlu0 %1144
  %1146 = vrot.lane.b32.xlu0 %v1019, 32
  %v1147 = vpop.permute.xlu0 %1146
  %1148 = vrot.lane.b32.xlu0 %v1021, 32
  %v1149 = vpop.permute.xlu0 %1148
  %1150 = vrot.lane.b32.xlu0 %v1023, 32
  %v1151 = vpop.permute.xlu0 %1150
  %1152 = vrot.lane.b32.xlu0 %v1025, 32
  %v1153 = vpop.permute.xlu0 %1152
  %1154 = vrot.lane.b32.xlu0 %v1027, 32
  %v1155 = vpop.permute.xlu0 %1154
  %1156 = vrot.lane.b32.xlu0 %v1029, 32
  %v1157 = vpop.permute.xlu0 %1156
  %1158 = vrot.lane.b32.xlu0 %v1031, 32
  %v1159 = vpop.permute.xlu0 %1158
  %1160 = vrot.lane.b32.xlu0 %v1033, 32
  %v1161 = vpop.permute.xlu0 %1160
  %1162 = vrot.lane.b32.xlu0 %v1035, 32
  %v1163 = vpop.permute.xlu0 %1162
  %1164 = vrot.lane.b32.xlu0 %v1037, 32
  %v1165 = vpop.permute.xlu0 %1164
  %1166 = vrot.lane.b32.xlu0 %v1039, 32
  %v1167 = vpop.permute.xlu0 %1166
  %1168 = vrot.lane.b32.xlu0 %v1041, 32
  %v1169 = vpop.permute.xlu0 %1168
  %1170 = vrot.lane.b32.xlu0 %v1043, 32
  %v1171 = vpop.permute.xlu0 %1170
  %1172 = vrot.lane.b32.xlu0 %v1045, 32
  %v1173 = vpop.permute.xlu0 %1172
  %1174 = vrot.lane.b32.xlu0 %v1047, 32
  %v1175 = vpop.permute.xlu0 %1174
  %1176 = vrot.lane.b32.xlu0 %v1049, 32
  %v1177 = vpop.permute.xlu0 %1176
  %1178 = vrot.lane.b32.xlu0 %v1051, 32
  %v1179 = vpop.permute.xlu0 %1178
  %1180 = vrot.lane.b32.xlu0 %v1053, 32
  %v1181 = vpop.permute.xlu0 %1180
  %1182 = vrot.lane.b32.xlu0 %v1055, 32
  %v1183 = vpop.permute.xlu0 %1182
  %1184 = vrot.lane.b32.xlu0 %v1057, 32
  %v1185 = vpop.permute.xlu0 %1184
  %1186 = vrot.lane.b32.xlu0 %v1059, 32
  %v1187 = vpop.permute.xlu0 %1186
  %1188 = vrot.lane.b32.xlu0 %v1061, 32
  %v1189 = vpop.permute.xlu0 %1188
  %1190 = vrot.lane.b32.xlu0 %v1063, 32
  %v1191 = vpop.permute.xlu0 %1190
  %1192 = vrot.lane.b32.xlu0 %v1065, 32
  %v1193 = vpop.permute.xlu0 %1192
  %1194 = vrot.lane.b32.xlu0 %v1067, 32
  %v1195 = vpop.permute.xlu0 %1194
  %1196 = vrot.lane.b32.xlu0 %v1069, 32
  %v1197 = vpop.permute.xlu0 %1196
  %v1230 = vsel %vm429, %v1070, %v1135
  %v1231 = vsel %vm429, %v1071, %v1137
  %v1232 = vsel %vm429, %v1072, %v1139
  %v1233 = vsel %vm429, %v1073, %v1141
  %v1234 = vsel %vm429, %v1074, %v1143
  %v1235 = vsel %vm429, %v1075, %v1145
  %v1236 = vsel %vm429, %v1076, %v1147
  %v1237 = vsel %vm429, %v1077, %v1149
  %v1238 = vsel %vm429, %v1078, %v1151
  %v1239 = vsel %vm429, %v1079, %v1153
  %v1240 = vsel %vm429, %v1080, %v1155
  %v1241 = vsel %vm429, %v1081, %v1157
  %v1242 = vsel %vm429, %v1082, %v1159
  %v1243 = vsel %vm429, %v1083, %v1161
  %v1244 = vsel %vm429, %v1084, %v1163
  %v1245 = vsel %vm429, %v1085, %v1165
  %v1246 = vsel %vm429, %v1086, %v1167
  %v1247 = vsel %vm429, %v1087, %v1169
  %v1248 = vsel %vm429, %v1088, %v1171
  %v1249 = vsel %vm429, %v1089, %v1173
  %v1250 = vsel %vm429, %v1090, %v1175
  %v1251 = vsel %vm429, %v1091, %v1177
  %v1252 = vsel %vm429, %v1092, %v1179
  %v1253 = vsel %vm429, %v1093, %v1181
  %v1254 = vsel %vm429, %v1094, %v1183
  %v1255 = vsel %vm429, %v1095, %v1185
  %v1256 = vsel %vm429, %v1096, %v1187
  %v1257 = vsel %vm429, %v1097, %v1189
  %v1258 = vsel %vm429, %v1098, %v1191
  %v1259 = vsel %vm429, %v1099, %v1193
  %v1260 = vsel %vm429, %v1100, %v1195
  %v1261 = vsel %vm429, %v1101, %v1197
  %v1262 = vpack.c.bf16 %v1231, %v1230
  %v1263 = vpack.c.bf16 %v1233, %v1232
  %v1264 = vpack.c.bf16 %v1235, %v1234
  %v1265 = vpack.c.bf16 %v1237, %v1236
  %v1266 = vpack.c.bf16 %v1239, %v1238
  %v1267 = vpack.c.bf16 %v1241, %v1240
  %v1268 = vpack.c.bf16 %v1243, %v1242
  %v1269 = vpack.c.bf16 %v1245, %v1244
  %v1270 = vpack.c.bf16 %v1247, %v1246
  %v1271 = vpack.c.bf16 %v1249, %v1248
  %v1272 = vpack.c.bf16 %v1251, %v1250
  %v1273 = vpack.c.bf16 %v1253, %v1252
  %v1274 = vpack.c.bf16 %v1255, %v1254
  %v1275 = vpack.c.bf16 %v1257, %v1256
  %v1276 = vpack.c.bf16 %v1259, %v1258
  %v1277 = vpack.c.bf16 %v1261, %v1260
  %v1310 = vunpack.c.l.b16 %v54
  %v1311 = vunpack.c.h.b16 %v54
  %v1312 = vunpack.c.l.b16 %v55
  %v1313 = vunpack.c.h.b16 %v55
  %v1314 = vunpack.c.l.b16 %v56
  %v1315 = vunpack.c.h.b16 %v56
  %v1316 = vunpack.c.l.b16 %v57
  %v1317 = vunpack.c.h.b16 %v57
  %v1318 = vunpack.c.l.b16 %v58
  %v1319 = vunpack.c.h.b16 %v58
  %v1320 = vunpack.c.l.b16 %v59
  %v1321 = vunpack.c.h.b16 %v59
  %v1322 = vunpack.c.l.b16 %v60
  %v1323 = vunpack.c.h.b16 %v60
  %v1324 = vunpack.c.l.b16 %v61
  %v1325 = vunpack.c.h.b16 %v61
  %v1326 = vunpack.c.l.b16 %v62
  %v1327 = vunpack.c.h.b16 %v62
  %v1328 = vunpack.c.l.b16 %v63
  %v1329 = vunpack.c.h.b16 %v63
  %v1330 = vunpack.c.l.b16 %v64
  %v1331 = vunpack.c.h.b16 %v64
  %v1332 = vunpack.c.l.b16 %v65
  %v1333 = vunpack.c.h.b16 %v65
  %v1334 = vunpack.c.l.b16 %v66
  %v1335 = vunpack.c.h.b16 %v66
  %v1336 = vunpack.c.l.b16 %v67
  %v1337 = vunpack.c.h.b16 %v67
  %v1338 = vunpack.c.l.b16 %v68
  %v1339 = vunpack.c.h.b16 %v68
  %v1340 = vunpack.c.l.b16 %v69
  %v1341 = vunpack.c.h.b16 %v69
  %v1342 = vunpack.c.l.b16 %v70
  %v1343 = vunpack.c.h.b16 %v70
  %v1344 = vunpack.c.l.b16 %v71
  %v1345 = vunpack.c.h.b16 %v71
  %v1346 = vunpack.c.l.b16 %v72
  %v1347 = vunpack.c.h.b16 %v72
  %v1348 = vunpack.c.l.b16 %v73
  %v1349 = vunpack.c.h.b16 %v73
  %v1350 = vunpack.c.l.b16 %v74
  %v1351 = vunpack.c.h.b16 %v74
  %v1352 = vunpack.c.l.b16 %v75
  %v1353 = vunpack.c.h.b16 %v75
  %v1354 = vunpack.c.l.b16 %v76
  %v1355 = vunpack.c.h.b16 %v76
  %v1356 = vunpack.c.l.b16 %v77
  %v1357 = vunpack.c.h.b16 %v77
  %v1358 = vunpack.c.l.b16 %v78
  %v1359 = vunpack.c.h.b16 %v78
  %v1360 = vunpack.c.l.b16 %v79
  %v1361 = vunpack.c.h.b16 %v79
  %v1362 = vunpack.c.l.b16 %v80
  %v1363 = vunpack.c.h.b16 %v80
  %v1364 = vunpack.c.l.b16 %v81
  %v1365 = vunpack.c.h.b16 %v81
  %v1366 = vunpack.c.l.b16 %v82
  %v1367 = vunpack.c.h.b16 %v82
  %v1368 = vunpack.c.l.b16 %v83
  %v1369 = vunpack.c.h.b16 %v83
  %v1370 = vunpack.c.l.b16 %v84
  %v1371 = vunpack.c.h.b16 %v84
  %v1372 = vunpack.c.l.b16 %v85
  %v1373 = vunpack.c.h.b16 %v85
  %v1374 = vpack.c.b16 %v1312, %v1310
  %v1375 = vpack.c.b16 %v1313, %v1311
  %v1376 = vpack.c.b16 %v1316, %v1314
  %v1377 = vpack.c.b16 %v1317, %v1315
  %v1378 = vpack.c.b16 %v1320, %v1318
  %v1379 = vpack.c.b16 %v1321, %v1319
  %v1380 = vpack.c.b16 %v1324, %v1322
  %v1381 = vpack.c.b16 %v1325, %v1323
  %v1382 = vpack.c.b16 %v1328, %v1326
  %v1383 = vpack.c.b16 %v1329, %v1327
  %v1384 = vpack.c.b16 %v1332, %v1330
  %v1385 = vpack.c.b16 %v1333, %v1331
  %v1386 = vpack.c.b16 %v1336, %v1334
  %v1387 = vpack.c.b16 %v1337, %v1335
  %v1388 = vpack.c.b16 %v1340, %v1338
  %v1389 = vpack.c.b16 %v1341, %v1339
  %v1390 = vpack.c.b16 %v1344, %v1342
  %v1391 = vpack.c.b16 %v1345, %v1343
  %v1392 = vpack.c.b16 %v1348, %v1346
  %v1393 = vpack.c.b16 %v1349, %v1347
  %v1394 = vpack.c.b16 %v1352, %v1350
  %v1395 = vpack.c.b16 %v1353, %v1351
  %v1396 = vpack.c.b16 %v1356, %v1354
  %v1397 = vpack.c.b16 %v1357, %v1355
  %v1398 = vpack.c.b16 %v1360, %v1358
  %v1399 = vpack.c.b16 %v1361, %v1359
  %v1400 = vpack.c.b16 %v1364, %v1362
  %v1401 = vpack.c.b16 %v1365, %v1363
  %v1402 = vpack.c.b16 %v1368, %v1366
  %v1403 = vpack.c.b16 %v1369, %v1367
  %v1404 = vpack.c.b16 %v1372, %v1370
  %v1405 = vpack.c.b16 %v1373, %v1371
  %1438 = vmatprep.subr.bf16.mxu0 0
  %1439 = vmatpush1.bf16.msra.mxu0 %v1262
  %1440 = vmatprep.subr.bf16.mxu0 0
  %1441 = vmatpush1.bf16.msra.mxu0 %v1263
  %1442 = vmatprep.subr.bf16.mxu0 0
  %1443 = vmatpush1.bf16.msra.mxu0 %v1264
  %1444 = vmatprep.subr.bf16.mxu0 0
  %1445 = vmatpush1.bf16.msra.mxu0 %v1265
  %1446 = vmatprep.subr.bf16.mxu0 0
  %1447 = vmatpush1.bf16.msra.mxu0 %v1266
  %1448 = vmatprep.subr.bf16.mxu0 0
  %1449 = vmatpush1.bf16.msra.mxu0 %v1267
  %1450 = vmatprep.subr.bf16.mxu0 0
  %1451 = vmatpush1.bf16.msra.mxu0 %v1268
  %1452 = vmatprep.subr.bf16.mxu0 0
  %1453 = vmatpush1.bf16.msra.mxu0 %v1269
  %1454 = vmatprep.subr.bf16.mxu0 0
  %1455 = vmatpush1.bf16.msra.mxu0 %v1270
  %1456 = vmatprep.subr.bf16.mxu0 0
  %1457 = vmatpush1.bf16.msra.mxu0 %v1271
  %1458 = vmatprep.subr.bf16.mxu0 0
  %1459 = vmatpush1.bf16.msra.mxu0 %v1272
  %1460 = vmatprep.subr.bf16.mxu0 0
  %1461 = vmatpush1.bf16.msra.mxu0 %v1273
  %1462 = vmatprep.subr.bf16.mxu0 0
  %1463 = vmatpush1.bf16.msra.mxu0 %v1274
  %1464 = vmatprep.subr.bf16.mxu0 0
  %1465 = vmatpush1.bf16.msra.mxu0 %v1275
  %1466 = vmatprep.subr.bf16.mxu0 0
  %1467 = vmatpush1.bf16.msra.mxu0 %v1276
  %1468 = vmatprep.subr.bf16.mxu0 0
  %1469 = vmatpush1.bf16.msra.mxu0 %v1277
  %1470 = vmatprep.mubr.bf16.mxu0 %v1375
  %1471 = vmatmul.mubr.bf16.gmra.mrb[0].mxu0 %v1374
  %v1472 = vpop.f32.mrb[0].mxu0
  %v1473 = vadd.f32 0.0, %v1472
  %v1474 = vpop.f32.mrb[0].mxu0
  %v1475 = vpop.f32.mrb[0].mxu0
  %v1476 = vadd.f32 0.0, %v1475
  %v1477 = vpop.f32.mrb[0].mxu0
  %1478 = vmatprep.mubr.bf16.mxu0 %v1377
  %1479 = vmatmul.mubr.bf16.gmra.mrb[0].mxu0 %v1376
  %v1480 = vpop.f32.mrb[0].mxu0
  %v1481 = vadd.f32 0.0, %v1480
  %v1482 = vpop.f32.mrb[0].mxu0
  %v1483 = vpop.f32.mrb[0].mxu0
  %v1484 = vadd.f32 0.0, %v1483
  %v1485 = vpop.f32.mrb[0].mxu0
  %1486 = vmatprep.mubr.bf16.mxu0 %v1379
  %1487 = vmatmul.mubr.bf16.gmra.mrb[0].mxu0 %v1378
  %v1488 = vpop.f32.mrb[0].mxu0
  %v1489 = vadd.f32 0.0, %v1488
  %v1490 = vpop.f32.mrb[0].mxu0
  %v1491 = vpop.f32.mrb[0].mxu0
  %v1492 = vadd.f32 0.0, %v1491
  %v1493 = vpop.f32.mrb[0].mxu0
  %1494 = vmatprep.mubr.bf16.mxu0 %v1381
  %1495 = vmatmul.mubr.bf16.gmra.mrb[0].mxu0 %v1380
  %v1496 = vpop.f32.mrb[0].mxu0
  %v1497 = vadd.f32 0.0, %v1496
  %v1498 = vpop.f32.mrb[0].mxu0
  %v1499 = vpop.f32.mrb[0].mxu0
  %v1500 = vadd.f32 0.0, %v1499
  %v1501 = vpop.f32.mrb[0].mxu0
  %1502 = vmatprep.mubr.bf16.mxu0 %v1383
  %1503 = vmatmul.mubr.bf16.gmra.mrb[0].mxu0 %v1382
  %v1504 = vpop.f32.mrb[0].mxu0
  %v1505 = vadd.f32 0.0, %v1504
  %v1506 = vpop.f32.mrb[0].mxu0
  %v1507 = vpop.f32.mrb[0].mxu0
  %v1508 = vadd.f32 0.0, %v1507
  %v1509 = vpop.f32.mrb[0].mxu0
  %1510 = vmatprep.mubr.bf16.mxu0 %v1385
  %1511 = vmatmul.mubr.bf16.gmra.mrb[0].mxu0 %v1384
  %v1512 = vpop.f32.mrb[0].mxu0
  %v1513 = vadd.f32 0.0, %v1512
  %v1514 = vpop.f32.mrb[0].mxu0
  %v1515 = vpop.f32.mrb[0].mxu0
  %v1516 = vadd.f32 0.0, %v1515
  %v1517 = vpop.f32.mrb[0].mxu0
  %1518 = vmatprep.mubr.bf16.mxu0 %v1387
  %1519 = vmatmul.mubr.bf16.gmra.mrb[0].mxu0 %v1386
  %v1520 = vpop.f32.mrb[0].mxu0
  %v1521 = vadd.f32 0.0, %v1520
  %v1522 = vpop.f32.mrb[0].mxu0
  %v1523 = vpop.f32.mrb[0].mxu0
  %v1524 = vadd.f32 0.0, %v1523
  %v1525 = vpop.f32.mrb[0].mxu0
  %1526 = vmatprep.mubr.bf16.mxu0 %v1389
  %1527 = vmatmul.mubr.bf16.gmra.mrb[0].mxu0 %v1388
  %v1528 = vpop.f32.mrb[0].mxu0
  %v1529 = vadd.f32 0.0, %v1528
  %v1530 = vpop.f32.mrb[0].mxu0
  %v1531 = vpop.f32.mrb[0].mxu0
  %v1532 = vadd.f32 0.0, %v1531
  %v1533 = vpop.f32.mrb[0].mxu0
  %1534 = vmatprep.mubr.bf16.mxu0 %v1391
  %1535 = vmatmul.mubr.bf16.gmra.mrb[0].mxu0 %v1390
  %v1536 = vpop.f32.mrb[0].mxu0
  %v1537 = vadd.f32 0.0, %v1536
  %v1538 = vpop.f32.mrb[0].mxu0
  %v1539 = vpop.f32.mrb[0].mxu0
  %v1540 = vadd.f32 0.0, %v1539
  %v1541 = vpop.f32.mrb[0].mxu0
  %1542 = vmatprep.mubr.bf16.mxu0 %v1393
  %1543 = vmatmul.mubr.bf16.gmra.mrb[0].mxu0 %v1392
  %v1544 = vpop.f32.mrb[0].mxu0
  %v1545 = vadd.f32 0.0, %v1544
  %v1546 = vpop.f32.mrb[0].mxu0
  %v1547 = vpop.f32.mrb[0].mxu0
  %v1548 = vadd.f32 0.0, %v1547
  %v1549 = vpop.f32.mrb[0].mxu0
  %1550 = vmatprep.mubr.bf16.mxu0 %v1395
  %1551 = vmatmul.mubr.bf16.gmra.mrb[0].mxu0 %v1394
  %v1552 = vpop.f32.mrb[0].mxu0
  %v1553 = vadd.f32 0.0, %v1552
  %v1554 = vpop.f32.mrb[0].mxu0
  %v1555 = vpop.f32.mrb[0].mxu0
  %v1556 = vadd.f32 0.0, %v1555
  %v1557 = vpop.f32.mrb[0].mxu0
  %1558 = vmatprep.mubr.bf16.mxu0 %v1397
  %1559 = vmatmul.mubr.bf16.gmra.mrb[0].mxu0 %v1396
  %v1560 = vpop.f32.mrb[0].mxu0
  %v1561 = vadd.f32 0.0, %v1560
  %v1562 = vpop.f32.mrb[0].mxu0
  %v1563 = vpop.f32.mrb[0].mxu0
  %v1564 = vadd.f32 0.0, %v1563
  %v1565 = vpop.f32.mrb[0].mxu0
  %1566 = vmatprep.mubr.bf16.mxu0 %v1399
  %1567 = vmatmul.mubr.bf16.gmra.mrb[0].mxu0 %v1398
  %v1568 = vpop.f32.mrb[0].mxu0
  %v1569 = vadd.f32 0.0, %v1568
  %v1570 = vpop.f32.mrb[0].mxu0
  %v1571 = vpop.f32.mrb[0].mxu0
  %v1572 = vadd.f32 0.0, %v1571
  %v1573 = vpop.f32.mrb[0].mxu0
  %1574 = vmatprep.mubr.bf16.mxu0 %v1401
  %1575 = vmatmul.mubr.bf16.gmra.mrb[0].mxu0 %v1400
  %v1576 = vpop.f32.mrb[0].mxu0
  %v1577 = vadd.f32 0.0, %v1576
  %v1578 = vpop.f32.mrb[0].mxu0
  %v1579 = vpop.f32.mrb[0].mxu0
  %v1580 = vadd.f32 0.0, %v1579
  %v1581 = vpop.f32.mrb[0].mxu0
  %1582 = vmatprep.mubr.bf16.mxu0 %v1403
  %1583 = vmatmul.mubr.bf16.gmra.mrb[0].mxu0 %v1402
  %v1584 = vpop.f32.mrb[0].mxu0
  %v1585 = vadd.f32 0.0, %v1584
  %v1586 = vpop.f32.mrb[0].mxu0
  %v1587 = vpop.f32.mrb[0].mxu0
  %v1588 = vadd.f32 0.0, %v1587
  %v1589 = vpop.f32.mrb[0].mxu0
  %1590 = vmatprep.mubr.bf16.mxu0 %v1405
  %1591 = vmatmul.mubr.bf16.gmra.mrb[0].mxu0 %v1404
  %v1592 = vpop.f32.mrb[0].mxu0
  %v1593 = vadd.f32 0.0, %v1592
  %v1594 = vpop.f32.mrb[0].mxu0
  %v1595 = vpop.f32.mrb[0].mxu0
  %v1596 = vadd.f32 0.0, %v1595
  %v1597 = vpop.f32.mrb[0].mxu0
  %1598 = vdwg.mxu0
  %v1599 = vadd.f32 %v1473, 1e-12
  %v1600 = vadd.f32 %v1476, 1e-12
  %v1601 = vadd.f32 %v1481, 1e-12
  %v1602 = vadd.f32 %v1484, 1e-12
  %v1603 = vadd.f32 %v1489, 1e-12
  %v1604 = vadd.f32 %v1492, 1e-12
  %v1605 = vadd.f32 %v1497, 1e-12
  %v1606 = vadd.f32 %v1500, 1e-12
  %v1607 = vadd.f32 %v1505, 1e-12
  %v1608 = vadd.f32 %v1508, 1e-12
  %v1609 = vadd.f32 %v1513, 1e-12
  %v1610 = vadd.f32 %v1516, 1e-12
  %v1611 = vadd.f32 %v1521, 1e-12
  %v1612 = vadd.f32 %v1524, 1e-12
  %v1613 = vadd.f32 %v1529, 1e-12
  %v1614 = vadd.f32 %v1532, 1e-12
  %v1615 = vadd.f32 %v1537, 1e-12
  %v1616 = vadd.f32 %v1540, 1e-12
  %v1617 = vadd.f32 %v1545, 1e-12
  %v1618 = vadd.f32 %v1548, 1e-12
  %v1619 = vadd.f32 %v1553, 1e-12
  %v1620 = vadd.f32 %v1556, 1e-12
  %v1621 = vadd.f32 %v1561, 1e-12
  %v1622 = vadd.f32 %v1564, 1e-12
  %v1623 = vadd.f32 %v1569, 1e-12
  %v1624 = vadd.f32 %v1572, 1e-12
  %v1625 = vadd.f32 %v1577, 1e-12
  %v1626 = vadd.f32 %v1580, 1e-12
  %v1627 = vadd.f32 %v1585, 1e-12
  %v1628 = vadd.f32 %v1588, 1e-12
  %v1629 = vadd.f32 %v1593, 1e-12
  %v1630 = vadd.f32 %v1596, 1e-12
  %v1631 = vrcp.pop %v1599
  %v1632 = vrcp.pop %v1600
  %v1633 = vrcp.pop %v1601
  %v1634 = vrcp.pop %v1602
  %v1635 = vrcp.pop %v1603
  %v1636 = vrcp.pop %v1604
  %v1637 = vrcp.pop %v1605
  %v1638 = vrcp.pop %v1606
  %v1639 = vrcp.pop %v1607
  %v1640 = vrcp.pop %v1608
  %v1641 = vrcp.pop %v1609
  %v1642 = vrcp.pop %v1610
  %v1643 = vrcp.pop %v1611
  %v1644 = vrcp.pop %v1612
  %v1645 = vrcp.pop %v1613
  %v1646 = vrcp.pop %v1614
  %v1647 = vrcp.pop %v1615
  %v1648 = vrcp.pop %v1616
  %v1649 = vrcp.pop %v1617
  %v1650 = vrcp.pop %v1618
  %v1651 = vrcp.pop %v1619
  %v1652 = vrcp.pop %v1620
  %v1653 = vrcp.pop %v1621
  %v1654 = vrcp.pop %v1622
  %v1655 = vrcp.pop %v1623
  %v1656 = vrcp.pop %v1624
  %v1657 = vrcp.pop %v1625
  %v1658 = vrcp.pop %v1626
  %v1659 = vrcp.pop %v1627
  %v1660 = vrcp.pop %v1628
  %v1661 = vrcp.pop %v1629
  %v1662 = vrcp.pop %v1630
  %1695 = vrot.lane.b32.xlu0 %v1631, 96
  %v1696 = vpop.permute.xlu0 %1695
  %1697 = vrot.lane.b32.xlu0 %v1632, 96
  %v1698 = vpop.permute.xlu0 %1697
  %1699 = vrot.lane.b32.xlu0 %v1633, 96
  %v1700 = vpop.permute.xlu0 %1699
  %1701 = vrot.lane.b32.xlu0 %v1634, 96
  %v1702 = vpop.permute.xlu0 %1701
  %1703 = vrot.lane.b32.xlu0 %v1635, 96
  %v1704 = vpop.permute.xlu0 %1703
  %1705 = vrot.lane.b32.xlu0 %v1636, 96
  %v1706 = vpop.permute.xlu0 %1705
  %1707 = vrot.lane.b32.xlu0 %v1637, 96
  %v1708 = vpop.permute.xlu0 %1707
  %1709 = vrot.lane.b32.xlu0 %v1638, 96
  %v1710 = vpop.permute.xlu0 %1709
  %1711 = vrot.lane.b32.xlu0 %v1639, 96
  %v1712 = vpop.permute.xlu0 %1711
  %1713 = vrot.lane.b32.xlu0 %v1640, 96
  %v1714 = vpop.permute.xlu0 %1713
  %1715 = vrot.lane.b32.xlu0 %v1641, 96
  %v1716 = vpop.permute.xlu0 %1715
  %1717 = vrot.lane.b32.xlu0 %v1642, 96
  %v1718 = vpop.permute.xlu0 %1717
  %1719 = vrot.lane.b32.xlu0 %v1643, 96
  %v1720 = vpop.permute.xlu0 %1719
  %1721 = vrot.lane.b32.xlu0 %v1644, 96
  %v1722 = vpop.permute.xlu0 %1721
  %1723 = vrot.lane.b32.xlu0 %v1645, 96
  %v1724 = vpop.permute.xlu0 %1723
  %1725 = vrot.lane.b32.xlu0 %v1646, 96
  %v1726 = vpop.permute.xlu0 %1725
  %1727 = vrot.lane.b32.xlu0 %v1647, 96
  %v1728 = vpop.permute.xlu0 %1727
  %1729 = vrot.lane.b32.xlu0 %v1648, 96
  %v1730 = vpop.permute.xlu0 %1729
  %1731 = vrot.lane.b32.xlu0 %v1649, 96
  %v1732 = vpop.permute.xlu0 %1731
  %1733 = vrot.lane.b32.xlu0 %v1650, 96
  %v1734 = vpop.permute.xlu0 %1733
  %1735 = vrot.lane.b32.xlu0 %v1651, 96
  %v1736 = vpop.permute.xlu0 %1735
  %1737 = vrot.lane.b32.xlu0 %v1652, 96
  %v1738 = vpop.permute.xlu0 %1737
  %1739 = vrot.lane.b32.xlu0 %v1653, 96
  %v1740 = vpop.permute.xlu0 %1739
  %1741 = vrot.lane.b32.xlu0 %v1654, 96
  %v1742 = vpop.permute.xlu0 %1741
  %1743 = vrot.lane.b32.xlu0 %v1655, 96
  %v1744 = vpop.permute.xlu0 %1743
  %1745 = vrot.lane.b32.xlu0 %v1656, 96
  %v1746 = vpop.permute.xlu0 %1745
  %1747 = vrot.lane.b32.xlu0 %v1657, 96
  %v1748 = vpop.permute.xlu0 %1747
  %1749 = vrot.lane.b32.xlu0 %v1658, 96
  %v1750 = vpop.permute.xlu0 %1749
  %1751 = vrot.lane.b32.xlu0 %v1659, 96
  %v1752 = vpop.permute.xlu0 %1751
  %1753 = vrot.lane.b32.xlu0 %v1660, 96
  %v1754 = vpop.permute.xlu0 %1753
  %1755 = vrot.lane.b32.xlu0 %v1661, 96
  %v1756 = vpop.permute.xlu0 %1755
  %1757 = vrot.lane.b32.xlu0 %v1662, 96
  %v1758 = vpop.permute.xlu0 %1757
  %v1791 = vmul.f32 %v1473, %v1696
  %v1792 = vmul.f32 %v1476, %v1698
  %v1793 = vmul.f32 %v1481, %v1700
  %v1794 = vmul.f32 %v1484, %v1702
  %v1795 = vmul.f32 %v1489, %v1704
  %v1796 = vmul.f32 %v1492, %v1706
  %v1797 = vmul.f32 %v1497, %v1708
  %v1798 = vmul.f32 %v1500, %v1710
  %v1799 = vmul.f32 %v1505, %v1712
  %v1800 = vmul.f32 %v1508, %v1714
  %v1801 = vmul.f32 %v1513, %v1716
  %v1802 = vmul.f32 %v1516, %v1718
  %v1803 = vmul.f32 %v1521, %v1720
  %v1804 = vmul.f32 %v1524, %v1722
  %v1805 = vmul.f32 %v1529, %v1724
  %v1806 = vmul.f32 %v1532, %v1726
  %v1807 = vmul.f32 %v1537, %v1728
  %v1808 = vmul.f32 %v1540, %v1730
  %v1809 = vmul.f32 %v1545, %v1732
  %v1810 = vmul.f32 %v1548, %v1734
  %v1811 = vmul.f32 %v1553, %v1736
  %v1812 = vmul.f32 %v1556, %v1738
  %v1813 = vmul.f32 %v1561, %v1740
  %v1814 = vmul.f32 %v1564, %v1742
  %v1815 = vmul.f32 %v1569, %v1744
  %v1816 = vmul.f32 %v1572, %v1746
  %v1817 = vmul.f32 %v1577, %v1748
  %v1818 = vmul.f32 %v1580, %v1750
  %v1819 = vmul.f32 %v1585, %v1752
  %v1820 = vmul.f32 %v1588, %v1754
  %v1821 = vmul.f32 %v1593, %v1756
  %v1822 = vmul.f32 %v1596, %v1758
  %v1823 = vadd.f32 %v1791, %v795
  %v1824 = vadd.f32 %v1792, %v796
  %v1825 = vadd.f32 %v1793, %v797
  %v1826 = vadd.f32 %v1794, %v798
  %v1827 = vadd.f32 %v1795, %v799
  %v1828 = vadd.f32 %v1796, %v800
  %v1829 = vadd.f32 %v1797, %v801
  %v1830 = vadd.f32 %v1798, %v802
  %v1831 = vadd.f32 %v1799, %v803
  %v1832 = vadd.f32 %v1800, %v804
  %v1833 = vadd.f32 %v1801, %v805
  %v1834 = vadd.f32 %v1802, %v806
  %v1835 = vadd.f32 %v1803, %v807
  %v1836 = vadd.f32 %v1804, %v808
  %v1837 = vadd.f32 %v1805, %v809
  %v1838 = vadd.f32 %v1806, %v810
  %v1839 = vadd.f32 %v1807, %v811
  %v1840 = vadd.f32 %v1808, %v812
  %v1841 = vadd.f32 %v1809, %v813
  %v1842 = vadd.f32 %v1810, %v814
  %v1843 = vadd.f32 %v1811, %v815
  %v1844 = vadd.f32 %v1812, %v816
  %v1845 = vadd.f32 %v1813, %v817
  %v1846 = vadd.f32 %v1814, %v818
  %v1847 = vadd.f32 %v1815, %v819
  %v1848 = vadd.f32 %v1816, %v820
  %v1849 = vadd.f32 %v1817, %v821
  %v1850 = vadd.f32 %v1818, %v822
  %v1851 = vadd.f32 %v1819, %v823
  %v1852 = vadd.f32 %v1820, %v824
  %v1853 = vadd.f32 %v1821, %v825
  %v1854 = vadd.f32 %v1822, %v826
  %v1855 = vpack.c.bf16 %v1824, %v1823
  %v1856 = vpack.c.bf16 %v1826, %v1825
  %v1857 = vpack.c.bf16 %v1828, %v1827
  %v1858 = vpack.c.bf16 %v1830, %v1829
  %v1859 = vpack.c.bf16 %v1832, %v1831
  %v1860 = vpack.c.bf16 %v1834, %v1833
  %v1861 = vpack.c.bf16 %v1836, %v1835
  %v1862 = vpack.c.bf16 %v1838, %v1837
  %v1863 = vpack.c.bf16 %v1840, %v1839
  %v1864 = vpack.c.bf16 %v1842, %v1841
  %v1865 = vpack.c.bf16 %v1844, %v1843
  %v1866 = vpack.c.bf16 %v1846, %v1845
  %v1867 = vpack.c.bf16 %v1848, %v1847
  %v1868 = vpack.c.bf16 %v1850, %v1849
  %v1869 = vpack.c.bf16 %v1852, %v1851
  %v1870 = vpack.c.bf16 %v1854, %v1853
  %v1872 = vlaneseq
  %v1873 = vshrl.u32 %v1872, 7
  %v1874 = vsub.s32 0, %v1873
  %v1875 = vrot.slane %v831, %v1874
  %v1881 = vunpack.c.l.b16 %v827
  %v1882 = vunpack.c.l.b16 %v828
  %v1883 = vunpack.c.l.b16 %v829
  %v1884 = vunpack.c.l.b16 %v830
  %v1885 = vpack.c.b16 %v1882, %v1881
  %v1886 = vpack.c.b16 %v1884, %v1883
  %v1890 = vsel %vm429, %v1855, 0
  %v1893 = vsel %vm429, %v1856, 0
  %v1896 = vsel %vm429, %v1857, 0
  %v1899 = vsel %vm429, %v1858, 0
  %v1902 = vsel %vm429, %v1859, 0
  %v1905 = vsel %vm429, %v1860, 0
  %v1908 = vsel %vm429, %v1861, 0
  %v1911 = vsel %vm429, %v1862, 0
  %v1914 = vsel %vm429, %v1863, 0
  %v1917 = vsel %vm429, %v1864, 0
  %v1920 = vsel %vm429, %v1865, 0
  %v1923 = vsel %vm429, %v1866, 0
  %v1926 = vsel %vm429, %v1867, 0
  %v1929 = vsel %vm429, %v1868, 0
  %v1932 = vsel %vm429, %v1869, 0
  %v1935 = vsel %vm429, %v1870, 0
  %1937 = vmatprep.subr.bf16.mxu0 0
  %1938 = vmatpush1.bf16.msra.mxu0 %v1885
  %1939 = vmatprep.subr.bf16.mxu0 0
  %1940 = vmatpush1.bf16.msra.mxu0 %v1886
  %1941 = vmatprep.subr.bf16.mxu0 0
  %1942 = vmatpush1.bf16.msra.mxu0 0
  %1943 = vmatprep.subr.bf16.mxu0 0
  %1944 = vmatpush1.bf16.msra.mxu0 0
  %1945 = vmatprep.subr.bf16.mxu0 0
  %1946 = vmatpush1.bf16.msra.mxu0 0
  %1947 = vmatprep.subr.bf16.mxu0 0
  %1948 = vmatpush1.bf16.msra.mxu0 0
  %1949 = vmatprep.subr.bf16.mxu0 0
  %1950 = vmatpush1.bf16.msra.mxu0 0
  %1951 = vmatprep.subr.bf16.mxu0 0
  %1952 = vmatpush1.bf16.msra.mxu0 0
  %1953 = vmatprep.subr.bf16.mxu0 0
  %1954 = vmatpush1.bf16.msra.mxu0 0
  %1955 = vmatprep.subr.bf16.mxu0 0
  %1956 = vmatpush1.bf16.msra.mxu0 0
  %1957 = vmatprep.subr.bf16.mxu0 0
  %1958 = vmatpush1.bf16.msra.mxu0 0
  %1959 = vmatprep.subr.bf16.mxu0 0
  %1960 = vmatpush1.bf16.msra.mxu0 0
  %1961 = vmatprep.subr.bf16.mxu0 0
  %1962 = vmatpush1.bf16.msra.mxu0 0
  %1963 = vmatprep.subr.bf16.mxu0 0
  %1964 = vmatpush1.bf16.msra.mxu0 0
  %1965 = vmatprep.subr.bf16.mxu0 0
  %1966 = vmatpush1.bf16.msra.mxu0 0
  %1967 = vmatprep.subr.bf16.mxu0 0
  %1968 = vmatpush1.bf16.msra.mxu0 0
  %1969 = vmatprep.mubr.bf16.mxu0 0
  %1970 = vmatmul.mubr.bf16.gmra.mrb[0].mxu0 %v1890
  %v1971 = vpop.f32.mrb[0].mxu0
  %v1972 = vadd.f32 %v1875, %v1971
  %v1973 = vpop.f32.mrb[0].mxu0
  %v1974 = vpop.f32.mrb[0].mxu0
  %v1975 = vadd.f32 %v1875, %v1974
  %v1976 = vpop.f32.mrb[0].mxu0
  %1977 = vmatprep.mubr.bf16.mxu0 0
  %1978 = vmatmul.mubr.bf16.gmra.mrb[0].mxu0 %v1893
  %v1979 = vpop.f32.mrb[0].mxu0
  %v1980 = vadd.f32 %v1875, %v1979
  %v1981 = vpop.f32.mrb[0].mxu0
  %v1982 = vpop.f32.mrb[0].mxu0
  %v1983 = vadd.f32 %v1875, %v1982
  %v1984 = vpop.f32.mrb[0].mxu0
  %1985 = vmatprep.mubr.bf16.mxu0 0
  %1986 = vmatmul.mubr.bf16.gmra.mrb[0].mxu0 %v1896
  %v1987 = vpop.f32.mrb[0].mxu0
  %v1988 = vadd.f32 %v1875, %v1987
  %v1989 = vpop.f32.mrb[0].mxu0
  %v1990 = vpop.f32.mrb[0].mxu0
  %v1991 = vadd.f32 %v1875, %v1990
  %v1992 = vpop.f32.mrb[0].mxu0
  %1993 = vmatprep.mubr.bf16.mxu0 0
  %1994 = vmatmul.mubr.bf16.gmra.mrb[0].mxu0 %v1899
  %v1995 = vpop.f32.mrb[0].mxu0
  %v1996 = vadd.f32 %v1875, %v1995
  %v1997 = vpop.f32.mrb[0].mxu0
  %v1998 = vpop.f32.mrb[0].mxu0
  %v1999 = vadd.f32 %v1875, %v1998
  %v2000 = vpop.f32.mrb[0].mxu0
  %2001 = vmatprep.mubr.bf16.mxu0 0
  %2002 = vmatmul.mubr.bf16.gmra.mrb[0].mxu0 %v1902
  %v2003 = vpop.f32.mrb[0].mxu0
  %v2004 = vadd.f32 %v1875, %v2003
  %v2005 = vpop.f32.mrb[0].mxu0
  %v2006 = vpop.f32.mrb[0].mxu0
  %v2007 = vadd.f32 %v1875, %v2006
  %v2008 = vpop.f32.mrb[0].mxu0
  %2009 = vmatprep.mubr.bf16.mxu0 0
  %2010 = vmatmul.mubr.bf16.gmra.mrb[0].mxu0 %v1905
  %v2011 = vpop.f32.mrb[0].mxu0
  %v2012 = vadd.f32 %v1875, %v2011
  %v2013 = vpop.f32.mrb[0].mxu0
  %v2014 = vpop.f32.mrb[0].mxu0
  %v2015 = vadd.f32 %v1875, %v2014
  %v2016 = vpop.f32.mrb[0].mxu0
  %2017 = vmatprep.mubr.bf16.mxu0 0
  %2018 = vmatmul.mubr.bf16.gmra.mrb[0].mxu0 %v1908
  %v2019 = vpop.f32.mrb[0].mxu0
  %v2020 = vadd.f32 %v1875, %v2019
  %v2021 = vpop.f32.mrb[0].mxu0
  %v2022 = vpop.f32.mrb[0].mxu0
  %v2023 = vadd.f32 %v1875, %v2022
  %v2024 = vpop.f32.mrb[0].mxu0
  %2025 = vmatprep.mubr.bf16.mxu0 0
  %2026 = vmatmul.mubr.bf16.gmra.mrb[0].mxu0 %v1911
  %v2027 = vpop.f32.mrb[0].mxu0
  %v2028 = vadd.f32 %v1875, %v2027
  %v2029 = vpop.f32.mrb[0].mxu0
  %v2030 = vpop.f32.mrb[0].mxu0
  %v2031 = vadd.f32 %v1875, %v2030
  %v2032 = vpop.f32.mrb[0].mxu0
  %2033 = vmatprep.mubr.bf16.mxu0 0
  %2034 = vmatmul.mubr.bf16.gmra.mrb[0].mxu0 %v1914
  %v2035 = vpop.f32.mrb[0].mxu0
  %v2036 = vadd.f32 %v1875, %v2035
  %v2037 = vpop.f32.mrb[0].mxu0
  %v2038 = vpop.f32.mrb[0].mxu0
  %v2039 = vadd.f32 %v1875, %v2038
  %v2040 = vpop.f32.mrb[0].mxu0
  %2041 = vmatprep.mubr.bf16.mxu0 0
  %2042 = vmatmul.mubr.bf16.gmra.mrb[0].mxu0 %v1917
  %v2043 = vpop.f32.mrb[0].mxu0
  %v2044 = vadd.f32 %v1875, %v2043
  %v2045 = vpop.f32.mrb[0].mxu0
  %v2046 = vpop.f32.mrb[0].mxu0
  %v2047 = vadd.f32 %v1875, %v2046
  %v2048 = vpop.f32.mrb[0].mxu0
  %2049 = vmatprep.mubr.bf16.mxu0 0
  %2050 = vmatmul.mubr.bf16.gmra.mrb[0].mxu0 %v1920
  %v2051 = vpop.f32.mrb[0].mxu0
  %v2052 = vadd.f32 %v1875, %v2051
  %v2053 = vpop.f32.mrb[0].mxu0
  %v2054 = vpop.f32.mrb[0].mxu0
  %v2055 = vadd.f32 %v1875, %v2054
  %v2056 = vpop.f32.mrb[0].mxu0
  %2057 = vmatprep.mubr.bf16.mxu0 0
  %2058 = vmatmul.mubr.bf16.gmra.mrb[0].mxu0 %v1923
  %v2059 = vpop.f32.mrb[0].mxu0
  %v2060 = vadd.f32 %v1875, %v2059
  %v2061 = vpop.f32.mrb[0].mxu0
  %v2062 = vpop.f32.mrb[0].mxu0
  %v2063 = vadd.f32 %v1875, %v2062
  %v2064 = vpop.f32.mrb[0].mxu0
  %2065 = vmatprep.mubr.bf16.mxu0 0
  %2066 = vmatmul.mubr.bf16.gmra.mrb[0].mxu0 %v1926
  %v2067 = vpop.f32.mrb[0].mxu0
  %v2068 = vadd.f32 %v1875, %v2067
  %v2069 = vpop.f32.mrb[0].mxu0
  %v2070 = vpop.f32.mrb[0].mxu0
  %v2071 = vadd.f32 %v1875, %v2070
  %v2072 = vpop.f32.mrb[0].mxu0
  %2073 = vmatprep.mubr.bf16.mxu0 0
  %2074 = vmatmul.mubr.bf16.gmra.mrb[0].mxu0 %v1929
  %v2075 = vpop.f32.mrb[0].mxu0
  %v2076 = vadd.f32 %v1875, %v2075
  %v2077 = vpop.f32.mrb[0].mxu0
  %v2078 = vpop.f32.mrb[0].mxu0
  %v2079 = vadd.f32 %v1875, %v2078
  %v2080 = vpop.f32.mrb[0].mxu0
  %2081 = vmatprep.mubr.bf16.mxu0 0
  %2082 = vmatmul.mubr.bf16.gmra.mrb[0].mxu0 %v1932
  %v2083 = vpop.f32.mrb[0].mxu0
  %v2084 = vadd.f32 %v1875, %v2083
  %v2085 = vpop.f32.mrb[0].mxu0
  %v2086 = vpop.f32.mrb[0].mxu0
  %v2087 = vadd.f32 %v1875, %v2086
  %v2088 = vpop.f32.mrb[0].mxu0
  %2089 = vmatprep.mubr.bf16.mxu0 0
  %2090 = vmatmul.mubr.bf16.gmra.mrb[0].mxu0 %v1935
  %v2091 = vpop.f32.mrb[0].mxu0
  %v2092 = vadd.f32 %v1875, %v2091
  %v2093 = vpop.f32.mrb[0].mxu0
  %v2094 = vpop.f32.mrb[0].mxu0
  %v2095 = vadd.f32 %v1875, %v2094
  %v2096 = vpop.f32.mrb[0].mxu0
  %2097 = vdwg.mxu0
  %vm2098 = vcmask 523264
  %v2099 = vsel %vm2098, %v1972, 0.0
  %v2100 = vsel %vm2098, %v1975, 0.0
  %v2101 = vadd.f32 %v2099, %v2100
  %v2102 = vsel %vm2098, %v1980, 0.0
  %v2103 = vadd.f32 %v2101, %v2102
  %v2104 = vsel %vm2098, %v1983, 0.0
  %v2105 = vadd.f32 %v2103, %v2104
  %v2106 = vsel %vm2098, %v1988, 0.0
  %v2107 = vadd.f32 %v2105, %v2106
  %v2108 = vsel %vm2098, %v1991, 0.0
  %v2109 = vadd.f32 %v2107, %v2108
  %v2110 = vsel %vm2098, %v1996, 0.0
  %v2111 = vadd.f32 %v2109, %v2110
  %v2112 = vsel %vm2098, %v1999, 0.0
  %v2113 = vadd.f32 %v2111, %v2112
  %v2114 = vsel %vm2098, %v2004, 0.0
  %v2115 = vadd.f32 %v2113, %v2114
  %v2116 = vsel %vm2098, %v2007, 0.0
  %v2117 = vadd.f32 %v2115, %v2116
  %v2118 = vsel %vm2098, %v2012, 0.0
  %v2119 = vadd.f32 %v2117, %v2118
  %v2120 = vsel %vm2098, %v2015, 0.0
  %v2121 = vadd.f32 %v2119, %v2120
  %v2122 = vsel %vm2098, %v2020, 0.0
  %v2123 = vadd.f32 %v2121, %v2122
  %v2124 = vsel %vm2098, %v2023, 0.0
  %v2125 = vadd.f32 %v2123, %v2124
  %v2126 = vsel %vm2098, %v2028, 0.0
  %v2127 = vadd.f32 %v2125, %v2126
  %v2128 = vsel %vm2098, %v2031, 0.0
  %v2129 = vadd.f32 %v2127, %v2128
  %v2130 = vsel %vm2098, %v2036, 0.0
  %v2131 = vadd.f32 %v2129, %v2130
  %v2132 = vsel %vm2098, %v2039, 0.0
  %v2133 = vadd.f32 %v2131, %v2132
  %v2134 = vsel %vm2098, %v2044, 0.0
  %v2135 = vadd.f32 %v2133, %v2134
  %v2136 = vsel %vm2098, %v2047, 0.0
  %v2137 = vadd.f32 %v2135, %v2136
  %v2138 = vsel %vm2098, %v2052, 0.0
  %v2139 = vadd.f32 %v2137, %v2138
  %v2140 = vsel %vm2098, %v2055, 0.0
  %v2141 = vadd.f32 %v2139, %v2140
  %v2142 = vsel %vm2098, %v2060, 0.0
  %v2143 = vadd.f32 %v2141, %v2142
  %v2144 = vsel %vm2098, %v2063, 0.0
  %v2145 = vadd.f32 %v2143, %v2144
  %v2146 = vsel %vm2098, %v2068, 0.0
  %v2147 = vadd.f32 %v2145, %v2146
  %v2148 = vsel %vm2098, %v2071, 0.0
  %v2149 = vadd.f32 %v2147, %v2148
  %v2150 = vsel %vm2098, %v2076, 0.0
  %v2151 = vadd.f32 %v2149, %v2150
  %v2152 = vsel %vm2098, %v2079, 0.0
  %v2153 = vadd.f32 %v2151, %v2152
  %v2154 = vsel %vm2098, %v2084, 0.0
  %v2155 = vadd.f32 %v2153, %v2154
  %v2156 = vsel %vm2098, %v2087, 0.0
  %v2157 = vadd.f32 %v2155, %v2156
  %v2158 = vsel %vm2098, %v2092, 0.0
  %v2159 = vadd.f32 %v2157, %v2158
  %v2160 = vsel %vm2098, %v2095, 0.0
  %v2161 = vadd.f32 %v2159, %v2160
  %v2162 = vrot.slane %v2161, 4
  %v2163 = vadd.f32 %v2161, %v2162
  %v2164 = vrot.slane %v2163, 2
  %v2165 = vadd.f32 %v2163, %v2164
  %v2166 = vrot.slane %v2165, 1
  %v2167 = vadd.f32 %v2165, %v2166
  %v2168 = vrcp.pop 256.0
  %v2169 = vmul.f32 %v2167, %v2168
  %v2170 = vsub.f32 %v1972, %v2169
  %v2171 = vsub.f32 %v1975, %v2169
  %v2172 = vsub.f32 %v1980, %v2169
  %v2173 = vsub.f32 %v1983, %v2169
  %v2174 = vsub.f32 %v1988, %v2169
  %v2175 = vsub.f32 %v1991, %v2169
  %v2176 = vsub.f32 %v1996, %v2169
  %v2177 = vsub.f32 %v1999, %v2169
  %v2178 = vsub.f32 %v2004, %v2169
  %v2179 = vsub.f32 %v2007, %v2169
  %v2180 = vsub.f32 %v2012, %v2169
  %v2181 = vsub.f32 %v2015, %v2169
  %v2182 = vsub.f32 %v2020, %v2169
  %v2183 = vsub.f32 %v2023, %v2169
  %v2184 = vsub.f32 %v2028, %v2169
  %v2185 = vsub.f32 %v2031, %v2169
  %v2186 = vsub.f32 %v2036, %v2169
  %v2187 = vsub.f32 %v2039, %v2169
  %v2188 = vsub.f32 %v2044, %v2169
  %v2189 = vsub.f32 %v2047, %v2169
  %v2190 = vsub.f32 %v2052, %v2169
  %v2191 = vsub.f32 %v2055, %v2169
  %v2192 = vsub.f32 %v2060, %v2169
  %v2193 = vsub.f32 %v2063, %v2169
  %v2194 = vsub.f32 %v2068, %v2169
  %v2195 = vsub.f32 %v2071, %v2169
  %v2196 = vsub.f32 %v2076, %v2169
  %v2197 = vsub.f32 %v2079, %v2169
  %v2198 = vsub.f32 %v2084, %v2169
  %v2199 = vsub.f32 %v2087, %v2169
  %v2200 = vsub.f32 %v2092, %v2169
  %v2201 = vsub.f32 %v2095, %v2169
  %v2202 = vmul.f32 %v2170, %v2170
  %v2203 = vmul.f32 %v2171, %v2171
  %v2204 = vmul.f32 %v2172, %v2172
  %v2205 = vmul.f32 %v2173, %v2173
  %v2206 = vmul.f32 %v2174, %v2174
  %v2207 = vmul.f32 %v2175, %v2175
  %v2208 = vmul.f32 %v2176, %v2176
  %v2209 = vmul.f32 %v2177, %v2177
  %v2210 = vmul.f32 %v2178, %v2178
  %v2211 = vmul.f32 %v2179, %v2179
  %v2212 = vmul.f32 %v2180, %v2180
  %v2213 = vmul.f32 %v2181, %v2181
  %v2214 = vmul.f32 %v2182, %v2182
  %v2215 = vmul.f32 %v2183, %v2183
  %v2216 = vmul.f32 %v2184, %v2184
  %v2217 = vmul.f32 %v2185, %v2185
  %v2218 = vmul.f32 %v2186, %v2186
  %v2219 = vmul.f32 %v2187, %v2187
  %v2220 = vmul.f32 %v2188, %v2188
  %v2221 = vmul.f32 %v2189, %v2189
  %v2222 = vmul.f32 %v2190, %v2190
  %v2223 = vmul.f32 %v2191, %v2191
  %v2224 = vmul.f32 %v2192, %v2192
  %v2225 = vmul.f32 %v2193, %v2193
  %v2226 = vmul.f32 %v2194, %v2194
  %v2227 = vmul.f32 %v2195, %v2195
  %v2228 = vmul.f32 %v2196, %v2196
  %v2229 = vmul.f32 %v2197, %v2197
  %v2230 = vmul.f32 %v2198, %v2198
  %v2231 = vmul.f32 %v2199, %v2199
  %v2232 = vmul.f32 %v2200, %v2200
  %v2233 = vmul.f32 %v2201, %v2201
  %v2234 = vsel %vm2098, %v2202, 0.0
  %v2235 = vsel %vm2098, %v2203, 0.0
  %v2236 = vadd.f32 %v2234, %v2235
  %v2237 = vsel %vm2098, %v2204, 0.0
  %v2238 = vadd.f32 %v2236, %v2237
  %v2239 = vsel %vm2098, %v2205, 0.0
  %v2240 = vadd.f32 %v2238, %v2239
  %v2241 = vsel %vm2098, %v2206, 0.0
  %v2242 = vadd.f32 %v2240, %v2241
  %v2243 = vsel %vm2098, %v2207, 0.0
  %v2244 = vadd.f32 %v2242, %v2243
  %v2245 = vsel %vm2098, %v2208, 0.0
  %v2246 = vadd.f32 %v2244, %v2245
  %v2247 = vsel %vm2098, %v2209, 0.0
  %v2248 = vadd.f32 %v2246, %v2247
  %v2249 = vsel %vm2098, %v2210, 0.0
  %v2250 = vadd.f32 %v2248, %v2249
  %v2251 = vsel %vm2098, %v2211, 0.0
  %v2252 = vadd.f32 %v2250, %v2251
  %v2253 = vsel %vm2098, %v2212, 0.0
  %v2254 = vadd.f32 %v2252, %v2253
  %v2255 = vsel %vm2098, %v2213, 0.0
  %v2256 = vadd.f32 %v2254, %v2255
  %v2257 = vsel %vm2098, %v2214, 0.0
  %v2258 = vadd.f32 %v2256, %v2257
  %v2259 = vsel %vm2098, %v2215, 0.0
  %v2260 = vadd.f32 %v2258, %v2259
  %v2261 = vsel %vm2098, %v2216, 0.0
  %v2262 = vadd.f32 %v2260, %v2261
  %v2263 = vsel %vm2098, %v2217, 0.0
  %v2264 = vadd.f32 %v2262, %v2263
  %v2265 = vsel %vm2098, %v2218, 0.0
  %v2266 = vadd.f32 %v2264, %v2265
  %v2267 = vsel %vm2098, %v2219, 0.0
  %v2268 = vadd.f32 %v2266, %v2267
  %v2269 = vsel %vm2098, %v2220, 0.0
  %v2270 = vadd.f32 %v2268, %v2269
  %v2271 = vsel %vm2098, %v2221, 0.0
  %v2272 = vadd.f32 %v2270, %v2271
  %v2273 = vsel %vm2098, %v2222, 0.0
  %v2274 = vadd.f32 %v2272, %v2273
  %v2275 = vsel %vm2098, %v2223, 0.0
  %v2276 = vadd.f32 %v2274, %v2275
  %v2277 = vsel %vm2098, %v2224, 0.0
  %v2278 = vadd.f32 %v2276, %v2277
  %v2279 = vsel %vm2098, %v2225, 0.0
  %v2280 = vadd.f32 %v2278, %v2279
  %v2281 = vsel %vm2098, %v2226, 0.0
  %v2282 = vadd.f32 %v2280, %v2281
  %v2283 = vsel %vm2098, %v2227, 0.0
  %v2284 = vadd.f32 %v2282, %v2283
  %v2285 = vsel %vm2098, %v2228, 0.0
  %v2286 = vadd.f32 %v2284, %v2285
  %v2287 = vsel %vm2098, %v2229, 0.0
  %v2288 = vadd.f32 %v2286, %v2287
  %v2289 = vsel %vm2098, %v2230, 0.0
  %v2290 = vadd.f32 %v2288, %v2289
  %v2291 = vsel %vm2098, %v2231, 0.0
  %v2292 = vadd.f32 %v2290, %v2291
  %v2293 = vsel %vm2098, %v2232, 0.0
  %v2294 = vadd.f32 %v2292, %v2293
  %v2295 = vsel %vm2098, %v2233, 0.0
  %v2296 = vadd.f32 %v2294, %v2295
  %v2297 = vrot.slane %v2296, 4
  %v2298 = vadd.f32 %v2296, %v2297
  %v2299 = vrot.slane %v2298, 2
  %v2300 = vadd.f32 %v2298, %v2299
  %v2301 = vrot.slane %v2300, 1
  %v2302 = vadd.f32 %v2300, %v2301
  %v2303 = vmul.f32 %v2302, %v2168
  %v2304 = vadd.f32 %v2303, 1e-05
  %v2305 = vrsqrt.pop %v2304
  %v2306 = vmul.f32 %v2170, %v2305
  %v2307 = vmul.f32 %v2171, %v2305
  %v2308 = vmul.f32 %v2172, %v2305
  %v2309 = vmul.f32 %v2173, %v2305
  %v2310 = vmul.f32 %v2174, %v2305
  %v2311 = vmul.f32 %v2175, %v2305
  %v2312 = vmul.f32 %v2176, %v2305
  %v2313 = vmul.f32 %v2177, %v2305
  %v2314 = vmul.f32 %v2178, %v2305
  %v2315 = vmul.f32 %v2179, %v2305
  %v2316 = vmul.f32 %v2180, %v2305
  %v2317 = vmul.f32 %v2181, %v2305
  %v2318 = vmul.f32 %v2182, %v2305
  %v2319 = vmul.f32 %v2183, %v2305
  %v2320 = vmul.f32 %v2184, %v2305
  %v2321 = vmul.f32 %v2185, %v2305
  %v2322 = vmul.f32 %v2186, %v2305
  %v2323 = vmul.f32 %v2187, %v2305
  %v2324 = vmul.f32 %v2188, %v2305
  %v2325 = vmul.f32 %v2189, %v2305
  %v2326 = vmul.f32 %v2190, %v2305
  %v2327 = vmul.f32 %v2191, %v2305
  %v2328 = vmul.f32 %v2192, %v2305
  %v2329 = vmul.f32 %v2193, %v2305
  %v2330 = vmul.f32 %v2194, %v2305
  %v2331 = vmul.f32 %v2195, %v2305
  %v2332 = vmul.f32 %v2196, %v2305
  %v2333 = vmul.f32 %v2197, %v2305
  %v2334 = vmul.f32 %v2198, %v2305
  %v2335 = vmul.f32 %v2199, %v2305
  %v2336 = vmul.f32 %v2200, %v2305
  %v2337 = vmul.f32 %v2201, %v2305
  %v2338 = vmax.f32 %v2306, 0.0
  %v2339 = vmax.f32 %v2307, 0.0
  %v2340 = vmax.f32 %v2308, 0.0
  %v2341 = vmax.f32 %v2309, 0.0
  %v2342 = vmax.f32 %v2310, 0.0
  %v2343 = vmax.f32 %v2311, 0.0
  %v2344 = vmax.f32 %v2312, 0.0
  %v2345 = vmax.f32 %v2313, 0.0
  %v2346 = vmax.f32 %v2314, 0.0
  %v2347 = vmax.f32 %v2315, 0.0
  %v2348 = vmax.f32 %v2316, 0.0
  %v2349 = vmax.f32 %v2317, 0.0
  %v2350 = vmax.f32 %v2318, 0.0
  %v2351 = vmax.f32 %v2319, 0.0
  %v2352 = vmax.f32 %v2320, 0.0
  %v2353 = vmax.f32 %v2321, 0.0
  %v2354 = vmax.f32 %v2322, 0.0
  %v2355 = vmax.f32 %v2323, 0.0
  %v2356 = vmax.f32 %v2324, 0.0
  %v2357 = vmax.f32 %v2325, 0.0
  %v2358 = vmax.f32 %v2326, 0.0
  %v2359 = vmax.f32 %v2327, 0.0
  %v2360 = vmax.f32 %v2328, 0.0
  %v2361 = vmax.f32 %v2329, 0.0
  %v2362 = vmax.f32 %v2330, 0.0
  %v2363 = vmax.f32 %v2331, 0.0
  %v2364 = vmax.f32 %v2332, 0.0
  %v2365 = vmax.f32 %v2333, 0.0
  %v2366 = vmax.f32 %v2334, 0.0
  %v2367 = vmax.f32 %v2335, 0.0
  %v2368 = vmax.f32 %v2336, 0.0
  %v2369 = vmax.f32 %v2337, 0.0
  %v2370 = vpack.c.bf16 %v2339, %v2338
  %v2371 = vpack.c.bf16 %v2341, %v2340
  %v2372 = vpack.c.bf16 %v2343, %v2342
  %v2373 = vpack.c.bf16 %v2345, %v2344
  %v2374 = vpack.c.bf16 %v2347, %v2346
  %v2375 = vpack.c.bf16 %v2349, %v2348
  %v2376 = vpack.c.bf16 %v2351, %v2350
  %v2377 = vpack.c.bf16 %v2353, %v2352
  %v2378 = vpack.c.bf16 %v2355, %v2354
  %v2379 = vpack.c.bf16 %v2357, %v2356
  %v2380 = vpack.c.bf16 %v2359, %v2358
  %v2381 = vpack.c.bf16 %v2361, %v2360
  %v2382 = vpack.c.bf16 %v2363, %v2362
  %v2383 = vpack.c.bf16 %v2365, %v2364
  %v2384 = vpack.c.bf16 %v2367, %v2366
  %v2385 = vpack.c.bf16 %v2369, %v2368
  %v2387 = vlaneseq
  %v2388 = vshrl.u32 %v2387, 7
  %v2389 = vsub.s32 0, %v2388
  %v2390 = vrot.slane %v840, %v2389
  %v2400 = vunpack.c.l.b16 %v832
  %v2401 = vunpack.c.l.b16 %v833
  %v2402 = vunpack.c.l.b16 %v834
  %v2403 = vunpack.c.l.b16 %v835
  %v2404 = vunpack.c.l.b16 %v836
  %v2405 = vunpack.c.l.b16 %v837
  %v2406 = vunpack.c.l.b16 %v838
  %v2407 = vunpack.c.l.b16 %v839
  %v2408 = vpack.c.b16 %v2401, %v2400
  %v2409 = vpack.c.b16 %v2403, %v2402
  %v2410 = vpack.c.b16 %v2405, %v2404
  %v2411 = vpack.c.b16 %v2407, %v2406
  %v2417 = vsel %vm2098, %v2370, 0
  %v2420 = vsel %vm2098, %v2371, 0
  %v2423 = vsel %vm2098, %v2372, 0
  %v2426 = vsel %vm2098, %v2373, 0
  %v2429 = vsel %vm2098, %v2374, 0
  %v2432 = vsel %vm2098, %v2375, 0
  %v2435 = vsel %vm2098, %v2376, 0
  %v2438 = vsel %vm2098, %v2377, 0
  %v2441 = vsel %vm2098, %v2378, 0
  %v2444 = vsel %vm2098, %v2379, 0
  %v2447 = vsel %vm2098, %v2380, 0
  %v2450 = vsel %vm2098, %v2381, 0
  %v2453 = vsel %vm2098, %v2382, 0
  %v2456 = vsel %vm2098, %v2383, 0
  %v2459 = vsel %vm2098, %v2384, 0
  %v2462 = vsel %vm2098, %v2385, 0
  %2464 = vmatprep.subr.bf16.mxu0 0
  %2465 = vmatpush1.bf16.msra.mxu0 %v2408
  %2466 = vmatprep.subr.bf16.mxu0 0
  %2467 = vmatpush1.bf16.msra.mxu0 %v2409
  %2468 = vmatprep.subr.bf16.mxu0 0
  %2469 = vmatpush1.bf16.msra.mxu0 %v2410
  %2470 = vmatprep.subr.bf16.mxu0 0
  %2471 = vmatpush1.bf16.msra.mxu0 %v2411
  %2472 = vmatprep.subr.bf16.mxu0 0
  %2473 = vmatpush1.bf16.msra.mxu0 0
  %2474 = vmatprep.subr.bf16.mxu0 0
  %2475 = vmatpush1.bf16.msra.mxu0 0
  %2476 = vmatprep.subr.bf16.mxu0 0
  %2477 = vmatpush1.bf16.msra.mxu0 0
  %2478 = vmatprep.subr.bf16.mxu0 0
  %2479 = vmatpush1.bf16.msra.mxu0 0
  %2480 = vmatprep.subr.bf16.mxu0 0
  %2481 = vmatpush1.bf16.msra.mxu0 0
  %2482 = vmatprep.subr.bf16.mxu0 0
  %2483 = vmatpush1.bf16.msra.mxu0 0
  %2484 = vmatprep.subr.bf16.mxu0 0
  %2485 = vmatpush1.bf16.msra.mxu0 0
  %2486 = vmatprep.subr.bf16.mxu0 0
  %2487 = vmatpush1.bf16.msra.mxu0 0
  %2488 = vmatprep.subr.bf16.mxu0 0
  %2489 = vmatpush1.bf16.msra.mxu0 0
  %2490 = vmatprep.subr.bf16.mxu0 0
  %2491 = vmatpush1.bf16.msra.mxu0 0
  %2492 = vmatprep.subr.bf16.mxu0 0
  %2493 = vmatpush1.bf16.msra.mxu0 0
  %2494 = vmatprep.subr.bf16.mxu0 0
  %2495 = vmatpush1.bf16.msra.mxu0 0
  %2496 = vmatprep.mubr.bf16.mxu0 0
  %2497 = vmatmul.mubr.bf16.gmra.mrb[0].mxu0 %v2417
  %v2498 = vpop.f32.mrb[0].mxu0
  %v2499 = vadd.f32 %v2390, %v2498
  %v2500 = vpop.f32.mrb[0].mxu0
  %v2501 = vpop.f32.mrb[0].mxu0
  %v2502 = vadd.f32 %v2390, %v2501
  %v2503 = vpop.f32.mrb[0].mxu0
  %2504 = vmatprep.mubr.bf16.mxu0 0
  %2505 = vmatmul.mubr.bf16.gmra.mrb[0].mxu0 %v2420
  %v2506 = vpop.f32.mrb[0].mxu0
  %v2507 = vadd.f32 %v2390, %v2506
  %v2508 = vpop.f32.mrb[0].mxu0
  %v2509 = vpop.f32.mrb[0].mxu0
  %v2510 = vadd.f32 %v2390, %v2509
  %v2511 = vpop.f32.mrb[0].mxu0
  %2512 = vmatprep.mubr.bf16.mxu0 0
  %2513 = vmatmul.mubr.bf16.gmra.mrb[0].mxu0 %v2423
  %v2514 = vpop.f32.mrb[0].mxu0
  %v2515 = vadd.f32 %v2390, %v2514
  %v2516 = vpop.f32.mrb[0].mxu0
  %v2517 = vpop.f32.mrb[0].mxu0
  %v2518 = vadd.f32 %v2390, %v2517
  %v2519 = vpop.f32.mrb[0].mxu0
  %2520 = vmatprep.mubr.bf16.mxu0 0
  %2521 = vmatmul.mubr.bf16.gmra.mrb[0].mxu0 %v2426
  %v2522 = vpop.f32.mrb[0].mxu0
  %v2523 = vadd.f32 %v2390, %v2522
  %v2524 = vpop.f32.mrb[0].mxu0
  %v2525 = vpop.f32.mrb[0].mxu0
  %v2526 = vadd.f32 %v2390, %v2525
  %v2527 = vpop.f32.mrb[0].mxu0
  %2528 = vmatprep.mubr.bf16.mxu0 0
  %2529 = vmatmul.mubr.bf16.gmra.mrb[0].mxu0 %v2429
  %v2530 = vpop.f32.mrb[0].mxu0
  %v2531 = vadd.f32 %v2390, %v2530
  %v2532 = vpop.f32.mrb[0].mxu0
  %v2533 = vpop.f32.mrb[0].mxu0
  %v2534 = vadd.f32 %v2390, %v2533
  %v2535 = vpop.f32.mrb[0].mxu0
  %2536 = vmatprep.mubr.bf16.mxu0 0
  %2537 = vmatmul.mubr.bf16.gmra.mrb[0].mxu0 %v2432
  %v2538 = vpop.f32.mrb[0].mxu0
  %v2539 = vadd.f32 %v2390, %v2538
  %v2540 = vpop.f32.mrb[0].mxu0
  %v2541 = vpop.f32.mrb[0].mxu0
  %v2542 = vadd.f32 %v2390, %v2541
  %v2543 = vpop.f32.mrb[0].mxu0
  %2544 = vmatprep.mubr.bf16.mxu0 0
  %2545 = vmatmul.mubr.bf16.gmra.mrb[0].mxu0 %v2435
  %v2546 = vpop.f32.mrb[0].mxu0
  %v2547 = vadd.f32 %v2390, %v2546
  %v2548 = vpop.f32.mrb[0].mxu0
  %v2549 = vpop.f32.mrb[0].mxu0
  %v2550 = vadd.f32 %v2390, %v2549
  %v2551 = vpop.f32.mrb[0].mxu0
  %2552 = vmatprep.mubr.bf16.mxu0 0
  %2553 = vmatmul.mubr.bf16.gmra.mrb[0].mxu0 %v2438
  %v2554 = vpop.f32.mrb[0].mxu0
  %v2555 = vadd.f32 %v2390, %v2554
  %v2556 = vpop.f32.mrb[0].mxu0
  %v2557 = vpop.f32.mrb[0].mxu0
  %v2558 = vadd.f32 %v2390, %v2557
  %v2559 = vpop.f32.mrb[0].mxu0
  %2560 = vmatprep.mubr.bf16.mxu0 0
  %2561 = vmatmul.mubr.bf16.gmra.mrb[0].mxu0 %v2441
  %v2562 = vpop.f32.mrb[0].mxu0
  %v2563 = vadd.f32 %v2390, %v2562
  %v2564 = vpop.f32.mrb[0].mxu0
  %v2565 = vpop.f32.mrb[0].mxu0
  %v2566 = vadd.f32 %v2390, %v2565
  %v2567 = vpop.f32.mrb[0].mxu0
  %2568 = vmatprep.mubr.bf16.mxu0 0
  %2569 = vmatmul.mubr.bf16.gmra.mrb[0].mxu0 %v2444
  %v2570 = vpop.f32.mrb[0].mxu0
  %v2571 = vadd.f32 %v2390, %v2570
  %v2572 = vpop.f32.mrb[0].mxu0
  %v2573 = vpop.f32.mrb[0].mxu0
  %v2574 = vadd.f32 %v2390, %v2573
  %v2575 = vpop.f32.mrb[0].mxu0
  %2576 = vmatprep.mubr.bf16.mxu0 0
  %2577 = vmatmul.mubr.bf16.gmra.mrb[0].mxu0 %v2447
  %v2578 = vpop.f32.mrb[0].mxu0
  %v2579 = vadd.f32 %v2390, %v2578
  %v2580 = vpop.f32.mrb[0].mxu0
  %v2581 = vpop.f32.mrb[0].mxu0
  %v2582 = vadd.f32 %v2390, %v2581
  %v2583 = vpop.f32.mrb[0].mxu0
  %2584 = vmatprep.mubr.bf16.mxu0 0
  %2585 = vmatmul.mubr.bf16.gmra.mrb[0].mxu0 %v2450
  %v2586 = vpop.f32.mrb[0].mxu0
  %v2587 = vadd.f32 %v2390, %v2586
  %v2588 = vpop.f32.mrb[0].mxu0
  %v2589 = vpop.f32.mrb[0].mxu0
  %v2590 = vadd.f32 %v2390, %v2589
  %v2591 = vpop.f32.mrb[0].mxu0
  %2592 = vmatprep.mubr.bf16.mxu0 0
  %2593 = vmatmul.mubr.bf16.gmra.mrb[0].mxu0 %v2453
  %v2594 = vpop.f32.mrb[0].mxu0
  %v2595 = vadd.f32 %v2390, %v2594
  %v2596 = vpop.f32.mrb[0].mxu0
  %v2597 = vpop.f32.mrb[0].mxu0
  %v2598 = vadd.f32 %v2390, %v2597
  %v2599 = vpop.f32.mrb[0].mxu0
  %2600 = vmatprep.mubr.bf16.mxu0 0
  %2601 = vmatmul.mubr.bf16.gmra.mrb[0].mxu0 %v2456
  %v2602 = vpop.f32.mrb[0].mxu0
  %v2603 = vadd.f32 %v2390, %v2602
  %v2604 = vpop.f32.mrb[0].mxu0
  %v2605 = vpop.f32.mrb[0].mxu0
  %v2606 = vadd.f32 %v2390, %v2605
  %v2607 = vpop.f32.mrb[0].mxu0
  %2608 = vmatprep.mubr.bf16.mxu0 0
  %2609 = vmatmul.mubr.bf16.gmra.mrb[0].mxu0 %v2459
  %v2610 = vpop.f32.mrb[0].mxu0
  %v2611 = vadd.f32 %v2390, %v2610
  %v2612 = vpop.f32.mrb[0].mxu0
  %v2613 = vpop.f32.mrb[0].mxu0
  %v2614 = vadd.f32 %v2390, %v2613
  %v2615 = vpop.f32.mrb[0].mxu0
  %2616 = vmatprep.mubr.bf16.mxu0 0
  %2617 = vmatmul.mubr.bf16.gmra.mrb[0].mxu0 %v2462
  %v2618 = vpop.f32.mrb[0].mxu0
  %v2619 = vadd.f32 %v2390, %v2618
  %v2620 = vpop.f32.mrb[0].mxu0
  %v2621 = vpop.f32.mrb[0].mxu0
  %v2622 = vadd.f32 %v2390, %v2621
  %v2623 = vpop.f32.mrb[0].mxu0
  %2624 = vdwg.mxu0
  %v2625 = vadd.f32 %v303, %v2499
  %v2626 = vadd.f32 %v306, %v2502
  %v2627 = vadd.f32 %v311, %v2507
  %v2628 = vadd.f32 %v314, %v2510
  %v2629 = vadd.f32 %v319, %v2515
  %v2630 = vadd.f32 %v322, %v2518
  %v2631 = vadd.f32 %v327, %v2523
  %v2632 = vadd.f32 %v330, %v2526
  %v2633 = vadd.f32 %v335, %v2531
  %v2634 = vadd.f32 %v338, %v2534
  %v2635 = vadd.f32 %v343, %v2539
  %v2636 = vadd.f32 %v346, %v2542
  %v2637 = vadd.f32 %v351, %v2547
  %v2638 = vadd.f32 %v354, %v2550
  %v2639 = vadd.f32 %v359, %v2555
  %v2640 = vadd.f32 %v362, %v2558
  %v2641 = vadd.f32 %v367, %v2563
  %v2642 = vadd.f32 %v370, %v2566
  %v2643 = vadd.f32 %v375, %v2571
  %v2644 = vadd.f32 %v378, %v2574
  %v2645 = vadd.f32 %v383, %v2579
  %v2646 = vadd.f32 %v386, %v2582
  %v2647 = vadd.f32 %v391, %v2587
  %v2648 = vadd.f32 %v394, %v2590
  %v2649 = vadd.f32 %v399, %v2595
  %v2650 = vadd.f32 %v402, %v2598
  %v2651 = vadd.f32 %v407, %v2603
  %v2652 = vadd.f32 %v410, %v2606
  %v2653 = vadd.f32 %v415, %v2611
  %v2654 = vadd.f32 %v418, %v2614
  %v2655 = vadd.f32 %v423, %v2619
  %v2656 = vadd.f32 %v426, %v2622
  %v2657 = vsel %vm429, %v2625, 0.0
  %v2658 = vsel %vm429, %v2626, 0.0
  %v2659 = vadd.f32 %v2657, %v2658
  %v2660 = vsel %vm429, %v2627, 0.0
  %v2661 = vadd.f32 %v2659, %v2660
  %v2662 = vsel %vm429, %v2628, 0.0
  %v2663 = vadd.f32 %v2661, %v2662
  %v2664 = vsel %vm429, %v2629, 0.0
  %v2665 = vadd.f32 %v2663, %v2664
  %v2666 = vsel %vm429, %v2630, 0.0
  %v2667 = vadd.f32 %v2665, %v2666
  %v2668 = vsel %vm429, %v2631, 0.0
  %v2669 = vadd.f32 %v2667, %v2668
  %v2670 = vsel %vm429, %v2632, 0.0
  %v2671 = vadd.f32 %v2669, %v2670
  %v2672 = vsel %vm429, %v2633, 0.0
  %v2673 = vadd.f32 %v2671, %v2672
  %v2674 = vsel %vm429, %v2634, 0.0
  %v2675 = vadd.f32 %v2673, %v2674
  %v2676 = vsel %vm429, %v2635, 0.0
  %v2677 = vadd.f32 %v2675, %v2676
  %v2678 = vsel %vm429, %v2636, 0.0
  %v2679 = vadd.f32 %v2677, %v2678
  %v2680 = vsel %vm429, %v2637, 0.0
  %v2681 = vadd.f32 %v2679, %v2680
  %v2682 = vsel %vm429, %v2638, 0.0
  %v2683 = vadd.f32 %v2681, %v2682
  %v2684 = vsel %vm429, %v2639, 0.0
  %v2685 = vadd.f32 %v2683, %v2684
  %v2686 = vsel %vm429, %v2640, 0.0
  %v2687 = vadd.f32 %v2685, %v2686
  %v2688 = vsel %vm429, %v2641, 0.0
  %v2689 = vadd.f32 %v2687, %v2688
  %v2690 = vsel %vm429, %v2642, 0.0
  %v2691 = vadd.f32 %v2689, %v2690
  %v2692 = vsel %vm429, %v2643, 0.0
  %v2693 = vadd.f32 %v2691, %v2692
  %v2694 = vsel %vm429, %v2644, 0.0
  %v2695 = vadd.f32 %v2693, %v2694
  %v2696 = vsel %vm429, %v2645, 0.0
  %v2697 = vadd.f32 %v2695, %v2696
  %v2698 = vsel %vm429, %v2646, 0.0
  %v2699 = vadd.f32 %v2697, %v2698
  %v2700 = vsel %vm429, %v2647, 0.0
  %v2701 = vadd.f32 %v2699, %v2700
  %v2702 = vsel %vm429, %v2648, 0.0
  %v2703 = vadd.f32 %v2701, %v2702
  %v2704 = vsel %vm429, %v2649, 0.0
  %v2705 = vadd.f32 %v2703, %v2704
  %v2706 = vsel %vm429, %v2650, 0.0
  %v2707 = vadd.f32 %v2705, %v2706
  %v2708 = vsel %vm429, %v2651, 0.0
  %v2709 = vadd.f32 %v2707, %v2708
  %v2710 = vsel %vm429, %v2652, 0.0
  %v2711 = vadd.f32 %v2709, %v2710
  %v2712 = vsel %vm429, %v2653, 0.0
  %v2713 = vadd.f32 %v2711, %v2712
  %v2714 = vsel %vm429, %v2654, 0.0
  %v2715 = vadd.f32 %v2713, %v2714
  %v2716 = vsel %vm429, %v2655, 0.0
  %v2717 = vadd.f32 %v2715, %v2716
  %v2718 = vsel %vm429, %v2656, 0.0
  %v2719 = vadd.f32 %v2717, %v2718
  %2720 = vadd.xlane.f32.xlu0 %v2719
  %v2721 = vpop.xlane.xlu0 %2720
  %v2722 = vrot.slane %v2721, 4
  %v2723 = vadd.f32 %v2721, %v2722
  %v2724 = vrot.slane %v2723, 2
  %v2725 = vadd.f32 %v2723, %v2724
  %v2726 = vrot.slane %v2725, 1
  %v2727 = vadd.f32 %v2725, %v2726
  %s2728 = vtos %v2727
  %v2729 = vstv %s2728
  %v2730 = vmul.f32 %v2729, %v503
  %v2731 = vsub.f32 %v2625, %v2730
  %v2732 = vsub.f32 %v2626, %v2730
  %v2733 = vsub.f32 %v2627, %v2730
  %v2734 = vsub.f32 %v2628, %v2730
  %v2735 = vsub.f32 %v2629, %v2730
  %v2736 = vsub.f32 %v2630, %v2730
  %v2737 = vsub.f32 %v2631, %v2730
  %v2738 = vsub.f32 %v2632, %v2730
  %v2739 = vsub.f32 %v2633, %v2730
  %v2740 = vsub.f32 %v2634, %v2730
  %v2741 = vsub.f32 %v2635, %v2730
  %v2742 = vsub.f32 %v2636, %v2730
  %v2743 = vsub.f32 %v2637, %v2730
  %v2744 = vsub.f32 %v2638, %v2730
  %v2745 = vsub.f32 %v2639, %v2730
  %v2746 = vsub.f32 %v2640, %v2730
  %v2747 = vsub.f32 %v2641, %v2730
  %v2748 = vsub.f32 %v2642, %v2730
  %v2749 = vsub.f32 %v2643, %v2730
  %v2750 = vsub.f32 %v2644, %v2730
  %v2751 = vsub.f32 %v2645, %v2730
  %v2752 = vsub.f32 %v2646, %v2730
  %v2753 = vsub.f32 %v2647, %v2730
  %v2754 = vsub.f32 %v2648, %v2730
  %v2755 = vsub.f32 %v2649, %v2730
  %v2756 = vsub.f32 %v2650, %v2730
  %v2757 = vsub.f32 %v2651, %v2730
  %v2758 = vsub.f32 %v2652, %v2730
  %v2759 = vsub.f32 %v2653, %v2730
  %v2760 = vsub.f32 %v2654, %v2730
  %v2761 = vsub.f32 %v2655, %v2730
  %v2762 = vsub.f32 %v2656, %v2730
  %v2763 = vmul.f32 %v2731, %v2731
  %v2764 = vmul.f32 %v2732, %v2732
  %v2765 = vmul.f32 %v2733, %v2733
  %v2766 = vmul.f32 %v2734, %v2734
  %v2767 = vmul.f32 %v2735, %v2735
  %v2768 = vmul.f32 %v2736, %v2736
  %v2769 = vmul.f32 %v2737, %v2737
  %v2770 = vmul.f32 %v2738, %v2738
  %v2771 = vmul.f32 %v2739, %v2739
  %v2772 = vmul.f32 %v2740, %v2740
  %v2773 = vmul.f32 %v2741, %v2741
  %v2774 = vmul.f32 %v2742, %v2742
  %v2775 = vmul.f32 %v2743, %v2743
  %v2776 = vmul.f32 %v2744, %v2744
  %v2777 = vmul.f32 %v2745, %v2745
  %v2778 = vmul.f32 %v2746, %v2746
  %v2779 = vmul.f32 %v2747, %v2747
  %v2780 = vmul.f32 %v2748, %v2748
  %v2781 = vmul.f32 %v2749, %v2749
  %v2782 = vmul.f32 %v2750, %v2750
  %v2783 = vmul.f32 %v2751, %v2751
  %v2784 = vmul.f32 %v2752, %v2752
  %v2785 = vmul.f32 %v2753, %v2753
  %v2786 = vmul.f32 %v2754, %v2754
  %v2787 = vmul.f32 %v2755, %v2755
  %v2788 = vmul.f32 %v2756, %v2756
  %v2789 = vmul.f32 %v2757, %v2757
  %v2790 = vmul.f32 %v2758, %v2758
  %v2791 = vmul.f32 %v2759, %v2759
  %v2792 = vmul.f32 %v2760, %v2760
  %v2793 = vmul.f32 %v2761, %v2761
  %v2794 = vmul.f32 %v2762, %v2762
  %v2795 = vsel %vm429, %v2763, 0.0
  %v2796 = vsel %vm429, %v2764, 0.0
  %v2797 = vadd.f32 %v2795, %v2796
  %v2798 = vsel %vm429, %v2765, 0.0
  %v2799 = vadd.f32 %v2797, %v2798
  %v2800 = vsel %vm429, %v2766, 0.0
  %v2801 = vadd.f32 %v2799, %v2800
  %v2802 = vsel %vm429, %v2767, 0.0
  %v2803 = vadd.f32 %v2801, %v2802
  %v2804 = vsel %vm429, %v2768, 0.0
  %v2805 = vadd.f32 %v2803, %v2804
  %v2806 = vsel %vm429, %v2769, 0.0
  %v2807 = vadd.f32 %v2805, %v2806
  %v2808 = vsel %vm429, %v2770, 0.0
  %v2809 = vadd.f32 %v2807, %v2808
  %v2810 = vsel %vm429, %v2771, 0.0
  %v2811 = vadd.f32 %v2809, %v2810
  %v2812 = vsel %vm429, %v2772, 0.0
  %v2813 = vadd.f32 %v2811, %v2812
  %v2814 = vsel %vm429, %v2773, 0.0
  %v2815 = vadd.f32 %v2813, %v2814
  %v2816 = vsel %vm429, %v2774, 0.0
  %v2817 = vadd.f32 %v2815, %v2816
  %v2818 = vsel %vm429, %v2775, 0.0
  %v2819 = vadd.f32 %v2817, %v2818
  %v2820 = vsel %vm429, %v2776, 0.0
  %v2821 = vadd.f32 %v2819, %v2820
  %v2822 = vsel %vm429, %v2777, 0.0
  %v2823 = vadd.f32 %v2821, %v2822
  %v2824 = vsel %vm429, %v2778, 0.0
  %v2825 = vadd.f32 %v2823, %v2824
  %v2826 = vsel %vm429, %v2779, 0.0
  %v2827 = vadd.f32 %v2825, %v2826
  %v2828 = vsel %vm429, %v2780, 0.0
  %v2829 = vadd.f32 %v2827, %v2828
  %v2830 = vsel %vm429, %v2781, 0.0
  %v2831 = vadd.f32 %v2829, %v2830
  %v2832 = vsel %vm429, %v2782, 0.0
  %v2833 = vadd.f32 %v2831, %v2832
  %v2834 = vsel %vm429, %v2783, 0.0
  %v2835 = vadd.f32 %v2833, %v2834
  %v2836 = vsel %vm429, %v2784, 0.0
  %v2837 = vadd.f32 %v2835, %v2836
  %v2838 = vsel %vm429, %v2785, 0.0
  %v2839 = vadd.f32 %v2837, %v2838
  %v2840 = vsel %vm429, %v2786, 0.0
  %v2841 = vadd.f32 %v2839, %v2840
  %v2842 = vsel %vm429, %v2787, 0.0
  %v2843 = vadd.f32 %v2841, %v2842
  %v2844 = vsel %vm429, %v2788, 0.0
  %v2845 = vadd.f32 %v2843, %v2844
  %v2846 = vsel %vm429, %v2789, 0.0
  %v2847 = vadd.f32 %v2845, %v2846
  %v2848 = vsel %vm429, %v2790, 0.0
  %v2849 = vadd.f32 %v2847, %v2848
  %v2850 = vsel %vm429, %v2791, 0.0
  %v2851 = vadd.f32 %v2849, %v2850
  %v2852 = vsel %vm429, %v2792, 0.0
  %v2853 = vadd.f32 %v2851, %v2852
  %v2854 = vsel %vm429, %v2793, 0.0
  %v2855 = vadd.f32 %v2853, %v2854
  %v2856 = vsel %vm429, %v2794, 0.0
  %v2857 = vadd.f32 %v2855, %v2856
  %2858 = vadd.xlane.f32.xlu0 %v2857
  %v2859 = vpop.xlane.xlu0 %2858
  %v2860 = vrot.slane %v2859, 4
  %v2861 = vadd.f32 %v2859, %v2860
  %v2862 = vrot.slane %v2861, 2
  %v2863 = vadd.f32 %v2861, %v2862
  %v2864 = vrot.slane %v2863, 1
  %v2865 = vadd.f32 %v2863, %v2864
  %s2866 = vtos %v2865
  %v2867 = vstv %s2866
  %v2868 = vmul.f32 %v2867, %v503
  %v2869 = vrsqrt.pop %v2868
  %v2870 = vmul.f32 %v2868, %v2869
  %vm2871 = vcmp.eq.f32.partialorder %v2868, inf
  %v2872 = vsel %vm2871, %v2868, %v2870
  %vm2873 = vcmp.eq.f32.partialorder %v2868, 0.0
  %v2874 = vand.u32 %v2868, 2147483648
  %v2875 = vsel %vm2873, %v2874, %v2872
  %v2876 = vadd.f32 %v2875, 1e-05
  %v2877 = vrcp.pop %v2876
  %v2878 = vmul.f32 1.0, %v2877
  %v2879 = vmul.f32 %v2731, %v2878
  %v2880 = vmul.f32 %v2732, %v2878
  %v2881 = vmul.f32 %v2733, %v2878
  %v2882 = vmul.f32 %v2734, %v2878
  %v2883 = vmul.f32 %v2735, %v2878
  %v2884 = vmul.f32 %v2736, %v2878
  %v2885 = vmul.f32 %v2737, %v2878
  %v2886 = vmul.f32 %v2738, %v2878
  %v2887 = vmul.f32 %v2739, %v2878
  %v2888 = vmul.f32 %v2740, %v2878
  %v2889 = vmul.f32 %v2741, %v2878
  %v2890 = vmul.f32 %v2742, %v2878
  %v2891 = vmul.f32 %v2743, %v2878
  %v2892 = vmul.f32 %v2744, %v2878
  %v2893 = vmul.f32 %v2745, %v2878
  %v2894 = vmul.f32 %v2746, %v2878
  %v2895 = vmul.f32 %v2747, %v2878
  %v2896 = vmul.f32 %v2748, %v2878
  %v2897 = vmul.f32 %v2749, %v2878
  %v2898 = vmul.f32 %v2750, %v2878
  %v2899 = vmul.f32 %v2751, %v2878
  %v2900 = vmul.f32 %v2752, %v2878
  %v2901 = vmul.f32 %v2753, %v2878
  %v2902 = vmul.f32 %v2754, %v2878
  %v2903 = vmul.f32 %v2755, %v2878
  %v2904 = vmul.f32 %v2756, %v2878
  %v2905 = vmul.f32 %v2757, %v2878
  %v2906 = vmul.f32 %v2758, %v2878
  %v2907 = vmul.f32 %v2759, %v2878
  %v2908 = vmul.f32 %v2760, %v2878
  %v2909 = vmul.f32 %v2761, %v2878
  %v2910 = vmul.f32 %v2762, %v2878
  %s2911 = scalar_lea.vmem %s4, 1
  %v2912 = vld [vmem:[%s2911] sm:$0x1]
  %v2914 = vlaneseq
  %v2915 = vshrl.u32 %v2914, 7
  %v2916 = vsub.s32 0, %v2915
  %v2917 = vrot.slane %v2912, %v2916
  %v2919 = vmul.f32 %v2879, %v2917
  %v2920 = vmul.f32 %v2880, %v2917
  %v2921 = vmul.f32 %v2881, %v2917
  %v2922 = vmul.f32 %v2882, %v2917
  %v2923 = vmul.f32 %v2883, %v2917
  %v2924 = vmul.f32 %v2884, %v2917
  %v2925 = vmul.f32 %v2885, %v2917
  %v2926 = vmul.f32 %v2886, %v2917
  %v2927 = vmul.f32 %v2887, %v2917
  %v2928 = vmul.f32 %v2888, %v2917
  %v2929 = vmul.f32 %v2889, %v2917
  %v2930 = vmul.f32 %v2890, %v2917
  %v2931 = vmul.f32 %v2891, %v2917
  %v2932 = vmul.f32 %v2892, %v2917
  %v2933 = vmul.f32 %v2893, %v2917
  %v2934 = vmul.f32 %v2894, %v2917
  %v2935 = vmul.f32 %v2895, %v2917
  %v2936 = vmul.f32 %v2896, %v2917
  %v2937 = vmul.f32 %v2897, %v2917
  %v2938 = vmul.f32 %v2898, %v2917
  %v2939 = vmul.f32 %v2899, %v2917
  %v2940 = vmul.f32 %v2900, %v2917
  %v2941 = vmul.f32 %v2901, %v2917
  %v2942 = vmul.f32 %v2902, %v2917
  %v2943 = vmul.f32 %v2903, %v2917
  %v2944 = vmul.f32 %v2904, %v2917
  %v2945 = vmul.f32 %v2905, %v2917
  %v2946 = vmul.f32 %v2906, %v2917
  %v2947 = vmul.f32 %v2907, %v2917
  %v2948 = vmul.f32 %v2908, %v2917
  %v2949 = vmul.f32 %v2909, %v2917
  %v2950 = vmul.f32 %v2910, %v2917
  %s2951 = scalar_lea.vmem %s5, 1
  %v2952 = vld [vmem:[%s2951] sm:$0x1]
  %v2954 = vlaneseq
  %v2955 = vshrl.u32 %v2954, 7
  %v2956 = vsub.s32 0, %v2955
  %v2957 = vrot.slane %v2952, %v2956
  %v2959 = vadd.f32 %v2919, %v2957
  %v2960 = vadd.f32 %v2920, %v2957
  %v2961 = vadd.f32 %v2921, %v2957
  %v2962 = vadd.f32 %v2922, %v2957
  %v2963 = vadd.f32 %v2923, %v2957
  %v2964 = vadd.f32 %v2924, %v2957
  %v2965 = vadd.f32 %v2925, %v2957
  %v2966 = vadd.f32 %v2926, %v2957
  %v2967 = vadd.f32 %v2927, %v2957
  %v2968 = vadd.f32 %v2928, %v2957
  %v2969 = vadd.f32 %v2929, %v2957
  %v2970 = vadd.f32 %v2930, %v2957
  %v2971 = vadd.f32 %v2931, %v2957
  %v2972 = vadd.f32 %v2932, %v2957
  %v2973 = vadd.f32 %v2933, %v2957
  %v2974 = vadd.f32 %v2934, %v2957
  %v2975 = vadd.f32 %v2935, %v2957
  %v2976 = vadd.f32 %v2936, %v2957
  %v2977 = vadd.f32 %v2937, %v2957
  %v2978 = vadd.f32 %v2938, %v2957
  %v2979 = vadd.f32 %v2939, %v2957
  %v2980 = vadd.f32 %v2940, %v2957
  %v2981 = vadd.f32 %v2941, %v2957
  %v2982 = vadd.f32 %v2942, %v2957
  %v2983 = vadd.f32 %v2943, %v2957
  %v2984 = vadd.f32 %v2944, %v2957
  %v2985 = vadd.f32 %v2945, %v2957
  %v2986 = vadd.f32 %v2946, %v2957
  %v2987 = vadd.f32 %v2947, %v2957
  %v2988 = vadd.f32 %v2948, %v2957
  %v2989 = vadd.f32 %v2949, %v2957
  %v2990 = vadd.f32 %v2950, %v2957
  %v2991 = vmul.f32 %v2959, 0.01
  %v2992 = vmul.f32 %v2960, 0.01
  %v2993 = vmul.f32 %v2961, 0.01
  %v2994 = vmul.f32 %v2962, 0.01
  %v2995 = vmul.f32 %v2963, 0.01
  %v2996 = vmul.f32 %v2964, 0.01
  %v2997 = vmul.f32 %v2965, 0.01
  %v2998 = vmul.f32 %v2966, 0.01
  %v2999 = vmul.f32 %v2967, 0.01
  %v3000 = vmul.f32 %v2968, 0.01
  %v3001 = vmul.f32 %v2969, 0.01
  %v3002 = vmul.f32 %v2970, 0.01
  %v3003 = vmul.f32 %v2971, 0.01
  %v3004 = vmul.f32 %v2972, 0.01
  %v3005 = vmul.f32 %v2973, 0.01
  %v3006 = vmul.f32 %v2974, 0.01
  %v3007 = vmul.f32 %v2975, 0.01
  %v3008 = vmul.f32 %v2976, 0.01
  %v3009 = vmul.f32 %v2977, 0.01
  %v3010 = vmul.f32 %v2978, 0.01
  %v3011 = vmul.f32 %v2979, 0.01
  %v3012 = vmul.f32 %v2980, 0.01
  %v3013 = vmul.f32 %v2981, 0.01
  %v3014 = vmul.f32 %v2982, 0.01
  %v3015 = vmul.f32 %v2983, 0.01
  %v3016 = vmul.f32 %v2984, 0.01
  %v3017 = vmul.f32 %v2985, 0.01
  %v3018 = vmul.f32 %v2986, 0.01
  %v3019 = vmul.f32 %v2987, 0.01
  %v3020 = vmul.f32 %v2988, 0.01
  %v3021 = vmul.f32 %v2989, 0.01
  %v3022 = vmul.f32 %v2990, 0.01
  %v3023 = vmax.f32 %v2959, %v2991
  %v3024 = vmax.f32 %v2960, %v2992
  %v3025 = vmax.f32 %v2961, %v2993
  %v3026 = vmax.f32 %v2962, %v2994
  %v3027 = vmax.f32 %v2963, %v2995
  %v3028 = vmax.f32 %v2964, %v2996
  %v3029 = vmax.f32 %v2965, %v2997
  %v3030 = vmax.f32 %v2966, %v2998
  %v3031 = vmax.f32 %v2967, %v2999
  %v3032 = vmax.f32 %v2968, %v3000
  %v3033 = vmax.f32 %v2969, %v3001
  %v3034 = vmax.f32 %v2970, %v3002
  %v3035 = vmax.f32 %v2971, %v3003
  %v3036 = vmax.f32 %v2972, %v3004
  %v3037 = vmax.f32 %v2973, %v3005
  %v3038 = vmax.f32 %v2974, %v3006
  %v3039 = vmax.f32 %v2975, %v3007
  %v3040 = vmax.f32 %v2976, %v3008
  %v3041 = vmax.f32 %v2977, %v3009
  %v3042 = vmax.f32 %v2978, %v3010
  %v3043 = vmax.f32 %v2979, %v3011
  %v3044 = vmax.f32 %v2980, %v3012
  %v3045 = vmax.f32 %v2981, %v3013
  %v3046 = vmax.f32 %v2982, %v3014
  %v3047 = vmax.f32 %v2983, %v3015
  %v3048 = vmax.f32 %v2984, %v3016
  %v3049 = vmax.f32 %v2985, %v3017
  %v3050 = vmax.f32 %v2986, %v3018
  %v3051 = vmax.f32 %v2987, %v3019
  %v3052 = vmax.f32 %v2988, %v3020
  %v3053 = vmax.f32 %v2989, %v3021
  %v3054 = vmax.f32 %v2990, %v3022
  %s3055 = scalar_lea.vmem %s6, 16
  %v3056 = vld [vmem:[%s3055] sm:$0xf]
  %v3057 = vld [vmem:[%s3055 + $0x4] sm:$0xf]
  %v3058 = vld [vmem:[%s3055 + $0x8] sm:$0xf]
  %v3059 = vld [vmem:[%s3055 + $0xc] sm:$0xf]
  %s3060 = scalar_lea.vmem %s7, 1
  %v3061 = vld [vmem:[%s3060] sm:$0x1]
  %s3062 = scalar_lea.vmem %s8, 32
  %v3063 = vld [vmem:[%s3062] sm:$0xf]
  %v3064 = vld [vmem:[%s3062 + $0x4] sm:$0xf]
  %v3065 = vld [vmem:[%s3062 + $0x8] sm:$0xf]
  %v3066 = vld [vmem:[%s3062 + $0xc] sm:$0xf]
  %v3067 = vld [vmem:[%s3062 + $0x10] sm:$0xf]
  %v3068 = vld [vmem:[%s3062 + $0x14] sm:$0xf]
  %v3069 = vld [vmem:[%s3062 + $0x18] sm:$0xf]
  %v3070 = vld [vmem:[%s3062 + $0x1c] sm:$0xf]
  %s3071 = scalar_lea.vmem %s9, 1
  %v3072 = vld [vmem:[%s3071] sm:$0x1]
  %v3073 = vmax.f32 %v3023, 0.0
  %v3074 = vmax.f32 %v3024, 0.0
  %v3075 = vmax.f32 %v3025, 0.0
  %v3076 = vmax.f32 %v3026, 0.0
  %v3077 = vmax.f32 %v3027, 0.0
  %v3078 = vmax.f32 %v3028, 0.0
  %v3079 = vmax.f32 %v3029, 0.0
  %v3080 = vmax.f32 %v3030, 0.0
  %v3081 = vmax.f32 %v3031, 0.0
  %v3082 = vmax.f32 %v3032, 0.0
  %v3083 = vmax.f32 %v3033, 0.0
  %v3084 = vmax.f32 %v3034, 0.0
  %v3085 = vmax.f32 %v3035, 0.0
  %v3086 = vmax.f32 %v3036, 0.0
  %v3087 = vmax.f32 %v3037, 0.0
  %v3088 = vmax.f32 %v3038, 0.0
  %v3089 = vmax.f32 %v3039, 0.0
  %v3090 = vmax.f32 %v3040, 0.0
  %v3091 = vmax.f32 %v3041, 0.0
  %v3092 = vmax.f32 %v3042, 0.0
  %v3093 = vmax.f32 %v3043, 0.0
  %v3094 = vmax.f32 %v3044, 0.0
  %v3095 = vmax.f32 %v3045, 0.0
  %v3096 = vmax.f32 %v3046, 0.0
  %v3097 = vmax.f32 %v3047, 0.0
  %v3098 = vmax.f32 %v3048, 0.0
  %v3099 = vmax.f32 %v3049, 0.0
  %v3100 = vmax.f32 %v3050, 0.0
  %v3101 = vmax.f32 %v3051, 0.0
  %v3102 = vmax.f32 %v3052, 0.0
  %v3103 = vmax.f32 %v3053, 0.0
  %v3104 = vmax.f32 %v3054, 0.0
  %v3105 = vadd.f32 %v3073, 1e-07
  %v3106 = vadd.f32 %v3074, 1e-07
  %v3107 = vadd.f32 %v3075, 1e-07
  %v3108 = vadd.f32 %v3076, 1e-07
  %v3109 = vadd.f32 %v3077, 1e-07
  %v3110 = vadd.f32 %v3078, 1e-07
  %v3111 = vadd.f32 %v3079, 1e-07
  %v3112 = vadd.f32 %v3080, 1e-07
  %v3113 = vadd.f32 %v3081, 1e-07
  %v3114 = vadd.f32 %v3082, 1e-07
  %v3115 = vadd.f32 %v3083, 1e-07
  %v3116 = vadd.f32 %v3084, 1e-07
  %v3117 = vadd.f32 %v3085, 1e-07
  %v3118 = vadd.f32 %v3086, 1e-07
  %v3119 = vadd.f32 %v3087, 1e-07
  %v3120 = vadd.f32 %v3088, 1e-07
  %v3121 = vadd.f32 %v3089, 1e-07
  %v3122 = vadd.f32 %v3090, 1e-07
  %v3123 = vadd.f32 %v3091, 1e-07
  %v3124 = vadd.f32 %v3092, 1e-07
  %v3125 = vadd.f32 %v3093, 1e-07
  %v3126 = vadd.f32 %v3094, 1e-07
  %v3127 = vadd.f32 %v3095, 1e-07
  %v3128 = vadd.f32 %v3096, 1e-07
  %v3129 = vadd.f32 %v3097, 1e-07
  %v3130 = vadd.f32 %v3098, 1e-07
  %v3131 = vadd.f32 %v3099, 1e-07
  %v3132 = vadd.f32 %v3100, 1e-07
  %v3133 = vadd.f32 %v3101, 1e-07
  %v3134 = vadd.f32 %v3102, 1e-07
  %v3135 = vadd.f32 %v3103, 1e-07
  %v3136 = vadd.f32 %v3104, 1e-07
  %v3137 = vsel %vm429, %v3105, -inf
  %v3138 = vsel %vm429, %v3106, -inf
  %v3139 = vsel %vm429, %v3107, -inf
  %v3140 = vsel %vm429, %v3108, -inf
  %v3141 = vsel %vm429, %v3109, -inf
  %v3142 = vmax.f32 %v3137, %v3141
  %v3143 = vsel %vm429, %v3110, -inf
  %v3144 = vmax.f32 %v3138, %v3143
  %v3145 = vsel %vm429, %v3111, -inf
  %v3146 = vmax.f32 %v3139, %v3145
  %v3147 = vsel %vm429, %v3112, -inf
  %v3148 = vmax.f32 %v3140, %v3147
  %v3149 = vsel %vm429, %v3113, -inf
  %v3150 = vmax.f32 %v3142, %v3149
  %v3151 = vsel %vm429, %v3114, -inf
  %v3152 = vmax.f32 %v3144, %v3151
  %v3153 = vsel %vm429, %v3115, -inf
  %v3154 = vmax.f32 %v3146, %v3153
  %v3155 = vsel %vm429, %v3116, -inf
  %v3156 = vmax.f32 %v3148, %v3155
  %v3157 = vsel %vm429, %v3117, -inf
  %v3158 = vmax.f32 %v3150, %v3157
  %v3159 = vsel %vm429, %v3118, -inf
  %v3160 = vmax.f32 %v3152, %v3159
  %v3161 = vsel %vm429, %v3119, -inf
  %v3162 = vmax.f32 %v3154, %v3161
  %v3163 = vsel %vm429, %v3120, -inf
  %v3164 = vmax.f32 %v3156, %v3163
  %v3165 = vsel %vm429, %v3121, -inf
  %v3166 = vmax.f32 %v3158, %v3165
  %v3167 = vsel %vm429, %v3122, -inf
  %v3168 = vmax.f32 %v3160, %v3167
  %v3169 = vsel %vm429, %v3123, -inf
  %v3170 = vmax.f32 %v3162, %v3169
  %v3171 = vsel %vm429, %v3124, -inf
  %v3172 = vmax.f32 %v3164, %v3171
  %v3173 = vsel %vm429, %v3125, -inf
  %v3174 = vmax.f32 %v3166, %v3173
  %v3175 = vsel %vm429, %v3126, -inf
  %v3176 = vmax.f32 %v3168, %v3175
  %v3177 = vsel %vm429, %v3127, -inf
  %v3178 = vmax.f32 %v3170, %v3177
  %v3179 = vsel %vm429, %v3128, -inf
  %v3180 = vmax.f32 %v3172, %v3179
  %v3181 = vsel %vm429, %v3129, -inf
  %v3182 = vmax.f32 %v3174, %v3181
  %v3183 = vsel %vm429, %v3130, -inf
  %v3184 = vmax.f32 %v3176, %v3183
  %v3185 = vsel %vm429, %v3131, -inf
  %v3186 = vmax.f32 %v3178, %v3185
  %v3187 = vsel %vm429, %v3132, -inf
  %v3188 = vmax.f32 %v3180, %v3187
  %v3189 = vsel %vm429, %v3133, -inf
  %v3190 = vmax.f32 %v3182, %v3189
  %v3191 = vsel %vm429, %v3134, -inf
  %v3192 = vmax.f32 %v3184, %v3191
  %v3193 = vsel %vm429, %v3135, -inf
  %v3194 = vmax.f32 %v3186, %v3193
  %v3195 = vsel %vm429, %v3136, -inf
  %v3196 = vmax.f32 %v3188, %v3195
  %v3197 = vmax.f32 %v3190, %v3192
  %v3198 = vmax.f32 %v3194, %v3196
  %v3199 = vmax.f32 %v3197, %v3198
  %v3200 = vrot.slane %v3199, 4
  %v3201 = vmax.f32 %v3199, %v3200
  %v3202 = vrot.slane %v3201, 2
  %v3203 = vmax.f32 %v3201, %v3202
  %v3204 = vrot.slane %v3203, 1
  %v3205 = vmax.f32 %v3203, %v3204
  %v3206 = vsub.f32 %v3105, %v3205
  %v3207 = vsub.f32 %v3106, %v3205
  %v3208 = vsub.f32 %v3107, %v3205
  %v3209 = vsub.f32 %v3108, %v3205
  %v3210 = vsub.f32 %v3109, %v3205
  %v3211 = vsub.f32 %v3110, %v3205
  %v3212 = vsub.f32 %v3111, %v3205
  %v3213 = vsub.f32 %v3112, %v3205
  %v3214 = vsub.f32 %v3113, %v3205
  %v3215 = vsub.f32 %v3114, %v3205
  %v3216 = vsub.f32 %v3115, %v3205
  %v3217 = vsub.f32 %v3116, %v3205
  %v3218 = vsub.f32 %v3117, %v3205
  %v3219 = vsub.f32 %v3118, %v3205
  %v3220 = vsub.f32 %v3119, %v3205
  %v3221 = vsub.f32 %v3120, %v3205
  %v3222 = vsub.f32 %v3121, %v3205
  %v3223 = vsub.f32 %v3122, %v3205
  %v3224 = vsub.f32 %v3123, %v3205
  %v3225 = vsub.f32 %v3124, %v3205
  %v3226 = vsub.f32 %v3125, %v3205
  %v3227 = vsub.f32 %v3126, %v3205
  %v3228 = vsub.f32 %v3127, %v3205
  %v3229 = vsub.f32 %v3128, %v3205
  %v3230 = vsub.f32 %v3129, %v3205
  %v3231 = vsub.f32 %v3130, %v3205
  %v3232 = vsub.f32 %v3131, %v3205
  %v3233 = vsub.f32 %v3132, %v3205
  %v3234 = vsub.f32 %v3133, %v3205
  %v3235 = vsub.f32 %v3134, %v3205
  %v3236 = vsub.f32 %v3135, %v3205
  %v3237 = vsub.f32 %v3136, %v3205
  %v3238 = vmul.f32 %v3206, 1.442695
  %v3239 = vpow.pop %v3238
  %v3240 = vmul.f32 %v3207, 1.442695
  %v3241 = vpow.pop %v3240
  %v3242 = vmul.f32 %v3208, 1.442695
  %v3243 = vpow.pop %v3242
  %v3244 = vmul.f32 %v3209, 1.442695
  %v3245 = vpow.pop %v3244
  %v3246 = vmul.f32 %v3210, 1.442695
  %v3247 = vpow.pop %v3246
  %v3248 = vmul.f32 %v3211, 1.442695
  %v3249 = vpow.pop %v3248
  %v3250 = vmul.f32 %v3212, 1.442695
  %v3251 = vpow.pop %v3250
  %v3252 = vmul.f32 %v3213, 1.442695
  %v3253 = vpow.pop %v3252
  %v3254 = vmul.f32 %v3214, 1.442695
  %v3255 = vpow.pop %v3254
  %v3256 = vmul.f32 %v3215, 1.442695
  %v3257 = vpow.pop %v3256
  %v3258 = vmul.f32 %v3216, 1.442695
  %v3259 = vpow.pop %v3258
  %v3260 = vmul.f32 %v3217, 1.442695
  %v3261 = vpow.pop %v3260
  %v3262 = vmul.f32 %v3218, 1.442695
  %v3263 = vpow.pop %v3262
  %v3264 = vmul.f32 %v3219, 1.442695
  %v3265 = vpow.pop %v3264
  %v3266 = vmul.f32 %v3220, 1.442695
  %v3267 = vpow.pop %v3266
  %v3268 = vmul.f32 %v3221, 1.442695
  %v3269 = vpow.pop %v3268
  %v3270 = vmul.f32 %v3222, 1.442695
  %v3271 = vpow.pop %v3270
  %v3272 = vmul.f32 %v3223, 1.442695
  %v3273 = vpow.pop %v3272
  %v3274 = vmul.f32 %v3224, 1.442695
  %v3275 = vpow.pop %v3274
  %v3276 = vmul.f32 %v3225, 1.442695
  %v3277 = vpow.pop %v3276
  %v3278 = vmul.f32 %v3226, 1.442695
  %v3279 = vpow.pop %v3278
  %v3280 = vmul.f32 %v3227, 1.442695
  %v3281 = vpow.pop %v3280
  %v3282 = vmul.f32 %v3228, 1.442695
  %v3283 = vpow.pop %v3282
  %v3284 = vmul.f32 %v3229, 1.442695
  %v3285 = vpow.pop %v3284
  %v3286 = vmul.f32 %v3230, 1.442695
  %v3287 = vpow.pop %v3286
  %v3288 = vmul.f32 %v3231, 1.442695
  %v3289 = vpow.pop %v3288
  %v3290 = vmul.f32 %v3232, 1.442695
  %v3291 = vpow.pop %v3290
  %v3292 = vmul.f32 %v3233, 1.442695
  %v3293 = vpow.pop %v3292
  %v3294 = vmul.f32 %v3234, 1.442695
  %v3295 = vpow.pop %v3294
  %v3296 = vmul.f32 %v3235, 1.442695
  %v3297 = vpow.pop %v3296
  %v3298 = vmul.f32 %v3236, 1.442695
  %v3299 = vpow.pop %v3298
  %v3300 = vmul.f32 %v3237, 1.442695
  %v3301 = vpow.pop %v3300
  %v3302 = vmul.f32 %v3105, %v3239
  %v3303 = vmul.f32 %v3106, %v3241
  %v3304 = vmul.f32 %v3107, %v3243
  %v3305 = vmul.f32 %v3108, %v3245
  %v3306 = vmul.f32 %v3109, %v3247
  %v3307 = vmul.f32 %v3110, %v3249
  %v3308 = vmul.f32 %v3111, %v3251
  %v3309 = vmul.f32 %v3112, %v3253
  %v3310 = vmul.f32 %v3113, %v3255
  %v3311 = vmul.f32 %v3114, %v3257
  %v3312 = vmul.f32 %v3115, %v3259
  %v3313 = vmul.f32 %v3116, %v3261
  %v3314 = vmul.f32 %v3117, %v3263
  %v3315 = vmul.f32 %v3118, %v3265
  %v3316 = vmul.f32 %v3119, %v3267
  %v3317 = vmul.f32 %v3120, %v3269
  %v3318 = vmul.f32 %v3121, %v3271
  %v3319 = vmul.f32 %v3122, %v3273
  %v3320 = vmul.f32 %v3123, %v3275
  %v3321 = vmul.f32 %v3124, %v3277
  %v3322 = vmul.f32 %v3125, %v3279
  %v3323 = vmul.f32 %v3126, %v3281
  %v3324 = vmul.f32 %v3127, %v3283
  %v3325 = vmul.f32 %v3128, %v3285
  %v3326 = vmul.f32 %v3129, %v3287
  %v3327 = vmul.f32 %v3130, %v3289
  %v3328 = vmul.f32 %v3131, %v3291
  %v3329 = vmul.f32 %v3132, %v3293
  %v3330 = vmul.f32 %v3133, %v3295
  %v3331 = vmul.f32 %v3134, %v3297
  %v3332 = vmul.f32 %v3135, %v3299
  %v3333 = vmul.f32 %v3136, %v3301
  %3366 = vrot.lane.b32.xlu0 %v3239, 32
  %v3367 = vpop.permute.xlu0 %3366
  %3368 = vrot.lane.b32.xlu0 %v3241, 32
  %v3369 = vpop.permute.xlu0 %3368
  %3370 = vrot.lane.b32.xlu0 %v3243, 32
  %v3371 = vpop.permute.xlu0 %3370
  %3372 = vrot.lane.b32.xlu0 %v3245, 32
  %v3373 = vpop.permute.xlu0 %3372
  %3374 = vrot.lane.b32.xlu0 %v3247, 32
  %v3375 = vpop.permute.xlu0 %3374
  %3376 = vrot.lane.b32.xlu0 %v3249, 32
  %v3377 = vpop.permute.xlu0 %3376
  %3378 = vrot.lane.b32.xlu0 %v3251, 32
  %v3379 = vpop.permute.xlu0 %3378
  %3380 = vrot.lane.b32.xlu0 %v3253, 32
  %v3381 = vpop.permute.xlu0 %3380
  %3382 = vrot.lane.b32.xlu0 %v3255, 32
  %v3383 = vpop.permute.xlu0 %3382
  %3384 = vrot.lane.b32.xlu0 %v3257, 32
  %v3385 = vpop.permute.xlu0 %3384
  %3386 = vrot.lane.b32.xlu0 %v3259, 32
  %v3387 = vpop.permute.xlu0 %3386
  %3388 = vrot.lane.b32.xlu0 %v3261, 32
  %v3389 = vpop.permute.xlu0 %3388
  %3390 = vrot.lane.b32.xlu0 %v3263, 32
  %v3391 = vpop.permute.xlu0 %3390
  %3392 = vrot.lane.b32.xlu0 %v3265, 32
  %v3393 = vpop.permute.xlu0 %3392
  %3394 = vrot.lane.b32.xlu0 %v3267, 32
  %v3395 = vpop.permute.xlu0 %3394
  %3396 = vrot.lane.b32.xlu0 %v3269, 32
  %v3397 = vpop.permute.xlu0 %3396
  %3398 = vrot.lane.b32.xlu0 %v3271, 32
  %v3399 = vpop.permute.xlu0 %3398
  %3400 = vrot.lane.b32.xlu0 %v3273, 32
  %v3401 = vpop.permute.xlu0 %3400
  %3402 = vrot.lane.b32.xlu0 %v3275, 32
  %v3403 = vpop.permute.xlu0 %3402
  %3404 = vrot.lane.b32.xlu0 %v3277, 32
  %v3405 = vpop.permute.xlu0 %3404
  %3406 = vrot.lane.b32.xlu0 %v3279, 32
  %v3407 = vpop.permute.xlu0 %3406
  %3408 = vrot.lane.b32.xlu0 %v3281, 32
  %v3409 = vpop.permute.xlu0 %3408
  %3410 = vrot.lane.b32.xlu0 %v3283, 32
  %v3411 = vpop.permute.xlu0 %3410
  %3412 = vrot.lane.b32.xlu0 %v3285, 32
  %v3413 = vpop.permute.xlu0 %3412
  %3414 = vrot.lane.b32.xlu0 %v3287, 32
  %v3415 = vpop.permute.xlu0 %3414
  %3416 = vrot.lane.b32.xlu0 %v3289, 32
  %v3417 = vpop.permute.xlu0 %3416
  %3418 = vrot.lane.b32.xlu0 %v3291, 32
  %v3419 = vpop.permute.xlu0 %3418
  %3420 = vrot.lane.b32.xlu0 %v3293, 32
  %v3421 = vpop.permute.xlu0 %3420
  %3422 = vrot.lane.b32.xlu0 %v3295, 32
  %v3423 = vpop.permute.xlu0 %3422
  %3424 = vrot.lane.b32.xlu0 %v3297, 32
  %v3425 = vpop.permute.xlu0 %3424
  %3426 = vrot.lane.b32.xlu0 %v3299, 32
  %v3427 = vpop.permute.xlu0 %3426
  %3428 = vrot.lane.b32.xlu0 %v3301, 32
  %v3429 = vpop.permute.xlu0 %3428
  %v3462 = vsel %vm429, %v3302, %v3367
  %v3463 = vsel %vm429, %v3303, %v3369
  %v3464 = vsel %vm429, %v3304, %v3371
  %v3465 = vsel %vm429, %v3305, %v3373
  %v3466 = vsel %vm429, %v3306, %v3375
  %v3467 = vsel %vm429, %v3307, %v3377
  %v3468 = vsel %vm429, %v3308, %v3379
  %v3469 = vsel %vm429, %v3309, %v3381
  %v3470 = vsel %vm429, %v3310, %v3383
  %v3471 = vsel %vm429, %v3311, %v3385
  %v3472 = vsel %vm429, %v3312, %v3387
  %v3473 = vsel %vm429, %v3313, %v3389
  %v3474 = vsel %vm429, %v3314, %v3391
  %v3475 = vsel %vm429, %v3315, %v3393
  %v3476 = vsel %vm429, %v3316, %v3395
  %v3477 = vsel %vm429, %v3317, %v3397
  %v3478 = vsel %vm429, %v3318, %v3399
  %v3479 = vsel %vm429, %v3319, %v3401
  %v3480 = vsel %vm429, %v3320, %v3403
  %v3481 = vsel %vm429, %v3321, %v3405
  %v3482 = vsel %vm429, %v3322, %v3407
  %v3483 = vsel %vm429, %v3323, %v3409
  %v3484 = vsel %vm429, %v3324, %v3411
  %v3485 = vsel %vm429, %v3325, %v3413
  %v3486 = vsel %vm429, %v3326, %v3415
  %v3487 = vsel %vm429, %v3327, %v3417
  %v3488 = vsel %vm429, %v3328, %v3419
  %v3489 = vsel %vm429, %v3329, %v3421
  %v3490 = vsel %vm429, %v3330, %v3423
  %v3491 = vsel %vm429, %v3331, %v3425
  %v3492 = vsel %vm429, %v3332, %v3427
  %v3493 = vsel %vm429, %v3333, %v3429
  %v3494 = vpack.c.bf16 %v3463, %v3462
  %v3495 = vpack.c.bf16 %v3465, %v3464
  %v3496 = vpack.c.bf16 %v3467, %v3466
  %v3497 = vpack.c.bf16 %v3469, %v3468
  %v3498 = vpack.c.bf16 %v3471, %v3470
  %v3499 = vpack.c.bf16 %v3473, %v3472
  %v3500 = vpack.c.bf16 %v3475, %v3474
  %v3501 = vpack.c.bf16 %v3477, %v3476
  %v3502 = vpack.c.bf16 %v3479, %v3478
  %v3503 = vpack.c.bf16 %v3481, %v3480
  %v3504 = vpack.c.bf16 %v3483, %v3482
  %v3505 = vpack.c.bf16 %v3485, %v3484
  %v3506 = vpack.c.bf16 %v3487, %v3486
  %v3507 = vpack.c.bf16 %v3489, %v3488
  %v3508 = vpack.c.bf16 %v3491, %v3490
  %v3509 = vpack.c.bf16 %v3493, %v3492
  %3510 = vmatprep.subr.bf16.mxu0 0
  %3511 = vmatpush1.bf16.msra.mxu0 %v3494
  %3512 = vmatprep.subr.bf16.mxu0 0
  %3513 = vmatpush1.bf16.msra.mxu0 %v3495
  %3514 = vmatprep.subr.bf16.mxu0 0
  %3515 = vmatpush1.bf16.msra.mxu0 %v3496
  %3516 = vmatprep.subr.bf16.mxu0 0
  %3517 = vmatpush1.bf16.msra.mxu0 %v3497
  %3518 = vmatprep.subr.bf16.mxu0 0
  %3519 = vmatpush1.bf16.msra.mxu0 %v3498
  %3520 = vmatprep.subr.bf16.mxu0 0
  %3521 = vmatpush1.bf16.msra.mxu0 %v3499
  %3522 = vmatprep.subr.bf16.mxu0 0
  %3523 = vmatpush1.bf16.msra.mxu0 %v3500
  %3524 = vmatprep.subr.bf16.mxu0 0
  %3525 = vmatpush1.bf16.msra.mxu0 %v3501
  %3526 = vmatprep.subr.bf16.mxu0 0
  %3527 = vmatpush1.bf16.msra.mxu0 %v3502
  %3528 = vmatprep.subr.bf16.mxu0 0
  %3529 = vmatpush1.bf16.msra.mxu0 %v3503
  %3530 = vmatprep.subr.bf16.mxu0 0
  %3531 = vmatpush1.bf16.msra.mxu0 %v3504
  %3532 = vmatprep.subr.bf16.mxu0 0
  %3533 = vmatpush1.bf16.msra.mxu0 %v3505
  %3534 = vmatprep.subr.bf16.mxu0 0
  %3535 = vmatpush1.bf16.msra.mxu0 %v3506
  %3536 = vmatprep.subr.bf16.mxu0 0
  %3537 = vmatpush1.bf16.msra.mxu0 %v3507
  %3538 = vmatprep.subr.bf16.mxu0 0
  %3539 = vmatpush1.bf16.msra.mxu0 %v3508
  %3540 = vmatprep.subr.bf16.mxu0 0
  %3541 = vmatpush1.bf16.msra.mxu0 %v3509
  %3542 = vmatprep.mubr.bf16.mxu0 %v1375
  %3543 = vmatmul.mubr.bf16.gmra.mrb[0].mxu0 %v1374
  %v3544 = vpop.f32.mrb[0].mxu0
  %v3545 = vadd.f32 0.0, %v3544
  %v3546 = vpop.f32.mrb[0].mxu0
  %v3547 = vpop.f32.mrb[0].mxu0
  %v3548 = vadd.f32 0.0, %v3547
  %v3549 = vpop.f32.mrb[0].mxu0
  %3550 = vmatprep.mubr.bf16.mxu0 %v1377
  %3551 = vmatmul.mubr.bf16.gmra.mrb[0].mxu0 %v1376
  %v3552 = vpop.f32.mrb[0].mxu0
  %v3553 = vadd.f32 0.0, %v3552
  %v3554 = vpop.f32.mrb[0].mxu0
  %v3555 = vpop.f32.mrb[0].mxu0
  %v3556 = vadd.f32 0.0, %v3555
  %v3557 = vpop.f32.mrb[0].mxu0
  %3558 = vmatprep.mubr.bf16.mxu0 %v1379
  %3559 = vmatmul.mubr.bf16.gmra.mrb[0].mxu0 %v1378
  %v3560 = vpop.f32.mrb[0].mxu0
  %v3561 = vadd.f32 0.0, %v3560
  %v3562 = vpop.f32.mrb[0].mxu0
  %v3563 = vpop.f32.mrb[0].mxu0
  %v3564 = vadd.f32 0.0, %v3563
  %v3565 = vpop.f32.mrb[0].mxu0
  %3566 = vmatprep.mubr.bf16.mxu0 %v1381
  %3567 = vmatmul.mubr.bf16.gmra.mrb[0].mxu0 %v1380
  %v3568 = vpop.f32.mrb[0].mxu0
  %v3569 = vadd.f32 0.0, %v3568
  %v3570 = vpop.f32.mrb[0].mxu0
  %v3571 = vpop.f32.mrb[0].mxu0
  %v3572 = vadd.f32 0.0, %v3571
  %v3573 = vpop.f32.mrb[0].mxu0
  %3574 = vmatprep.mubr.bf16.mxu0 %v1383
  %3575 = vmatmul.mubr.bf16.gmra.mrb[0].mxu0 %v1382
  %v3576 = vpop.f32.mrb[0].mxu0
  %v3577 = vadd.f32 0.0, %v3576
  %v3578 = vpop.f32.mrb[0].mxu0
  %v3579 = vpop.f32.mrb[0].mxu0
  %v3580 = vadd.f32 0.0, %v3579
  %v3581 = vpop.f32.mrb[0].mxu0
  %3582 = vmatprep.mubr.bf16.mxu0 %v1385
  %3583 = vmatmul.mubr.bf16.gmra.mrb[0].mxu0 %v1384
  %v3584 = vpop.f32.mrb[0].mxu0
  %v3585 = vadd.f32 0.0, %v3584
  %v3586 = vpop.f32.mrb[0].mxu0
  %v3587 = vpop.f32.mrb[0].mxu0
  %v3588 = vadd.f32 0.0, %v3587
  %v3589 = vpop.f32.mrb[0].mxu0
  %3590 = vmatprep.mubr.bf16.mxu0 %v1387
  %3591 = vmatmul.mubr.bf16.gmra.mrb[0].mxu0 %v1386
  %v3592 = vpop.f32.mrb[0].mxu0
  %v3593 = vadd.f32 0.0, %v3592
  %v3594 = vpop.f32.mrb[0].mxu0
  %v3595 = vpop.f32.mrb[0].mxu0
  %v3596 = vadd.f32 0.0, %v3595
  %v3597 = vpop.f32.mrb[0].mxu0
  %3598 = vmatprep.mubr.bf16.mxu0 %v1389
  %3599 = vmatmul.mubr.bf16.gmra.mrb[0].mxu0 %v1388
  %v3600 = vpop.f32.mrb[0].mxu0
  %v3601 = vadd.f32 0.0, %v3600
  %v3602 = vpop.f32.mrb[0].mxu0
  %v3603 = vpop.f32.mrb[0].mxu0
  %v3604 = vadd.f32 0.0, %v3603
  %v3605 = vpop.f32.mrb[0].mxu0
  %3606 = vmatprep.mubr.bf16.mxu0 %v1391
  %3607 = vmatmul.mubr.bf16.gmra.mrb[0].mxu0 %v1390
  %v3608 = vpop.f32.mrb[0].mxu0
  %v3609 = vadd.f32 0.0, %v3608
  %v3610 = vpop.f32.mrb[0].mxu0
  %v3611 = vpop.f32.mrb[0].mxu0
  %v3612 = vadd.f32 0.0, %v3611
  %v3613 = vpop.f32.mrb[0].mxu0
  %3614 = vmatprep.mubr.bf16.mxu0 %v1393
  %3615 = vmatmul.mubr.bf16.gmra.mrb[0].mxu0 %v1392
  %v3616 = vpop.f32.mrb[0].mxu0
  %v3617 = vadd.f32 0.0, %v3616
  %v3618 = vpop.f32.mrb[0].mxu0
  %v3619 = vpop.f32.mrb[0].mxu0
  %v3620 = vadd.f32 0.0, %v3619
  %v3621 = vpop.f32.mrb[0].mxu0
  %3622 = vmatprep.mubr.bf16.mxu0 %v1395
  %3623 = vmatmul.mubr.bf16.gmra.mrb[0].mxu0 %v1394
  %v3624 = vpop.f32.mrb[0].mxu0
  %v3625 = vadd.f32 0.0, %v3624
  %v3626 = vpop.f32.mrb[0].mxu0
  %v3627 = vpop.f32.mrb[0].mxu0
  %v3628 = vadd.f32 0.0, %v3627
  %v3629 = vpop.f32.mrb[0].mxu0
  %3630 = vmatprep.mubr.bf16.mxu0 %v1397
  %3631 = vmatmul.mubr.bf16.gmra.mrb[0].mxu0 %v1396
  %v3632 = vpop.f32.mrb[0].mxu0
  %v3633 = vadd.f32 0.0, %v3632
  %v3634 = vpop.f32.mrb[0].mxu0
  %v3635 = vpop.f32.mrb[0].mxu0
  %v3636 = vadd.f32 0.0, %v3635
  %v3637 = vpop.f32.mrb[0].mxu0
  %3638 = vmatprep.mubr.bf16.mxu0 %v1399
  %3639 = vmatmul.mubr.bf16.gmra.mrb[0].mxu0 %v1398
  %v3640 = vpop.f32.mrb[0].mxu0
  %v3641 = vadd.f32 0.0, %v3640
  %v3642 = vpop.f32.mrb[0].mxu0
  %v3643 = vpop.f32.mrb[0].mxu0
  %v3644 = vadd.f32 0.0, %v3643
  %v3645 = vpop.f32.mrb[0].mxu0
  %3646 = vmatprep.mubr.bf16.mxu0 %v1401
  %3647 = vmatmul.mubr.bf16.gmra.mrb[0].mxu0 %v1400
  %v3648 = vpop.f32.mrb[0].mxu0
  %v3649 = vadd.f32 0.0, %v3648
  %v3650 = vpop.f32.mrb[0].mxu0
  %v3651 = vpop.f32.mrb[0].mxu0
  %v3652 = vadd.f32 0.0, %v3651
  %v3653 = vpop.f32.mrb[0].mxu0
  %3654 = vmatprep.mubr.bf16.mxu0 %v1403
  %3655 = vmatmul.mubr.bf16.gmra.mrb[0].mxu0 %v1402
  %v3656 = vpop.f32.mrb[0].mxu0
  %v3657 = vadd.f32 0.0, %v3656
  %v3658 = vpop.f32.mrb[0].mxu0
  %v3659 = vpop.f32.mrb[0].mxu0
  %v3660 = vadd.f32 0.0, %v3659
  %v3661 = vpop.f32.mrb[0].mxu0
  %3662 = vmatprep.mubr.bf16.mxu0 %v1405
  %3663 = vmatmul.mubr.bf16.gmra.mrb[0].mxu0 %v1404
  %v3664 = vpop.f32.mrb[0].mxu0
  %v3665 = vadd.f32 0.0, %v3664
  %v3666 = vpop.f32.mrb[0].mxu0
  %v3667 = vpop.f32.mrb[0].mxu0
  %v3668 = vadd.f32 0.0, %v3667
  %v3669 = vpop.f32.mrb[0].mxu0
  %3670 = vdwg.mxu0
  %v3671 = vadd.f32 %v3545, 1e-12
  %v3672 = vadd.f32 %v3548, 1e-12
  %v3673 = vadd.f32 %v3553, 1e-12
  %v3674 = vadd.f32 %v3556, 1e-12
  %v3675 = vadd.f32 %v3561, 1e-12
  %v3676 = vadd.f32 %v3564, 1e-12
  %v3677 = vadd.f32 %v3569, 1e-12
  %v3678 = vadd.f32 %v3572, 1e-12
  %v3679 = vadd.f32 %v3577, 1e-12
  %v3680 = vadd.f32 %v3580, 1e-12
  %v3681 = vadd.f32 %v3585, 1e-12
  %v3682 = vadd.f32 %v3588, 1e-12
  %v3683 = vadd.f32 %v3593, 1e-12
  %v3684 = vadd.f32 %v3596, 1e-12
  %v3685 = vadd.f32 %v3601, 1e-12
  %v3686 = vadd.f32 %v3604, 1e-12
  %v3687 = vadd.f32 %v3609, 1e-12
  %v3688 = vadd.f32 %v3612, 1e-12
  %v3689 = vadd.f32 %v3617, 1e-12
  %v3690 = vadd.f32 %v3620, 1e-12
  %v3691 = vadd.f32 %v3625, 1e-12
  %v3692 = vadd.f32 %v3628, 1e-12
  %v3693 = vadd.f32 %v3633, 1e-12
  %v3694 = vadd.f32 %v3636, 1e-12
  %v3695 = vadd.f32 %v3641, 1e-12
  %v3696 = vadd.f32 %v3644, 1e-12
  %v3697 = vadd.f32 %v3649, 1e-12
  %v3698 = vadd.f32 %v3652, 1e-12
  %v3699 = vadd.f32 %v3657, 1e-12
  %v3700 = vadd.f32 %v3660, 1e-12
  %v3701 = vadd.f32 %v3665, 1e-12
  %v3702 = vadd.f32 %v3668, 1e-12
  %v3703 = vrcp.pop %v3671
  %v3704 = vrcp.pop %v3672
  %v3705 = vrcp.pop %v3673
  %v3706 = vrcp.pop %v3674
  %v3707 = vrcp.pop %v3675
  %v3708 = vrcp.pop %v3676
  %v3709 = vrcp.pop %v3677
  %v3710 = vrcp.pop %v3678
  %v3711 = vrcp.pop %v3679
  %v3712 = vrcp.pop %v3680
  %v3713 = vrcp.pop %v3681
  %v3714 = vrcp.pop %v3682
  %v3715 = vrcp.pop %v3683
  %v3716 = vrcp.pop %v3684
  %v3717 = vrcp.pop %v3685
  %v3718 = vrcp.pop %v3686
  %v3719 = vrcp.pop %v3687
  %v3720 = vrcp.pop %v3688
  %v3721 = vrcp.pop %v3689
  %v3722 = vrcp.pop %v3690
  %v3723 = vrcp.pop %v3691
  %v3724 = vrcp.pop %v3692
  %v3725 = vrcp.pop %v3693
  %v3726 = vrcp.pop %v3694
  %v3727 = vrcp.pop %v3695
  %v3728 = vrcp.pop %v3696
  %v3729 = vrcp.pop %v3697
  %v3730 = vrcp.pop %v3698
  %v3731 = vrcp.pop %v3699
  %v3732 = vrcp.pop %v3700
  %v3733 = vrcp.pop %v3701
  %v3734 = vrcp.pop %v3702
  %3767 = vrot.lane.b32.xlu0 %v3703, 96
  %v3768 = vpop.permute.xlu0 %3767
  %3769 = vrot.lane.b32.xlu0 %v3704, 96
  %v3770 = vpop.permute.xlu0 %3769
  %3771 = vrot.lane.b32.xlu0 %v3705, 96
  %v3772 = vpop.permute.xlu0 %3771
  %3773 = vrot.lane.b32.xlu0 %v3706, 96
  %v3774 = vpop.permute.xlu0 %3773
  %3775 = vrot.lane.b32.xlu0 %v3707, 96
  %v3776 = vpop.permute.xlu0 %3775
  %3777 = vrot.lane.b32.xlu0 %v3708, 96
  %v3778 = vpop.permute.xlu0 %3777
  %3779 = vrot.lane.b32.xlu0 %v3709, 96
  %v3780 = vpop.permute.xlu0 %3779
  %3781 = vrot.lane.b32.xlu0 %v3710, 96
  %v3782 = vpop.permute.xlu0 %3781
  %3783 = vrot.lane.b32.xlu0 %v3711, 96
  %v3784 = vpop.permute.xlu0 %3783
  %3785 = vrot.lane.b32.xlu0 %v3712, 96
  %v3786 = vpop.permute.xlu0 %3785
  %3787 = vrot.lane.b32.xlu0 %v3713, 96
  %v3788 = vpop.permute.xlu0 %3787
  %3789 = vrot.lane.b32.xlu0 %v3714, 96
  %v3790 = vpop.permute.xlu0 %3789
  %3791 = vrot.lane.b32.xlu0 %v3715, 96
  %v3792 = vpop.permute.xlu0 %3791
  %3793 = vrot.lane.b32.xlu0 %v3716, 96
  %v3794 = vpop.permute.xlu0 %3793
  %3795 = vrot.lane.b32.xlu0 %v3717, 96
  %v3796 = vpop.permute.xlu0 %3795
  %3797 = vrot.lane.b32.xlu0 %v3718, 96
  %v3798 = vpop.permute.xlu0 %3797
  %3799 = vrot.lane.b32.xlu0 %v3719, 96
  %v3800 = vpop.permute.xlu0 %3799
  %3801 = vrot.lane.b32.xlu0 %v3720, 96
  %v3802 = vpop.permute.xlu0 %3801
  %3803 = vrot.lane.b32.xlu0 %v3721, 96
  %v3804 = vpop.permute.xlu0 %3803
  %3805 = vrot.lane.b32.xlu0 %v3722, 96
  %v3806 = vpop.permute.xlu0 %3805
  %3807 = vrot.lane.b32.xlu0 %v3723, 96
  %v3808 = vpop.permute.xlu0 %3807
  %3809 = vrot.lane.b32.xlu0 %v3724, 96
  %v3810 = vpop.permute.xlu0 %3809
  %3811 = vrot.lane.b32.xlu0 %v3725, 96
  %v3812 = vpop.permute.xlu0 %3811
  %3813 = vrot.lane.b32.xlu0 %v3726, 96
  %v3814 = vpop.permute.xlu0 %3813
  %3815 = vrot.lane.b32.xlu0 %v3727, 96
  %v3816 = vpop.permute.xlu0 %3815
  %3817 = vrot.lane.b32.xlu0 %v3728, 96
  %v3818 = vpop.permute.xlu0 %3817
  %3819 = vrot.lane.b32.xlu0 %v3729, 96
  %v3820 = vpop.permute.xlu0 %3819
  %3821 = vrot.lane.b32.xlu0 %v3730, 96
  %v3822 = vpop.permute.xlu0 %3821
  %3823 = vrot.lane.b32.xlu0 %v3731, 96
  %v3824 = vpop.permute.xlu0 %3823
  %3825 = vrot.lane.b32.xlu0 %v3732, 96
  %v3826 = vpop.permute.xlu0 %3825
  %3827 = vrot.lane.b32.xlu0 %v3733, 96
  %v3828 = vpop.permute.xlu0 %3827
  %3829 = vrot.lane.b32.xlu0 %v3734, 96
  %v3830 = vpop.permute.xlu0 %3829
  %v3863 = vmul.f32 %v3545, %v3768
  %v3864 = vmul.f32 %v3548, %v3770
  %v3865 = vmul.f32 %v3553, %v3772
  %v3866 = vmul.f32 %v3556, %v3774
  %v3867 = vmul.f32 %v3561, %v3776
  %v3868 = vmul.f32 %v3564, %v3778
  %v3869 = vmul.f32 %v3569, %v3780
  %v3870 = vmul.f32 %v3572, %v3782
  %v3871 = vmul.f32 %v3577, %v3784
  %v3872 = vmul.f32 %v3580, %v3786
  %v3873 = vmul.f32 %v3585, %v3788
  %v3874 = vmul.f32 %v3588, %v3790
  %v3875 = vmul.f32 %v3593, %v3792
  %v3876 = vmul.f32 %v3596, %v3794
  %v3877 = vmul.f32 %v3601, %v3796
  %v3878 = vmul.f32 %v3604, %v3798
  %v3879 = vmul.f32 %v3609, %v3800
  %v3880 = vmul.f32 %v3612, %v3802
  %v3881 = vmul.f32 %v3617, %v3804
  %v3882 = vmul.f32 %v3620, %v3806
  %v3883 = vmul.f32 %v3625, %v3808
  %v3884 = vmul.f32 %v3628, %v3810
  %v3885 = vmul.f32 %v3633, %v3812
  %v3886 = vmul.f32 %v3636, %v3814
  %v3887 = vmul.f32 %v3641, %v3816
  %v3888 = vmul.f32 %v3644, %v3818
  %v3889 = vmul.f32 %v3649, %v3820
  %v3890 = vmul.f32 %v3652, %v3822
  %v3891 = vmul.f32 %v3657, %v3824
  %v3892 = vmul.f32 %v3660, %v3826
  %v3893 = vmul.f32 %v3665, %v3828
  %v3894 = vmul.f32 %v3668, %v3830
  %v3895 = vadd.f32 %v3863, %v3023
  %v3896 = vadd.f32 %v3864, %v3024
  %v3897 = vadd.f32 %v3865, %v3025
  %v3898 = vadd.f32 %v3866, %v3026
  %v3899 = vadd.f32 %v3867, %v3027
  %v3900 = vadd.f32 %v3868, %v3028
  %v3901 = vadd.f32 %v3869, %v3029
  %v3902 = vadd.f32 %v3870, %v3030
  %v3903 = vadd.f32 %v3871, %v3031
  %v3904 = vadd.f32 %v3872, %v3032
  %v3905 = vadd.f32 %v3873, %v3033
  %v3906 = vadd.f32 %v3874, %v3034
  %v3907 = vadd.f32 %v3875, %v3035
  %v3908 = vadd.f32 %v3876, %v3036
  %v3909 = vadd.f32 %v3877, %v3037
  %v3910 = vadd.f32 %v3878, %v3038
  %v3911 = vadd.f32 %v3879, %v3039
  %v3912 = vadd.f32 %v3880, %v3040
  %v3913 = vadd.f32 %v3881, %v3041
  %v3914 = vadd.f32 %v3882, %v3042
  %v3915 = vadd.f32 %v3883, %v3043
  %v3916 = vadd.f32 %v3884, %v3044
  %v3917 = vadd.f32 %v3885, %v3045
  %v3918 = vadd.f32 %v3886, %v3046
  %v3919 = vadd.f32 %v3887, %v3047
  %v3920 = vadd.f32 %v3888, %v3048
  %v3921 = vadd.f32 %v3889, %v3049
  %v3922 = vadd.f32 %v3890, %v3050
  %v3923 = vadd.f32 %v3891, %v3051
  %v3924 = vadd.f32 %v3892, %v3052
  %v3925 = vadd.f32 %v3893, %v3053
  %v3926 = vadd.f32 %v3894, %v3054
  %v3927 = vpack.c.bf16 %v3896, %v3895
  %v3928 = vpack.c.bf16 %v3898, %v3897
  %v3929 = vpack.c.bf16 %v3900, %v3899
  %v3930 = vpack.c.bf16 %v3902, %v3901
  %v3931 = vpack.c.bf16 %v3904, %v3903
  %v3932 = vpack.c.bf16 %v3906, %v3905
  %v3933 = vpack.c.bf16 %v3908, %v3907
  %v3934 = vpack.c.bf16 %v3910, %v3909
  %v3935 = vpack.c.bf16 %v3912, %v3911
  %v3936 = vpack.c.bf16 %v3914, %v3913
  %v3937 = vpack.c.bf16 %v3916, %v3915
  %v3938 = vpack.c.bf16 %v3918, %v3917
  %v3939 = vpack.c.bf16 %v3920, %v3919
  %v3940 = vpack.c.bf16 %v3922, %v3921
  %v3941 = vpack.c.bf16 %v3924, %v3923
  %v3942 = vpack.c.bf16 %v3926, %v3925
  %v3944 = vlaneseq
  %v3945 = vshrl.u32 %v3944, 7
  %v3946 = vsub.s32 0, %v3945
  %v3947 = vrot.slane %v3061, %v3946
  %v3953 = vunpack.c.l.b16 %v3056
  %v3954 = vunpack.c.l.b16 %v3057
  %v3955 = vunpack.c.l.b16 %v3058
  %v3956 = vunpack.c.l.b16 %v3059
  %v3957 = vpack.c.b16 %v3954, %v3953
  %v3958 = vpack.c.b16 %v3956, %v3955
  %v3962 = vsel %vm429, %v3927, 0
  %v3965 = vsel %vm429, %v3928, 0
  %v3968 = vsel %vm429, %v3929, 0
  %v3971 = vsel %vm429, %v3930, 0
  %v3974 = vsel %vm429, %v3931, 0
  %v3977 = vsel %vm429, %v3932, 0
  %v3980 = vsel %vm429, %v3933, 0
  %v3983 = vsel %vm429, %v3934, 0
  %v3986 = vsel %vm429, %v3935, 0
  %v3989 = vsel %vm429, %v3936, 0
  %v3992 = vsel %vm429, %v3937, 0
  %v3995 = vsel %vm429, %v3938, 0
  %v3998 = vsel %vm429, %v3939, 0
  %v4001 = vsel %vm429, %v3940, 0
  %v4004 = vsel %vm429, %v3941, 0
  %v4007 = vsel %vm429, %v3942, 0
  %4009 = vmatprep.subr.bf16.mxu0 0
  %4010 = vmatpush1.bf16.msra.mxu0 %v3957
  %4011 = vmatprep.subr.bf16.mxu0 0
  %4012 = vmatpush1.bf16.msra.mxu0 %v3958
  %4013 = vmatprep.subr.bf16.mxu0 0
  %4014 = vmatpush1.bf16.msra.mxu0 0
  %4015 = vmatprep.subr.bf16.mxu0 0
  %4016 = vmatpush1.bf16.msra.mxu0 0
  %4017 = vmatprep.subr.bf16.mxu0 0
  %4018 = vmatpush1.bf16.msra.mxu0 0
  %4019 = vmatprep.subr.bf16.mxu0 0
  %4020 = vmatpush1.bf16.msra.mxu0 0
  %4021 = vmatprep.subr.bf16.mxu0 0
  %4022 = vmatpush1.bf16.msra.mxu0 0
  %4023 = vmatprep.subr.bf16.mxu0 0
  %4024 = vmatpush1.bf16.msra.mxu0 0
  %4025 = vmatprep.subr.bf16.mxu0 0
  %4026 = vmatpush1.bf16.msra.mxu0 0
  %4027 = vmatprep.subr.bf16.mxu0 0
  %4028 = vmatpush1.bf16.msra.mxu0 0
  %4029 = vmatprep.subr.bf16.mxu0 0
  %4030 = vmatpush1.bf16.msra.mxu0 0
  %4031 = vmatprep.subr.bf16.mxu0 0
  %4032 = vmatpush1.bf16.msra.mxu0 0
  %4033 = vmatprep.subr.bf16.mxu0 0
  %4034 = vmatpush1.bf16.msra.mxu0 0
  %4035 = vmatprep.subr.bf16.mxu0 0
  %4036 = vmatpush1.bf16.msra.mxu0 0
  %4037 = vmatprep.subr.bf16.mxu0 0
  %4038 = vmatpush1.bf16.msra.mxu0 0
  %4039 = vmatprep.subr.bf16.mxu0 0
  %4040 = vmatpush1.bf16.msra.mxu0 0
  %4041 = vmatprep.mubr.bf16.mxu0 0
  %4042 = vmatmul.mubr.bf16.gmra.mrb[0].mxu0 %v3962
  %v4043 = vpop.f32.mrb[0].mxu0
  %v4044 = vadd.f32 %v3947, %v4043
  %v4045 = vpop.f32.mrb[0].mxu0
  %v4046 = vpop.f32.mrb[0].mxu0
  %v4047 = vadd.f32 %v3947, %v4046
  %v4048 = vpop.f32.mrb[0].mxu0
  %4049 = vmatprep.mubr.bf16.mxu0 0
  %4050 = vmatmul.mubr.bf16.gmra.mrb[0].mxu0 %v3965
  %v4051 = vpop.f32.mrb[0].mxu0
  %v4052 = vadd.f32 %v3947, %v4051
  %v4053 = vpop.f32.mrb[0].mxu0
  %v4054 = vpop.f32.mrb[0].mxu0
  %v4055 = vadd.f32 %v3947, %v4054
  %v4056 = vpop.f32.mrb[0].mxu0
  %4057 = vmatprep.mubr.bf16.mxu0 0
  %4058 = vmatmul.mubr.bf16.gmra.mrb[0].mxu0 %v3968
  %v4059 = vpop.f32.mrb[0].mxu0
  %v4060 = vadd.f32 %v3947, %v4059
  %v4061 = vpop.f32.mrb[0].mxu0
  %v4062 = vpop.f32.mrb[0].mxu0
  %v4063 = vadd.f32 %v3947, %v4062
  %v4064 = vpop.f32.mrb[0].mxu0
  %4065 = vmatprep.mubr.bf16.mxu0 0
  %4066 = vmatmul.mubr.bf16.gmra.mrb[0].mxu0 %v3971
  %v4067 = vpop.f32.mrb[0].mxu0
  %v4068 = vadd.f32 %v3947, %v4067
  %v4069 = vpop.f32.mrb[0].mxu0
  %v4070 = vpop.f32.mrb[0].mxu0
  %v4071 = vadd.f32 %v3947, %v4070
  %v4072 = vpop.f32.mrb[0].mxu0
  %4073 = vmatprep.mubr.bf16.mxu0 0
  %4074 = vmatmul.mubr.bf16.gmra.mrb[0].mxu0 %v3974
  %v4075 = vpop.f32.mrb[0].mxu0
  %v4076 = vadd.f32 %v3947, %v4075
  %v4077 = vpop.f32.mrb[0].mxu0
  %v4078 = vpop.f32.mrb[0].mxu0
  %v4079 = vadd.f32 %v3947, %v4078
  %v4080 = vpop.f32.mrb[0].mxu0
  %4081 = vmatprep.mubr.bf16.mxu0 0
  %4082 = vmatmul.mubr.bf16.gmra.mrb[0].mxu0 %v3977
  %v4083 = vpop.f32.mrb[0].mxu0
  %v4084 = vadd.f32 %v3947, %v4083
  %v4085 = vpop.f32.mrb[0].mxu0
  %v4086 = vpop.f32.mrb[0].mxu0
  %v4087 = vadd.f32 %v3947, %v4086
  %v4088 = vpop.f32.mrb[0].mxu0
  %4089 = vmatprep.mubr.bf16.mxu0 0
  %4090 = vmatmul.mubr.bf16.gmra.mrb[0].mxu0 %v3980
  %v4091 = vpop.f32.mrb[0].mxu0
  %v4092 = vadd.f32 %v3947, %v4091
  %v4093 = vpop.f32.mrb[0].mxu0
  %v4094 = vpop.f32.mrb[0].mxu0
  %v4095 = vadd.f32 %v3947, %v4094
  %v4096 = vpop.f32.mrb[0].mxu0
  %4097 = vmatprep.mubr.bf16.mxu0 0
  %4098 = vmatmul.mubr.bf16.gmra.mrb[0].mxu0 %v3983
  %v4099 = vpop.f32.mrb[0].mxu0
  %v4100 = vadd.f32 %v3947, %v4099
  %v4101 = vpop.f32.mrb[0].mxu0
  %v4102 = vpop.f32.mrb[0].mxu0
  %v4103 = vadd.f32 %v3947, %v4102
  %v4104 = vpop.f32.mrb[0].mxu0
  %4105 = vmatprep.mubr.bf16.mxu0 0
  %4106 = vmatmul.mubr.bf16.gmra.mrb[0].mxu0 %v3986
  %v4107 = vpop.f32.mrb[0].mxu0
  %v4108 = vadd.f32 %v3947, %v4107
  %v4109 = vpop.f32.mrb[0].mxu0
  %v4110 = vpop.f32.mrb[0].mxu0
  %v4111 = vadd.f32 %v3947, %v4110
  %v4112 = vpop.f32.mrb[0].mxu0
  %4113 = vmatprep.mubr.bf16.mxu0 0
  %4114 = vmatmul.mubr.bf16.gmra.mrb[0].mxu0 %v3989
  %v4115 = vpop.f32.mrb[0].mxu0
  %v4116 = vadd.f32 %v3947, %v4115
  %v4117 = vpop.f32.mrb[0].mxu0
  %v4118 = vpop.f32.mrb[0].mxu0
  %v4119 = vadd.f32 %v3947, %v4118
  %v4120 = vpop.f32.mrb[0].mxu0
  %4121 = vmatprep.mubr.bf16.mxu0 0
  %4122 = vmatmul.mubr.bf16.gmra.mrb[0].mxu0 %v3992
  %v4123 = vpop.f32.mrb[0].mxu0
  %v4124 = vadd.f32 %v3947, %v4123
  %v4125 = vpop.f32.mrb[0].mxu0
  %v4126 = vpop.f32.mrb[0].mxu0
  %v4127 = vadd.f32 %v3947, %v4126
  %v4128 = vpop.f32.mrb[0].mxu0
  %4129 = vmatprep.mubr.bf16.mxu0 0
  %4130 = vmatmul.mubr.bf16.gmra.mrb[0].mxu0 %v3995
  %v4131 = vpop.f32.mrb[0].mxu0
  %v4132 = vadd.f32 %v3947, %v4131
  %v4133 = vpop.f32.mrb[0].mxu0
  %v4134 = vpop.f32.mrb[0].mxu0
  %v4135 = vadd.f32 %v3947, %v4134
  %v4136 = vpop.f32.mrb[0].mxu0
  %4137 = vmatprep.mubr.bf16.mxu0 0
  %4138 = vmatmul.mubr.bf16.gmra.mrb[0].mxu0 %v3998
  %v4139 = vpop.f32.mrb[0].mxu0
  %v4140 = vadd.f32 %v3947, %v4139
  %v4141 = vpop.f32.mrb[0].mxu0
  %v4142 = vpop.f32.mrb[0].mxu0
  %v4143 = vadd.f32 %v3947, %v4142
  %v4144 = vpop.f32.mrb[0].mxu0
  %4145 = vmatprep.mubr.bf16.mxu0 0
  %4146 = vmatmul.mubr.bf16.gmra.mrb[0].mxu0 %v4001
  %v4147 = vpop.f32.mrb[0].mxu0
  %v4148 = vadd.f32 %v3947, %v4147
  %v4149 = vpop.f32.mrb[0].mxu0
  %v4150 = vpop.f32.mrb[0].mxu0
  %v4151 = vadd.f32 %v3947, %v4150
  %v4152 = vpop.f32.mrb[0].mxu0
  %4153 = vmatprep.mubr.bf16.mxu0 0
  %4154 = vmatmul.mubr.bf16.gmra.mrb[0].mxu0 %v4004
  %v4155 = vpop.f32.mrb[0].mxu0
  %v4156 = vadd.f32 %v3947, %v4155
  %v4157 = vpop.f32.mrb[0].mxu0
  %v4158 = vpop.f32.mrb[0].mxu0
  %v4159 = vadd.f32 %v3947, %v4158
  %v4160 = vpop.f32.mrb[0].mxu0
  %4161 = vmatprep.mubr.bf16.mxu0 0
  %4162 = vmatmul.mubr.bf16.gmra.mrb[0].mxu0 %v4007
  %v4163 = vpop.f32.mrb[0].mxu0
  %v4164 = vadd.f32 %v3947, %v4163
  %v4165 = vpop.f32.mrb[0].mxu0
  %v4166 = vpop.f32.mrb[0].mxu0
  %v4167 = vadd.f32 %v3947, %v4166
  %v4168 = vpop.f32.mrb[0].mxu0
  %4169 = vdwg.mxu0
  %v4170 = vsel %vm2098, %v4044, 0.0
  %v4171 = vsel %vm2098, %v4047, 0.0
  %v4172 = vadd.f32 %v4170, %v4171
  %v4173 = vsel %vm2098, %v4052, 0.0
  %v4174 = vadd.f32 %v4172, %v4173
  %v4175 = vsel %vm2098, %v4055, 0.0
  %v4176 = vadd.f32 %v4174, %v4175
  %v4177 = vsel %vm2098, %v4060, 0.0
  %v4178 = vadd.f32 %v4176, %v4177
  %v4179 = vsel %vm2098, %v4063, 0.0
  %v4180 = vadd.f32 %v4178, %v4179
  %v4181 = vsel %vm2098, %v4068, 0.0
  %v4182 = vadd.f32 %v4180, %v4181
  %v4183 = vsel %vm2098, %v4071, 0.0
  %v4184 = vadd.f32 %v4182, %v4183
  %v4185 = vsel %vm2098, %v4076, 0.0
  %v4186 = vadd.f32 %v4184, %v4185
  %v4187 = vsel %vm2098, %v4079, 0.0
  %v4188 = vadd.f32 %v4186, %v4187
  %v4189 = vsel %vm2098, %v4084, 0.0
  %v4190 = vadd.f32 %v4188, %v4189
  %v4191 = vsel %vm2098, %v4087, 0.0
  %v4192 = vadd.f32 %v4190, %v4191
  %v4193 = vsel %vm2098, %v4092, 0.0
  %v4194 = vadd.f32 %v4192, %v4193
  %v4195 = vsel %vm2098, %v4095, 0.0
  %v4196 = vadd.f32 %v4194, %v4195
  %v4197 = vsel %vm2098, %v4100, 0.0
  %v4198 = vadd.f32 %v4196, %v4197
  %v4199 = vsel %vm2098, %v4103, 0.0
  %v4200 = vadd.f32 %v4198, %v4199
  %v4201 = vsel %vm2098, %v4108, 0.0
  %v4202 = vadd.f32 %v4200, %v4201
  %v4203 = vsel %vm2098, %v4111, 0.0
  %v4204 = vadd.f32 %v4202, %v4203
  %v4205 = vsel %vm2098, %v4116, 0.0
  %v4206 = vadd.f32 %v4204, %v4205
  %v4207 = vsel %vm2098, %v4119, 0.0
  %v4208 = vadd.f32 %v4206, %v4207
  %v4209 = vsel %vm2098, %v4124, 0.0
  %v4210 = vadd.f32 %v4208, %v4209
  %v4211 = vsel %vm2098, %v4127, 0.0
  %v4212 = vadd.f32 %v4210, %v4211
  %v4213 = vsel %vm2098, %v4132, 0.0
  %v4214 = vadd.f32 %v4212, %v4213
  %v4215 = vsel %vm2098, %v4135, 0.0
  %v4216 = vadd.f32 %v4214, %v4215
  %v4217 = vsel %vm2098, %v4140, 0.0
  %v4218 = vadd.f32 %v4216, %v4217
  %v4219 = vsel %vm2098, %v4143, 0.0
  %v4220 = vadd.f32 %v4218, %v4219
  %v4221 = vsel %vm2098, %v4148, 0.0
  %v4222 = vadd.f32 %v4220, %v4221
  %v4223 = vsel %vm2098, %v4151, 0.0
  %v4224 = vadd.f32 %v4222, %v4223
  %v4225 = vsel %vm2098, %v4156, 0.0
  %v4226 = vadd.f32 %v4224, %v4225
  %v4227 = vsel %vm2098, %v4159, 0.0
  %v4228 = vadd.f32 %v4226, %v4227
  %v4229 = vsel %vm2098, %v4164, 0.0
  %v4230 = vadd.f32 %v4228, %v4229
  %v4231 = vsel %vm2098, %v4167, 0.0
  %v4232 = vadd.f32 %v4230, %v4231
  %v4233 = vrot.slane %v4232, 4
  %v4234 = vadd.f32 %v4232, %v4233
  %v4235 = vrot.slane %v4234, 2
  %v4236 = vadd.f32 %v4234, %v4235
  %v4237 = vrot.slane %v4236, 1
  %v4238 = vadd.f32 %v4236, %v4237
  %v4239 = vmul.f32 %v4238, %v2168
  %v4240 = vsub.f32 %v4044, %v4239
  %v4241 = vsub.f32 %v4047, %v4239
  %v4242 = vsub.f32 %v4052, %v4239
  %v4243 = vsub.f32 %v4055, %v4239
  %v4244 = vsub.f32 %v4060, %v4239
  %v4245 = vsub.f32 %v4063, %v4239
  %v4246 = vsub.f32 %v4068, %v4239
  %v4247 = vsub.f32 %v4071, %v4239
  %v4248 = vsub.f32 %v4076, %v4239
  %v4249 = vsub.f32 %v4079, %v4239
  %v4250 = vsub.f32 %v4084, %v4239
  %v4251 = vsub.f32 %v4087, %v4239
  %v4252 = vsub.f32 %v4092, %v4239
  %v4253 = vsub.f32 %v4095, %v4239
  %v4254 = vsub.f32 %v4100, %v4239
  %v4255 = vsub.f32 %v4103, %v4239
  %v4256 = vsub.f32 %v4108, %v4239
  %v4257 = vsub.f32 %v4111, %v4239
  %v4258 = vsub.f32 %v4116, %v4239
  %v4259 = vsub.f32 %v4119, %v4239
  %v4260 = vsub.f32 %v4124, %v4239
  %v4261 = vsub.f32 %v4127, %v4239
  %v4262 = vsub.f32 %v4132, %v4239
  %v4263 = vsub.f32 %v4135, %v4239
  %v4264 = vsub.f32 %v4140, %v4239
  %v4265 = vsub.f32 %v4143, %v4239
  %v4266 = vsub.f32 %v4148, %v4239
  %v4267 = vsub.f32 %v4151, %v4239
  %v4268 = vsub.f32 %v4156, %v4239
  %v4269 = vsub.f32 %v4159, %v4239
  %v4270 = vsub.f32 %v4164, %v4239
  %v4271 = vsub.f32 %v4167, %v4239
  %v4272 = vmul.f32 %v4240, %v4240
  %v4273 = vmul.f32 %v4241, %v4241
  %v4274 = vmul.f32 %v4242, %v4242
  %v4275 = vmul.f32 %v4243, %v4243
  %v4276 = vmul.f32 %v4244, %v4244
  %v4277 = vmul.f32 %v4245, %v4245
  %v4278 = vmul.f32 %v4246, %v4246
  %v4279 = vmul.f32 %v4247, %v4247
  %v4280 = vmul.f32 %v4248, %v4248
  %v4281 = vmul.f32 %v4249, %v4249
  %v4282 = vmul.f32 %v4250, %v4250
  %v4283 = vmul.f32 %v4251, %v4251
  %v4284 = vmul.f32 %v4252, %v4252
  %v4285 = vmul.f32 %v4253, %v4253
  %v4286 = vmul.f32 %v4254, %v4254
  %v4287 = vmul.f32 %v4255, %v4255
  %v4288 = vmul.f32 %v4256, %v4256
  %v4289 = vmul.f32 %v4257, %v4257
  %v4290 = vmul.f32 %v4258, %v4258
  %v4291 = vmul.f32 %v4259, %v4259
  %v4292 = vmul.f32 %v4260, %v4260
  %v4293 = vmul.f32 %v4261, %v4261
  %v4294 = vmul.f32 %v4262, %v4262
  %v4295 = vmul.f32 %v4263, %v4263
  %v4296 = vmul.f32 %v4264, %v4264
  %v4297 = vmul.f32 %v4265, %v4265
  %v4298 = vmul.f32 %v4266, %v4266
  %v4299 = vmul.f32 %v4267, %v4267
  %v4300 = vmul.f32 %v4268, %v4268
  %v4301 = vmul.f32 %v4269, %v4269
  %v4302 = vmul.f32 %v4270, %v4270
  %v4303 = vmul.f32 %v4271, %v4271
  %v4304 = vsel %vm2098, %v4272, 0.0
  %v4305 = vsel %vm2098, %v4273, 0.0
  %v4306 = vadd.f32 %v4304, %v4305
  %v4307 = vsel %vm2098, %v4274, 0.0
  %v4308 = vadd.f32 %v4306, %v4307
  %v4309 = vsel %vm2098, %v4275, 0.0
  %v4310 = vadd.f32 %v4308, %v4309
  %v4311 = vsel %vm2098, %v4276, 0.0
  %v4312 = vadd.f32 %v4310, %v4311
  %v4313 = vsel %vm2098, %v4277, 0.0
  %v4314 = vadd.f32 %v4312, %v4313
  %v4315 = vsel %vm2098, %v4278, 0.0
  %v4316 = vadd.f32 %v4314, %v4315
  %v4317 = vsel %vm2098, %v4279, 0.0
  %v4318 = vadd.f32 %v4316, %v4317
  %v4319 = vsel %vm2098, %v4280, 0.0
  %v4320 = vadd.f32 %v4318, %v4319
  %v4321 = vsel %vm2098, %v4281, 0.0
  %v4322 = vadd.f32 %v4320, %v4321
  %v4323 = vsel %vm2098, %v4282, 0.0
  %v4324 = vadd.f32 %v4322, %v4323
  %v4325 = vsel %vm2098, %v4283, 0.0
  %v4326 = vadd.f32 %v4324, %v4325
  %v4327 = vsel %vm2098, %v4284, 0.0
  %v4328 = vadd.f32 %v4326, %v4327
  %v4329 = vsel %vm2098, %v4285, 0.0
  %v4330 = vadd.f32 %v4328, %v4329
  %v4331 = vsel %vm2098, %v4286, 0.0
  %v4332 = vadd.f32 %v4330, %v4331
  %v4333 = vsel %vm2098, %v4287, 0.0
  %v4334 = vadd.f32 %v4332, %v4333
  %v4335 = vsel %vm2098, %v4288, 0.0
  %v4336 = vadd.f32 %v4334, %v4335
  %v4337 = vsel %vm2098, %v4289, 0.0
  %v4338 = vadd.f32 %v4336, %v4337
  %v4339 = vsel %vm2098, %v4290, 0.0
  %v4340 = vadd.f32 %v4338, %v4339
  %v4341 = vsel %vm2098, %v4291, 0.0
  %v4342 = vadd.f32 %v4340, %v4341
  %v4343 = vsel %vm2098, %v4292, 0.0
  %v4344 = vadd.f32 %v4342, %v4343
  %v4345 = vsel %vm2098, %v4293, 0.0
  %v4346 = vadd.f32 %v4344, %v4345
  %v4347 = vsel %vm2098, %v4294, 0.0
  %v4348 = vadd.f32 %v4346, %v4347
  %v4349 = vsel %vm2098, %v4295, 0.0
  %v4350 = vadd.f32 %v4348, %v4349
  %v4351 = vsel %vm2098, %v4296, 0.0
  %v4352 = vadd.f32 %v4350, %v4351
  %v4353 = vsel %vm2098, %v4297, 0.0
  %v4354 = vadd.f32 %v4352, %v4353
  %v4355 = vsel %vm2098, %v4298, 0.0
  %v4356 = vadd.f32 %v4354, %v4355
  %v4357 = vsel %vm2098, %v4299, 0.0
  %v4358 = vadd.f32 %v4356, %v4357
  %v4359 = vsel %vm2098, %v4300, 0.0
  %v4360 = vadd.f32 %v4358, %v4359
  %v4361 = vsel %vm2098, %v4301, 0.0
  %v4362 = vadd.f32 %v4360, %v4361
  %v4363 = vsel %vm2098, %v4302, 0.0
  %v4364 = vadd.f32 %v4362, %v4363
  %v4365 = vsel %vm2098, %v4303, 0.0
  %v4366 = vadd.f32 %v4364, %v4365
  %v4367 = vrot.slane %v4366, 4
  %v4368 = vadd.f32 %v4366, %v4367
  %v4369 = vrot.slane %v4368, 2
  %v4370 = vadd.f32 %v4368, %v4369
  %v4371 = vrot.slane %v4370, 1
  %v4372 = vadd.f32 %v4370, %v4371
  %v4373 = vmul.f32 %v4372, %v2168
  %v4374 = vadd.f32 %v4373, 1e-05
  %v4375 = vrsqrt.pop %v4374
  %v4376 = vmul.f32 %v4240, %v4375
  %v4377 = vmul.f32 %v4241, %v4375
  %v4378 = vmul.f32 %v4242, %v4375
  %v4379 = vmul.f32 %v4243, %v4375
  %v4380 = vmul.f32 %v4244, %v4375
  %v4381 = vmul.f32 %v4245, %v4375
  %v4382 = vmul.f32 %v4246, %v4375
  %v4383 = vmul.f32 %v4247, %v4375
  %v4384 = vmul.f32 %v4248, %v4375
  %v4385 = vmul.f32 %v4249, %v4375
  %v4386 = vmul.f32 %v4250, %v4375
  %v4387 = vmul.f32 %v4251, %v4375
  %v4388 = vmul.f32 %v4252, %v4375
  %v4389 = vmul.f32 %v4253, %v4375
  %v4390 = vmul.f32 %v4254, %v4375
  %v4391 = vmul.f32 %v4255, %v4375
  %v4392 = vmul.f32 %v4256, %v4375
  %v4393 = vmul.f32 %v4257, %v4375
  %v4394 = vmul.f32 %v4258, %v4375
  %v4395 = vmul.f32 %v4259, %v4375
  %v4396 = vmul.f32 %v4260, %v4375
  %v4397 = vmul.f32 %v4261, %v4375
  %v4398 = vmul.f32 %v4262, %v4375
  %v4399 = vmul.f32 %v4263, %v4375
  %v4400 = vmul.f32 %v4264, %v4375
  %v4401 = vmul.f32 %v4265, %v4375
  %v4402 = vmul.f32 %v4266, %v4375
  %v4403 = vmul.f32 %v4267, %v4375
  %v4404 = vmul.f32 %v4268, %v4375
  %v4405 = vmul.f32 %v4269, %v4375
  %v4406 = vmul.f32 %v4270, %v4375
  %v4407 = vmul.f32 %v4271, %v4375
  %v4408 = vmax.f32 %v4376, 0.0
  %v4409 = vmax.f32 %v4377, 0.0
  %v4410 = vmax.f32 %v4378, 0.0
  %v4411 = vmax.f32 %v4379, 0.0
  %v4412 = vmax.f32 %v4380, 0.0
  %v4413 = vmax.f32 %v4381, 0.0
  %v4414 = vmax.f32 %v4382, 0.0
  %v4415 = vmax.f32 %v4383, 0.0
  %v4416 = vmax.f32 %v4384, 0.0
  %v4417 = vmax.f32 %v4385, 0.0
  %v4418 = vmax.f32 %v4386, 0.0
  %v4419 = vmax.f32 %v4387, 0.0
  %v4420 = vmax.f32 %v4388, 0.0
  %v4421 = vmax.f32 %v4389, 0.0
  %v4422 = vmax.f32 %v4390, 0.0
  %v4423 = vmax.f32 %v4391, 0.0
  %v4424 = vmax.f32 %v4392, 0.0
  %v4425 = vmax.f32 %v4393, 0.0
  %v4426 = vmax.f32 %v4394, 0.0
  %v4427 = vmax.f32 %v4395, 0.0
  %v4428 = vmax.f32 %v4396, 0.0
  %v4429 = vmax.f32 %v4397, 0.0
  %v4430 = vmax.f32 %v4398, 0.0
  %v4431 = vmax.f32 %v4399, 0.0
  %v4432 = vmax.f32 %v4400, 0.0
  %v4433 = vmax.f32 %v4401, 0.0
  %v4434 = vmax.f32 %v4402, 0.0
  %v4435 = vmax.f32 %v4403, 0.0
  %v4436 = vmax.f32 %v4404, 0.0
  %v4437 = vmax.f32 %v4405, 0.0
  %v4438 = vmax.f32 %v4406, 0.0
  %v4439 = vmax.f32 %v4407, 0.0
  %v4440 = vpack.c.bf16 %v4409, %v4408
  %v4441 = vpack.c.bf16 %v4411, %v4410
  %v4442 = vpack.c.bf16 %v4413, %v4412
  %v4443 = vpack.c.bf16 %v4415, %v4414
  %v4444 = vpack.c.bf16 %v4417, %v4416
  %v4445 = vpack.c.bf16 %v4419, %v4418
  %v4446 = vpack.c.bf16 %v4421, %v4420
  %v4447 = vpack.c.bf16 %v4423, %v4422
  %v4448 = vpack.c.bf16 %v4425, %v4424
  %v4449 = vpack.c.bf16 %v4427, %v4426
  %v4450 = vpack.c.bf16 %v4429, %v4428
  %v4451 = vpack.c.bf16 %v4431, %v4430
  %v4452 = vpack.c.bf16 %v4433, %v4432
  %v4453 = vpack.c.bf16 %v4435, %v4434
  %v4454 = vpack.c.bf16 %v4437, %v4436
  %v4455 = vpack.c.bf16 %v4439, %v4438
  %v4457 = vlaneseq
  %v4458 = vshrl.u32 %v4457, 7
  %v4459 = vsub.s32 0, %v4458
  %v4460 = vrot.slane %v3072, %v4459
  %v4470 = vunpack.c.l.b16 %v3063
  %v4471 = vunpack.c.l.b16 %v3064
  %v4472 = vunpack.c.l.b16 %v3065
  %v4473 = vunpack.c.l.b16 %v3066
  %v4474 = vunpack.c.l.b16 %v3067
  %v4475 = vunpack.c.l.b16 %v3068
  %v4476 = vunpack.c.l.b16 %v3069
  %v4477 = vunpack.c.l.b16 %v3070
  %v4478 = vpack.c.b16 %v4471, %v4470
  %v4479 = vpack.c.b16 %v4473, %v4472
  %v4480 = vpack.c.b16 %v4475, %v4474
  %v4481 = vpack.c.b16 %v4477, %v4476
  %v4487 = vsel %vm2098, %v4440, 0
  %v4490 = vsel %vm2098, %v4441, 0
  %v4493 = vsel %vm2098, %v4442, 0
  %v4496 = vsel %vm2098, %v4443, 0
  %v4499 = vsel %vm2098, %v4444, 0
  %v4502 = vsel %vm2098, %v4445, 0
  %v4505 = vsel %vm2098, %v4446, 0
  %v4508 = vsel %vm2098, %v4447, 0
  %v4511 = vsel %vm2098, %v4448, 0
  %v4514 = vsel %vm2098, %v4449, 0
  %v4517 = vsel %vm2098, %v4450, 0
  %v4520 = vsel %vm2098, %v4451, 0
  %v4523 = vsel %vm2098, %v4452, 0
  %v4526 = vsel %vm2098, %v4453, 0
  %v4529 = vsel %vm2098, %v4454, 0
  %v4532 = vsel %vm2098, %v4455, 0
  %4534 = vmatprep.subr.bf16.mxu0 0
  %4535 = vmatpush1.bf16.msra.mxu0 %v4478
  %4536 = vmatprep.subr.bf16.mxu0 0
  %4537 = vmatpush1.bf16.msra.mxu0 %v4479
  %4538 = vmatprep.subr.bf16.mxu0 0
  %4539 = vmatpush1.bf16.msra.mxu0 %v4480
  %4540 = vmatprep.subr.bf16.mxu0 0
  %4541 = vmatpush1.bf16.msra.mxu0 %v4481
  %4542 = vmatprep.subr.bf16.mxu0 0
  %4543 = vmatpush1.bf16.msra.mxu0 0
  %4544 = vmatprep.subr.bf16.mxu0 0
  %4545 = vmatpush1.bf16.msra.mxu0 0
  %4546 = vmatprep.subr.bf16.mxu0 0
  %4547 = vmatpush1.bf16.msra.mxu0 0
  %4548 = vmatprep.subr.bf16.mxu0 0
  %4549 = vmatpush1.bf16.msra.mxu0 0
  %4550 = vmatprep.subr.bf16.mxu0 0
  %4551 = vmatpush1.bf16.msra.mxu0 0
  %4552 = vmatprep.subr.bf16.mxu0 0
  %4553 = vmatpush1.bf16.msra.mxu0 0
  %4554 = vmatprep.subr.bf16.mxu0 0
  %4555 = vmatpush1.bf16.msra.mxu0 0
  %4556 = vmatprep.subr.bf16.mxu0 0
  %4557 = vmatpush1.bf16.msra.mxu0 0
  %4558 = vmatprep.subr.bf16.mxu0 0
  %4559 = vmatpush1.bf16.msra.mxu0 0
  %4560 = vmatprep.subr.bf16.mxu0 0
  %4561 = vmatpush1.bf16.msra.mxu0 0
  %4562 = vmatprep.subr.bf16.mxu0 0
  %4563 = vmatpush1.bf16.msra.mxu0 0
  %4564 = vmatprep.subr.bf16.mxu0 0
  %4565 = vmatpush1.bf16.msra.mxu0 0
  %4566 = vmatprep.mubr.bf16.mxu0 0
  %4567 = vmatmul.mubr.bf16.gmra.mrb[0].mxu0 %v4487
  %v4568 = vpop.f32.mrb[0].mxu0
  %v4569 = vadd.f32 %v4460, %v4568
  %v4570 = vpop.f32.mrb[0].mxu0
  %v4571 = vpop.f32.mrb[0].mxu0
  %v4572 = vadd.f32 %v4460, %v4571
  %v4573 = vpop.f32.mrb[0].mxu0
  %4574 = vmatprep.mubr.bf16.mxu0 0
  %4575 = vmatmul.mubr.bf16.gmra.mrb[0].mxu0 %v4490
  %v4576 = vpop.f32.mrb[0].mxu0
  %v4577 = vadd.f32 %v4460, %v4576
  %v4578 = vpop.f32.mrb[0].mxu0
  %v4579 = vpop.f32.mrb[0].mxu0
  %v4580 = vadd.f32 %v4460, %v4579
  %v4581 = vpop.f32.mrb[0].mxu0
  %4582 = vmatprep.mubr.bf16.mxu0 0
  %4583 = vmatmul.mubr.bf16.gmra.mrb[0].mxu0 %v4493
  %v4584 = vpop.f32.mrb[0].mxu0
  %v4585 = vadd.f32 %v4460, %v4584
  %v4586 = vpop.f32.mrb[0].mxu0
  %v4587 = vpop.f32.mrb[0].mxu0
  %v4588 = vadd.f32 %v4460, %v4587
  %v4589 = vpop.f32.mrb[0].mxu0
  %4590 = vmatprep.mubr.bf16.mxu0 0
  %4591 = vmatmul.mubr.bf16.gmra.mrb[0].mxu0 %v4496
  %v4592 = vpop.f32.mrb[0].mxu0
  %v4593 = vadd.f32 %v4460, %v4592
  %v4594 = vpop.f32.mrb[0].mxu0
  %v4595 = vpop.f32.mrb[0].mxu0
  %v4596 = vadd.f32 %v4460, %v4595
  %v4597 = vpop.f32.mrb[0].mxu0
  %4598 = vmatprep.mubr.bf16.mxu0 0
  %4599 = vmatmul.mubr.bf16.gmra.mrb[0].mxu0 %v4499
  %v4600 = vpop.f32.mrb[0].mxu0
  %v4601 = vadd.f32 %v4460, %v4600
  %v4602 = vpop.f32.mrb[0].mxu0
  %v4603 = vpop.f32.mrb[0].mxu0
  %v4604 = vadd.f32 %v4460, %v4603
  %v4605 = vpop.f32.mrb[0].mxu0
  %4606 = vmatprep.mubr.bf16.mxu0 0
  %4607 = vmatmul.mubr.bf16.gmra.mrb[0].mxu0 %v4502
  %v4608 = vpop.f32.mrb[0].mxu0
  %v4609 = vadd.f32 %v4460, %v4608
  %v4610 = vpop.f32.mrb[0].mxu0
  %v4611 = vpop.f32.mrb[0].mxu0
  %v4612 = vadd.f32 %v4460, %v4611
  %v4613 = vpop.f32.mrb[0].mxu0
  %4614 = vmatprep.mubr.bf16.mxu0 0
  %4615 = vmatmul.mubr.bf16.gmra.mrb[0].mxu0 %v4505
  %v4616 = vpop.f32.mrb[0].mxu0
  %v4617 = vadd.f32 %v4460, %v4616
  %v4618 = vpop.f32.mrb[0].mxu0
  %v4619 = vpop.f32.mrb[0].mxu0
  %v4620 = vadd.f32 %v4460, %v4619
  %v4621 = vpop.f32.mrb[0].mxu0
  %4622 = vmatprep.mubr.bf16.mxu0 0
  %4623 = vmatmul.mubr.bf16.gmra.mrb[0].mxu0 %v4508
  %v4624 = vpop.f32.mrb[0].mxu0
  %v4625 = vadd.f32 %v4460, %v4624
  %v4626 = vpop.f32.mrb[0].mxu0
  %v4627 = vpop.f32.mrb[0].mxu0
  %v4628 = vadd.f32 %v4460, %v4627
  %v4629 = vpop.f32.mrb[0].mxu0
  %4630 = vmatprep.mubr.bf16.mxu0 0
  %4631 = vmatmul.mubr.bf16.gmra.mrb[0].mxu0 %v4511
  %v4632 = vpop.f32.mrb[0].mxu0
  %v4633 = vadd.f32 %v4460, %v4632
  %v4634 = vpop.f32.mrb[0].mxu0
  %v4635 = vpop.f32.mrb[0].mxu0
  %v4636 = vadd.f32 %v4460, %v4635
  %v4637 = vpop.f32.mrb[0].mxu0
  %4638 = vmatprep.mubr.bf16.mxu0 0
  %4639 = vmatmul.mubr.bf16.gmra.mrb[0].mxu0 %v4514
  %v4640 = vpop.f32.mrb[0].mxu0
  %v4641 = vadd.f32 %v4460, %v4640
  %v4642 = vpop.f32.mrb[0].mxu0
  %v4643 = vpop.f32.mrb[0].mxu0
  %v4644 = vadd.f32 %v4460, %v4643
  %v4645 = vpop.f32.mrb[0].mxu0
  %4646 = vmatprep.mubr.bf16.mxu0 0
  %4647 = vmatmul.mubr.bf16.gmra.mrb[0].mxu0 %v4517
  %v4648 = vpop.f32.mrb[0].mxu0
  %v4649 = vadd.f32 %v4460, %v4648
  %v4650 = vpop.f32.mrb[0].mxu0
  %v4651 = vpop.f32.mrb[0].mxu0
  %v4652 = vadd.f32 %v4460, %v4651
  %v4653 = vpop.f32.mrb[0].mxu0
  %4654 = vmatprep.mubr.bf16.mxu0 0
  %4655 = vmatmul.mubr.bf16.gmra.mrb[0].mxu0 %v4520
  %v4656 = vpop.f32.mrb[0].mxu0
  %v4657 = vadd.f32 %v4460, %v4656
  %v4658 = vpop.f32.mrb[0].mxu0
  %v4659 = vpop.f32.mrb[0].mxu0
  %v4660 = vadd.f32 %v4460, %v4659
  %v4661 = vpop.f32.mrb[0].mxu0
  %4662 = vmatprep.mubr.bf16.mxu0 0
  %4663 = vmatmul.mubr.bf16.gmra.mrb[0].mxu0 %v4523
  %v4664 = vpop.f32.mrb[0].mxu0
  %v4665 = vadd.f32 %v4460, %v4664
  %v4666 = vpop.f32.mrb[0].mxu0
  %v4667 = vpop.f32.mrb[0].mxu0
  %v4668 = vadd.f32 %v4460, %v4667
  %v4669 = vpop.f32.mrb[0].mxu0
  %4670 = vmatprep.mubr.bf16.mxu0 0
  %4671 = vmatmul.mubr.bf16.gmra.mrb[0].mxu0 %v4526
  %v4672 = vpop.f32.mrb[0].mxu0
  %v4673 = vadd.f32 %v4460, %v4672
  %v4674 = vpop.f32.mrb[0].mxu0
  %v4675 = vpop.f32.mrb[0].mxu0
  %v4676 = vadd.f32 %v4460, %v4675
  %v4677 = vpop.f32.mrb[0].mxu0
  %4678 = vmatprep.mubr.bf16.mxu0 0
  %4679 = vmatmul.mubr.bf16.gmra.mrb[0].mxu0 %v4529
  %v4680 = vpop.f32.mrb[0].mxu0
  %v4681 = vadd.f32 %v4460, %v4680
  %v4682 = vpop.f32.mrb[0].mxu0
  %v4683 = vpop.f32.mrb[0].mxu0
  %v4684 = vadd.f32 %v4460, %v4683
  %v4685 = vpop.f32.mrb[0].mxu0
  %4686 = vmatprep.mubr.bf16.mxu0 0
  %4687 = vmatmul.mubr.bf16.gmra.mrb[0].mxu0 %v4532
  %v4688 = vpop.f32.mrb[0].mxu0
  %v4689 = vadd.f32 %v4460, %v4688
  %v4690 = vpop.f32.mrb[0].mxu0
  %v4691 = vpop.f32.mrb[0].mxu0
  %v4692 = vadd.f32 %v4460, %v4691
  %v4693 = vpop.f32.mrb[0].mxu0
  %4694 = vdwg.mxu0
  %v4695 = vadd.f32 %v2625, %v4569
  %v4696 = vadd.f32 %v2626, %v4572
  %v4697 = vadd.f32 %v2627, %v4577
  %v4698 = vadd.f32 %v2628, %v4580
  %v4699 = vadd.f32 %v2629, %v4585
  %v4700 = vadd.f32 %v2630, %v4588
  %v4701 = vadd.f32 %v2631, %v4593
  %v4702 = vadd.f32 %v2632, %v4596
  %v4703 = vadd.f32 %v2633, %v4601
  %v4704 = vadd.f32 %v2634, %v4604
  %v4705 = vadd.f32 %v2635, %v4609
  %v4706 = vadd.f32 %v2636, %v4612
  %v4707 = vadd.f32 %v2637, %v4617
  %v4708 = vadd.f32 %v2638, %v4620
  %v4709 = vadd.f32 %v2639, %v4625
  %v4710 = vadd.f32 %v2640, %v4628
  %v4711 = vadd.f32 %v2641, %v4633
  %v4712 = vadd.f32 %v2642, %v4636
  %v4713 = vadd.f32 %v2643, %v4641
  %v4714 = vadd.f32 %v2644, %v4644
  %v4715 = vadd.f32 %v2645, %v4649
  %v4716 = vadd.f32 %v2646, %v4652
  %v4717 = vadd.f32 %v2647, %v4657
  %v4718 = vadd.f32 %v2648, %v4660
  %v4719 = vadd.f32 %v2649, %v4665
  %v4720 = vadd.f32 %v2650, %v4668
  %v4721 = vadd.f32 %v2651, %v4673
  %v4722 = vadd.f32 %v2652, %v4676
  %v4723 = vadd.f32 %v2653, %v4681
  %v4724 = vadd.f32 %v2654, %v4684
  %v4725 = vadd.f32 %v2655, %v4689
  %v4726 = vadd.f32 %v2656, %v4692
  %v4727 = vpack.c.bf16 %v4696, %v4695
  %v4728 = vpack.c.bf16 %v4698, %v4697
  %v4729 = vpack.c.bf16 %v4700, %v4699
  %v4730 = vpack.c.bf16 %v4702, %v4701
  %v4731 = vpack.c.bf16 %v4704, %v4703
  %v4732 = vpack.c.bf16 %v4706, %v4705
  %v4733 = vpack.c.bf16 %v4708, %v4707
  %v4734 = vpack.c.bf16 %v4710, %v4709
  %v4735 = vpack.c.bf16 %v4712, %v4711
  %v4736 = vpack.c.bf16 %v4714, %v4713
  %v4737 = vpack.c.bf16 %v4716, %v4715
  %v4738 = vpack.c.bf16 %v4718, %v4717
  %v4739 = vpack.c.bf16 %v4720, %v4719
  %v4740 = vpack.c.bf16 %v4722, %v4721
  %v4741 = vpack.c.bf16 %v4724, %v4723
  %v4742 = vpack.c.bf16 %v4726, %v4725
  %v4743 = vld [vmem:[%s10] sm:$0xf]
  %v4744 = vld [vmem:[%s10 + $0x4] sm:$0xf]
  %v4745 = vld [vmem:[%s10 + $0x8] sm:$0xf]
  %v4746 = vld [vmem:[%s10 + $0xc] sm:$0xf]
  %v4747 = vld [vmem:[%s11] sm:$0x1]
  %v4749 = vlaneseq
  %v4750 = vshrl.u32 %v4749, 7
  %v4751 = vsub.s32 0, %v4750
  %v4752 = vrot.slane %v4747, %v4751
  %v4758 = vunpack.c.l.b16 %v4743
  %v4759 = vunpack.c.l.b16 %v4744
  %v4760 = vunpack.c.l.b16 %v4745
  %v4761 = vunpack.c.l.b16 %v4746
  %v4762 = vpack.c.b16 %v4759, %v4758
  %v4763 = vpack.c.b16 %v4761, %v4760
  %v4767 = vsel %vm429, %v4727, 0
  %v4770 = vsel %vm429, %v4728, 0
  %v4773 = vsel %vm429, %v4729, 0
  %v4776 = vsel %vm429, %v4730, 0
  %v4779 = vsel %vm429, %v4731, 0
  %v4782 = vsel %vm429, %v4732, 0
  %v4785 = vsel %vm429, %v4733, 0
  %v4788 = vsel %vm429, %v4734, 0
  %v4791 = vsel %vm429, %v4735, 0
  %v4794 = vsel %vm429, %v4736, 0
  %v4797 = vsel %vm429, %v4737, 0
  %v4800 = vsel %vm429, %v4738, 0
  %v4803 = vsel %vm429, %v4739, 0
  %v4806 = vsel %vm429, %v4740, 0
  %v4809 = vsel %vm429, %v4741, 0
  %v4812 = vsel %vm429, %v4742, 0
  %4814 = vmatprep.subr.bf16.mxu0 0
  %4815 = vmatpush1.bf16.msra.mxu0 %v4762
  %4816 = vmatprep.subr.bf16.mxu0 0
  %4817 = vmatpush1.bf16.msra.mxu0 %v4763
  %4818 = vmatprep.subr.bf16.mxu0 0
  %4819 = vmatpush1.bf16.msra.mxu0 0
  %4820 = vmatprep.subr.bf16.mxu0 0
  %4821 = vmatpush1.bf16.msra.mxu0 0
  %4822 = vmatprep.subr.bf16.mxu0 0
  %4823 = vmatpush1.bf16.msra.mxu0 0
  %4824 = vmatprep.subr.bf16.mxu0 0
  %4825 = vmatpush1.bf16.msra.mxu0 0
  %4826 = vmatprep.subr.bf16.mxu0 0
  %4827 = vmatpush1.bf16.msra.mxu0 0
  %4828 = vmatprep.subr.bf16.mxu0 0
  %4829 = vmatpush1.bf16.msra.mxu0 0
  %4830 = vmatprep.subr.bf16.mxu0 0
  %4831 = vmatpush1.bf16.msra.mxu0 0
  %4832 = vmatprep.subr.bf16.mxu0 0
  %4833 = vmatpush1.bf16.msra.mxu0 0
  %4834 = vmatprep.subr.bf16.mxu0 0
  %4835 = vmatpush1.bf16.msra.mxu0 0
  %4836 = vmatprep.subr.bf16.mxu0 0
  %4837 = vmatpush1.bf16.msra.mxu0 0
  %4838 = vmatprep.subr.bf16.mxu0 0
  %4839 = vmatpush1.bf16.msra.mxu0 0
  %4840 = vmatprep.subr.bf16.mxu0 0
  %4841 = vmatpush1.bf16.msra.mxu0 0
  %4842 = vmatprep.subr.bf16.mxu0 0
  %4843 = vmatpush1.bf16.msra.mxu0 0
  %4844 = vmatprep.subr.bf16.mxu0 0
  %4845 = vmatpush1.bf16.msra.mxu0 0
  %4846 = vmatprep.mubr.bf16.mxu0 0
  %4847 = vmatmul.mubr.bf16.gmra.mrb[0].mxu0 %v4767
  %v4848 = vpop.f32.mrb[0].mxu0
  %v4849 = vadd.f32 %v4752, %v4848
  %v4850 = vpop.f32.mrb[0].mxu0
  %v4851 = vpop.f32.mrb[0].mxu0
  %v4852 = vadd.f32 %v4752, %v4851
  %v4853 = vpop.f32.mrb[0].mxu0
  %4854 = vmatprep.mubr.bf16.mxu0 0
  %4855 = vmatmul.mubr.bf16.gmra.mrb[0].mxu0 %v4770
  %v4856 = vpop.f32.mrb[0].mxu0
  %v4857 = vadd.f32 %v4752, %v4856
  %v4858 = vpop.f32.mrb[0].mxu0
  %v4859 = vpop.f32.mrb[0].mxu0
  %v4860 = vadd.f32 %v4752, %v4859
  %v4861 = vpop.f32.mrb[0].mxu0
  %4862 = vmatprep.mubr.bf16.mxu0 0
  %4863 = vmatmul.mubr.bf16.gmra.mrb[0].mxu0 %v4773
  %v4864 = vpop.f32.mrb[0].mxu0
  %v4865 = vadd.f32 %v4752, %v4864
  %v4866 = vpop.f32.mrb[0].mxu0
  %v4867 = vpop.f32.mrb[0].mxu0
  %v4868 = vadd.f32 %v4752, %v4867
  %v4869 = vpop.f32.mrb[0].mxu0
  %4870 = vmatprep.mubr.bf16.mxu0 0
  %4871 = vmatmul.mubr.bf16.gmra.mrb[0].mxu0 %v4776
  %v4872 = vpop.f32.mrb[0].mxu0
  %v4873 = vadd.f32 %v4752, %v4872
  %v4874 = vpop.f32.mrb[0].mxu0
  %v4875 = vpop.f32.mrb[0].mxu0
  %v4876 = vadd.f32 %v4752, %v4875
  %v4877 = vpop.f32.mrb[0].mxu0
  %4878 = vmatprep.mubr.bf16.mxu0 0
  %4879 = vmatmul.mubr.bf16.gmra.mrb[0].mxu0 %v4779
  %v4880 = vpop.f32.mrb[0].mxu0
  %v4881 = vadd.f32 %v4752, %v4880
  %v4882 = vpop.f32.mrb[0].mxu0
  %v4883 = vpop.f32.mrb[0].mxu0
  %v4884 = vadd.f32 %v4752, %v4883
  %v4885 = vpop.f32.mrb[0].mxu0
  %4886 = vmatprep.mubr.bf16.mxu0 0
  %4887 = vmatmul.mubr.bf16.gmra.mrb[0].mxu0 %v4782
  %v4888 = vpop.f32.mrb[0].mxu0
  %v4889 = vadd.f32 %v4752, %v4888
  %v4890 = vpop.f32.mrb[0].mxu0
  %v4891 = vpop.f32.mrb[0].mxu0
  %v4892 = vadd.f32 %v4752, %v4891
  %v4893 = vpop.f32.mrb[0].mxu0
  %4894 = vmatprep.mubr.bf16.mxu0 0
  %4895 = vmatmul.mubr.bf16.gmra.mrb[0].mxu0 %v4785
  %v4896 = vpop.f32.mrb[0].mxu0
  %v4897 = vadd.f32 %v4752, %v4896
  %v4898 = vpop.f32.mrb[0].mxu0
  %v4899 = vpop.f32.mrb[0].mxu0
  %v4900 = vadd.f32 %v4752, %v4899
  %v4901 = vpop.f32.mrb[0].mxu0
  %4902 = vmatprep.mubr.bf16.mxu0 0
  %4903 = vmatmul.mubr.bf16.gmra.mrb[0].mxu0 %v4788
  %v4904 = vpop.f32.mrb[0].mxu0
  %v4905 = vadd.f32 %v4752, %v4904
  %v4906 = vpop.f32.mrb[0].mxu0
  %v4907 = vpop.f32.mrb[0].mxu0
  %v4908 = vadd.f32 %v4752, %v4907
  %v4909 = vpop.f32.mrb[0].mxu0
  %4910 = vmatprep.mubr.bf16.mxu0 0
  %4911 = vmatmul.mubr.bf16.gmra.mrb[0].mxu0 %v4791
  %v4912 = vpop.f32.mrb[0].mxu0
  %v4913 = vadd.f32 %v4752, %v4912
  %v4914 = vpop.f32.mrb[0].mxu0
  %v4915 = vpop.f32.mrb[0].mxu0
  %v4916 = vadd.f32 %v4752, %v4915
  %v4917 = vpop.f32.mrb[0].mxu0
  %4918 = vmatprep.mubr.bf16.mxu0 0
  %4919 = vmatmul.mubr.bf16.gmra.mrb[0].mxu0 %v4794
  %v4920 = vpop.f32.mrb[0].mxu0
  %v4921 = vadd.f32 %v4752, %v4920
  %v4922 = vpop.f32.mrb[0].mxu0
  %v4923 = vpop.f32.mrb[0].mxu0
  %v4924 = vadd.f32 %v4752, %v4923
  %v4925 = vpop.f32.mrb[0].mxu0
  %4926 = vmatprep.mubr.bf16.mxu0 0
  %4927 = vmatmul.mubr.bf16.gmra.mrb[0].mxu0 %v4797
  %v4928 = vpop.f32.mrb[0].mxu0
  %v4929 = vadd.f32 %v4752, %v4928
  %v4930 = vpop.f32.mrb[0].mxu0
  %v4931 = vpop.f32.mrb[0].mxu0
  %v4932 = vadd.f32 %v4752, %v4931
  %v4933 = vpop.f32.mrb[0].mxu0
  %4934 = vmatprep.mubr.bf16.mxu0 0
  %4935 = vmatmul.mubr.bf16.gmra.mrb[0].mxu0 %v4800
  %v4936 = vpop.f32.mrb[0].mxu0
  %v4937 = vadd.f32 %v4752, %v4936
  %v4938 = vpop.f32.mrb[0].mxu0
  %v4939 = vpop.f32.mrb[0].mxu0
  %v4940 = vadd.f32 %v4752, %v4939
  %v4941 = vpop.f32.mrb[0].mxu0
  %4942 = vmatprep.mubr.bf16.mxu0 0
  %4943 = vmatmul.mubr.bf16.gmra.mrb[0].mxu0 %v4803
  %v4944 = vpop.f32.mrb[0].mxu0
  %v4945 = vadd.f32 %v4752, %v4944
  %v4946 = vpop.f32.mrb[0].mxu0
  %v4947 = vpop.f32.mrb[0].mxu0
  %v4948 = vadd.f32 %v4752, %v4947
  %v4949 = vpop.f32.mrb[0].mxu0
  %4950 = vmatprep.mubr.bf16.mxu0 0
  %4951 = vmatmul.mubr.bf16.gmra.mrb[0].mxu0 %v4806
  %v4952 = vpop.f32.mrb[0].mxu0
  %v4953 = vadd.f32 %v4752, %v4952
  %v4954 = vpop.f32.mrb[0].mxu0
  %v4955 = vpop.f32.mrb[0].mxu0
  %v4956 = vadd.f32 %v4752, %v4955
  %v4957 = vpop.f32.mrb[0].mxu0
  %4958 = vmatprep.mubr.bf16.mxu0 0
  %4959 = vmatmul.mubr.bf16.gmra.mrb[0].mxu0 %v4809
  %v4960 = vpop.f32.mrb[0].mxu0
  %v4961 = vadd.f32 %v4752, %v4960
  %v4962 = vpop.f32.mrb[0].mxu0
  %v4963 = vpop.f32.mrb[0].mxu0
  %v4964 = vadd.f32 %v4752, %v4963
  %v4965 = vpop.f32.mrb[0].mxu0
  %4966 = vmatprep.mubr.bf16.mxu0 0
  %4967 = vmatmul.mubr.bf16.gmra.mrb[0].mxu0 %v4812
  %v4968 = vpop.f32.mrb[0].mxu0
  %v4969 = vadd.f32 %v4752, %v4968
  %v4970 = vpop.f32.mrb[0].mxu0
  %v4971 = vpop.f32.mrb[0].mxu0
  %v4972 = vadd.f32 %v4752, %v4971
  %v4973 = vpop.f32.mrb[0].mxu0
  %4974 = vdwg.mxu0
  %v4975 = vld [vmem:[%s12] sm:$0xf]
  %v4976 = vld [vmem:[%s13] sm:$0x1]
  %v4977 = vld [vmem:[%s14] sm:$0xf]
  %v4978 = vld [vmem:[%s14 + $0x4] sm:$0xf]
  %v4979 = vld [vmem:[%s15] sm:$0x1]
  %v4980 = vmax.f32 %v4849, 0.0
  %v4981 = vmax.f32 %v4852, 0.0
  %v4982 = vmax.f32 %v4857, 0.0
  %v4983 = vmax.f32 %v4860, 0.0
  %v4984 = vmax.f32 %v4865, 0.0
  %v4985 = vmax.f32 %v4868, 0.0
  %v4986 = vmax.f32 %v4873, 0.0
  %v4987 = vmax.f32 %v4876, 0.0
  %v4988 = vmax.f32 %v4881, 0.0
  %v4989 = vmax.f32 %v4884, 0.0
  %v4990 = vmax.f32 %v4889, 0.0
  %v4991 = vmax.f32 %v4892, 0.0
  %v4992 = vmax.f32 %v4897, 0.0
  %v4993 = vmax.f32 %v4900, 0.0
  %v4994 = vmax.f32 %v4905, 0.0
  %v4995 = vmax.f32 %v4908, 0.0
  %v4996 = vmax.f32 %v4913, 0.0
  %v4997 = vmax.f32 %v4916, 0.0
  %v4998 = vmax.f32 %v4921, 0.0
  %v4999 = vmax.f32 %v4924, 0.0
  %v5000 = vmax.f32 %v4929, 0.0
  %v5001 = vmax.f32 %v4932, 0.0
  %v5002 = vmax.f32 %v4937, 0.0
  %v5003 = vmax.f32 %v4940, 0.0
  %v5004 = vmax.f32 %v4945, 0.0
  %v5005 = vmax.f32 %v4948, 0.0
  %v5006 = vmax.f32 %v4953, 0.0
  %v5007 = vmax.f32 %v4956, 0.0
  %v5008 = vmax.f32 %v4961, 0.0
  %v5009 = vmax.f32 %v4964, 0.0
  %v5010 = vmax.f32 %v4969, 0.0
  %v5011 = vmax.f32 %v4972, 0.0
  %v5012 = vadd.f32 %v4980, 1e-07
  %v5013 = vadd.f32 %v4981, 1e-07
  %v5014 = vadd.f32 %v4982, 1e-07
  %v5015 = vadd.f32 %v4983, 1e-07
  %v5016 = vadd.f32 %v4984, 1e-07
  %v5017 = vadd.f32 %v4985, 1e-07
  %v5018 = vadd.f32 %v4986, 1e-07
  %v5019 = vadd.f32 %v4987, 1e-07
  %v5020 = vadd.f32 %v4988, 1e-07
  %v5021 = vadd.f32 %v4989, 1e-07
  %v5022 = vadd.f32 %v4990, 1e-07
  %v5023 = vadd.f32 %v4991, 1e-07
  %v5024 = vadd.f32 %v4992, 1e-07
  %v5025 = vadd.f32 %v4993, 1e-07
  %v5026 = vadd.f32 %v4994, 1e-07
  %v5027 = vadd.f32 %v4995, 1e-07
  %v5028 = vadd.f32 %v4996, 1e-07
  %v5029 = vadd.f32 %v4997, 1e-07
  %v5030 = vadd.f32 %v4998, 1e-07
  %v5031 = vadd.f32 %v4999, 1e-07
  %v5032 = vadd.f32 %v5000, 1e-07
  %v5033 = vadd.f32 %v5001, 1e-07
  %v5034 = vadd.f32 %v5002, 1e-07
  %v5035 = vadd.f32 %v5003, 1e-07
  %v5036 = vadd.f32 %v5004, 1e-07
  %v5037 = vadd.f32 %v5005, 1e-07
  %v5038 = vadd.f32 %v5006, 1e-07
  %v5039 = vadd.f32 %v5007, 1e-07
  %v5040 = vadd.f32 %v5008, 1e-07
  %v5041 = vadd.f32 %v5009, 1e-07
  %v5042 = vadd.f32 %v5010, 1e-07
  %v5043 = vadd.f32 %v5011, 1e-07
  %vm5044 = vcmask 64512
  %v5045 = vsel %vm5044, %v5012, -inf
  %v5046 = vsel %vm5044, %v5013, -inf
  %v5047 = vsel %vm5044, %v5014, -inf
  %v5048 = vsel %vm5044, %v5015, -inf
  %v5049 = vsel %vm5044, %v5016, -inf
  %v5050 = vmax.f32 %v5045, %v5049
  %v5051 = vsel %vm5044, %v5017, -inf
  %v5052 = vmax.f32 %v5046, %v5051
  %v5053 = vsel %vm5044, %v5018, -inf
  %v5054 = vmax.f32 %v5047, %v5053
  %v5055 = vsel %vm5044, %v5019, -inf
  %v5056 = vmax.f32 %v5048, %v5055
  %v5057 = vsel %vm5044, %v5020, -inf
  %v5058 = vmax.f32 %v5050, %v5057
  %v5059 = vsel %vm5044, %v5021, -inf
  %v5060 = vmax.f32 %v5052, %v5059
  %v5061 = vsel %vm5044, %v5022, -inf
  %v5062 = vmax.f32 %v5054, %v5061
  %v5063 = vsel %vm5044, %v5023, -inf
  %v5064 = vmax.f32 %v5056, %v5063
  %v5065 = vsel %vm5044, %v5024, -inf
  %v5066 = vmax.f32 %v5058, %v5065
  %v5067 = vsel %vm5044, %v5025, -inf
  %v5068 = vmax.f32 %v5060, %v5067
  %v5069 = vsel %vm5044, %v5026, -inf
  %v5070 = vmax.f32 %v5062, %v5069
  %v5071 = vsel %vm5044, %v5027, -inf
  %v5072 = vmax.f32 %v5064, %v5071
  %v5073 = vsel %vm5044, %v5028, -inf
  %v5074 = vmax.f32 %v5066, %v5073
  %v5075 = vsel %vm5044, %v5029, -inf
  %v5076 = vmax.f32 %v5068, %v5075
  %v5077 = vsel %vm5044, %v5030, -inf
  %v5078 = vmax.f32 %v5070, %v5077
  %v5079 = vsel %vm5044, %v5031, -inf
  %v5080 = vmax.f32 %v5072, %v5079
  %v5081 = vsel %vm5044, %v5032, -inf
  %v5082 = vmax.f32 %v5074, %v5081
  %v5083 = vsel %vm5044, %v5033, -inf
  %v5084 = vmax.f32 %v5076, %v5083
  %v5085 = vsel %vm5044, %v5034, -inf
  %v5086 = vmax.f32 %v5078, %v5085
  %v5087 = vsel %vm5044, %v5035, -inf
  %v5088 = vmax.f32 %v5080, %v5087
  %v5089 = vsel %vm5044, %v5036, -inf
  %v5090 = vmax.f32 %v5082, %v5089
  %v5091 = vsel %vm5044, %v5037, -inf
  %v5092 = vmax.f32 %v5084, %v5091
  %v5093 = vsel %vm5044, %v5038, -inf
  %v5094 = vmax.f32 %v5086, %v5093
  %v5095 = vsel %vm5044, %v5039, -inf
  %v5096 = vmax.f32 %v5088, %v5095
  %v5097 = vsel %vm5044, %v5040, -inf
  %v5098 = vmax.f32 %v5090, %v5097
  %v5099 = vsel %vm5044, %v5041, -inf
  %v5100 = vmax.f32 %v5092, %v5099
  %v5101 = vsel %vm5044, %v5042, -inf
  %v5102 = vmax.f32 %v5094, %v5101
  %v5103 = vsel %vm5044, %v5043, -inf
  %v5104 = vmax.f32 %v5096, %v5103
  %v5105 = vmax.f32 %v5098, %v5100
  %v5106 = vmax.f32 %v5102, %v5104
  %v5107 = vmax.f32 %v5105, %v5106
  %v5108 = vrot.slane %v5107, 4
  %v5109 = vmax.f32 %v5107, %v5108
  %v5110 = vrot.slane %v5109, 2
  %v5111 = vmax.f32 %v5109, %v5110
  %v5112 = vrot.slane %v5111, 1
  %v5113 = vmax.f32 %v5111, %v5112
  %v5114 = vsub.f32 %v5012, %v5113
  %v5115 = vsub.f32 %v5013, %v5113
  %v5116 = vsub.f32 %v5014, %v5113
  %v5117 = vsub.f32 %v5015, %v5113
  %v5118 = vsub.f32 %v5016, %v5113
  %v5119 = vsub.f32 %v5017, %v5113
  %v5120 = vsub.f32 %v5018, %v5113
  %v5121 = vsub.f32 %v5019, %v5113
  %v5122 = vsub.f32 %v5020, %v5113
  %v5123 = vsub.f32 %v5021, %v5113
  %v5124 = vsub.f32 %v5022, %v5113
  %v5125 = vsub.f32 %v5023, %v5113
  %v5126 = vsub.f32 %v5024, %v5113
  %v5127 = vsub.f32 %v5025, %v5113
  %v5128 = vsub.f32 %v5026, %v5113
  %v5129 = vsub.f32 %v5027, %v5113
  %v5130 = vsub.f32 %v5028, %v5113
  %v5131 = vsub.f32 %v5029, %v5113
  %v5132 = vsub.f32 %v5030, %v5113
  %v5133 = vsub.f32 %v5031, %v5113
  %v5134 = vsub.f32 %v5032, %v5113
  %v5135 = vsub.f32 %v5033, %v5113
  %v5136 = vsub.f32 %v5034, %v5113
  %v5137 = vsub.f32 %v5035, %v5113
  %v5138 = vsub.f32 %v5036, %v5113
  %v5139 = vsub.f32 %v5037, %v5113
  %v5140 = vsub.f32 %v5038, %v5113
  %v5141 = vsub.f32 %v5039, %v5113
  %v5142 = vsub.f32 %v5040, %v5113
  %v5143 = vsub.f32 %v5041, %v5113
  %v5144 = vsub.f32 %v5042, %v5113
  %v5145 = vsub.f32 %v5043, %v5113
  %v5146 = vmul.f32 %v5114, 1.442695
  %v5147 = vpow.pop %v5146
  %v5148 = vmul.f32 %v5115, 1.442695
  %v5149 = vpow.pop %v5148
  %v5150 = vmul.f32 %v5116, 1.442695
  %v5151 = vpow.pop %v5150
  %v5152 = vmul.f32 %v5117, 1.442695
  %v5153 = vpow.pop %v5152
  %v5154 = vmul.f32 %v5118, 1.442695
  %v5155 = vpow.pop %v5154
  %v5156 = vmul.f32 %v5119, 1.442695
  %v5157 = vpow.pop %v5156
  %v5158 = vmul.f32 %v5120, 1.442695
  %v5159 = vpow.pop %v5158
  %v5160 = vmul.f32 %v5121, 1.442695
  %v5161 = vpow.pop %v5160
  %v5162 = vmul.f32 %v5122, 1.442695
  %v5163 = vpow.pop %v5162
  %v5164 = vmul.f32 %v5123, 1.442695
  %v5165 = vpow.pop %v5164
  %v5166 = vmul.f32 %v5124, 1.442695
  %v5167 = vpow.pop %v5166
  %v5168 = vmul.f32 %v5125, 1.442695
  %v5169 = vpow.pop %v5168
  %v5170 = vmul.f32 %v5126, 1.442695
  %v5171 = vpow.pop %v5170
  %v5172 = vmul.f32 %v5127, 1.442695
  %v5173 = vpow.pop %v5172
  %v5174 = vmul.f32 %v5128, 1.442695
  %v5175 = vpow.pop %v5174
  %v5176 = vmul.f32 %v5129, 1.442695
  %v5177 = vpow.pop %v5176
  %v5178 = vmul.f32 %v5130, 1.442695
  %v5179 = vpow.pop %v5178
  %v5180 = vmul.f32 %v5131, 1.442695
  %v5181 = vpow.pop %v5180
  %v5182 = vmul.f32 %v5132, 1.442695
  %v5183 = vpow.pop %v5182
  %v5184 = vmul.f32 %v5133, 1.442695
  %v5185 = vpow.pop %v5184
  %v5186 = vmul.f32 %v5134, 1.442695
  %v5187 = vpow.pop %v5186
  %v5188 = vmul.f32 %v5135, 1.442695
  %v5189 = vpow.pop %v5188
  %v5190 = vmul.f32 %v5136, 1.442695
  %v5191 = vpow.pop %v5190
  %v5192 = vmul.f32 %v5137, 1.442695
  %v5193 = vpow.pop %v5192
  %v5194 = vmul.f32 %v5138, 1.442695
  %v5195 = vpow.pop %v5194
  %v5196 = vmul.f32 %v5139, 1.442695
  %v5197 = vpow.pop %v5196
  %v5198 = vmul.f32 %v5140, 1.442695
  %v5199 = vpow.pop %v5198
  %v5200 = vmul.f32 %v5141, 1.442695
  %v5201 = vpow.pop %v5200
  %v5202 = vmul.f32 %v5142, 1.442695
  %v5203 = vpow.pop %v5202
  %v5204 = vmul.f32 %v5143, 1.442695
  %v5205 = vpow.pop %v5204
  %v5206 = vmul.f32 %v5144, 1.442695
  %v5207 = vpow.pop %v5206
  %v5208 = vmul.f32 %v5145, 1.442695
  %v5209 = vpow.pop %v5208
  %v5210 = vmul.f32 %v5012, %v5147
  %v5211 = vmul.f32 %v5013, %v5149
  %v5212 = vmul.f32 %v5014, %v5151
  %v5213 = vmul.f32 %v5015, %v5153
  %v5214 = vmul.f32 %v5016, %v5155
  %v5215 = vmul.f32 %v5017, %v5157
  %v5216 = vmul.f32 %v5018, %v5159
  %v5217 = vmul.f32 %v5019, %v5161
  %v5218 = vmul.f32 %v5020, %v5163
  %v5219 = vmul.f32 %v5021, %v5165
  %v5220 = vmul.f32 %v5022, %v5167
  %v5221 = vmul.f32 %v5023, %v5169
  %v5222 = vmul.f32 %v5024, %v5171
  %v5223 = vmul.f32 %v5025, %v5173
  %v5224 = vmul.f32 %v5026, %v5175
  %v5225 = vmul.f32 %v5027, %v5177
  %v5226 = vmul.f32 %v5028, %v5179
  %v5227 = vmul.f32 %v5029, %v5181
  %v5228 = vmul.f32 %v5030, %v5183
  %v5229 = vmul.f32 %v5031, %v5185
  %v5230 = vmul.f32 %v5032, %v5187
  %v5231 = vmul.f32 %v5033, %v5189
  %v5232 = vmul.f32 %v5034, %v5191
  %v5233 = vmul.f32 %v5035, %v5193
  %v5234 = vmul.f32 %v5036, %v5195
  %v5235 = vmul.f32 %v5037, %v5197
  %v5236 = vmul.f32 %v5038, %v5199
  %v5237 = vmul.f32 %v5039, %v5201
  %v5238 = vmul.f32 %v5040, %v5203
  %v5239 = vmul.f32 %v5041, %v5205
  %v5240 = vmul.f32 %v5042, %v5207
  %v5241 = vmul.f32 %v5043, %v5209
  %5274 = vrot.lane.b32.xlu0 %v5147, 8
  %v5275 = vpop.permute.xlu0 %5274
  %5276 = vrot.lane.b32.xlu0 %v5149, 8
  %v5277 = vpop.permute.xlu0 %5276
  %5278 = vrot.lane.b32.xlu0 %v5151, 8
  %v5279 = vpop.permute.xlu0 %5278
  %5280 = vrot.lane.b32.xlu0 %v5153, 8
  %v5281 = vpop.permute.xlu0 %5280
  %5282 = vrot.lane.b32.xlu0 %v5155, 8
  %v5283 = vpop.permute.xlu0 %5282
  %5284 = vrot.lane.b32.xlu0 %v5157, 8
  %v5285 = vpop.permute.xlu0 %5284
  %5286 = vrot.lane.b32.xlu0 %v5159, 8
  %v5287 = vpop.permute.xlu0 %5286
  %5288 = vrot.lane.b32.xlu0 %v5161, 8
  %v5289 = vpop.permute.xlu0 %5288
  %5290 = vrot.lane.b32.xlu0 %v5163, 8
  %v5291 = vpop.permute.xlu0 %5290
  %5292 = vrot.lane.b32.xlu0 %v5165, 8
  %v5293 = vpop.permute.xlu0 %5292
  %5294 = vrot.lane.b32.xlu0 %v5167, 8
  %v5295 = vpop.permute.xlu0 %5294
  %5296 = vrot.lane.b32.xlu0 %v5169, 8
  %v5297 = vpop.permute.xlu0 %5296
  %5298 = vrot.lane.b32.xlu0 %v5171, 8
  %v5299 = vpop.permute.xlu0 %5298
  %5300 = vrot.lane.b32.xlu0 %v5173, 8
  %v5301 = vpop.permute.xlu0 %5300
  %5302 = vrot.lane.b32.xlu0 %v5175, 8
  %v5303 = vpop.permute.xlu0 %5302
  %5304 = vrot.lane.b32.xlu0 %v5177, 8
  %v5305 = vpop.permute.xlu0 %5304
  %5306 = vrot.lane.b32.xlu0 %v5179, 8
  %v5307 = vpop.permute.xlu0 %5306
  %5308 = vrot.lane.b32.xlu0 %v5181, 8
  %v5309 = vpop.permute.xlu0 %5308
  %5310 = vrot.lane.b32.xlu0 %v5183, 8
  %v5311 = vpop.permute.xlu0 %5310
  %5312 = vrot.lane.b32.xlu0 %v5185, 8
  %v5313 = vpop.permute.xlu0 %5312
  %5314 = vrot.lane.b32.xlu0 %v5187, 8
  %v5315 = vpop.permute.xlu0 %5314
  %5316 = vrot.lane.b32.xlu0 %v5189, 8
  %v5317 = vpop.permute.xlu0 %5316
  %5318 = vrot.lane.b32.xlu0 %v5191, 8
  %v5319 = vpop.permute.xlu0 %5318
  %5320 = vrot.lane.b32.xlu0 %v5193, 8
  %v5321 = vpop.permute.xlu0 %5320
  %5322 = vrot.lane.b32.xlu0 %v5195, 8
  %v5323 = vpop.permute.xlu0 %5322
  %5324 = vrot.lane.b32.xlu0 %v5197, 8
  %v5325 = vpop.permute.xlu0 %5324
  %5326 = vrot.lane.b32.xlu0 %v5199, 8
  %v5327 = vpop.permute.xlu0 %5326
  %5328 = vrot.lane.b32.xlu0 %v5201, 8
  %v5329 = vpop.permute.xlu0 %5328
  %5330 = vrot.lane.b32.xlu0 %v5203, 8
  %v5331 = vpop.permute.xlu0 %5330
  %5332 = vrot.lane.b32.xlu0 %v5205, 8
  %v5333 = vpop.permute.xlu0 %5332
  %5334 = vrot.lane.b32.xlu0 %v5207, 8
  %v5335 = vpop.permute.xlu0 %5334
  %5336 = vrot.lane.b32.xlu0 %v5209, 8
  %v5337 = vpop.permute.xlu0 %5336
  %v5370 = vsel %vm5044, %v5210, %v5275
  %v5371 = vsel %vm5044, %v5211, %v5277
  %v5372 = vsel %vm5044, %v5212, %v5279
  %v5373 = vsel %vm5044, %v5213, %v5281
  %v5374 = vsel %vm5044, %v5214, %v5283
  %v5375 = vsel %vm5044, %v5215, %v5285
  %v5376 = vsel %vm5044, %v5216, %v5287
  %v5377 = vsel %vm5044, %v5217, %v5289
  %v5378 = vsel %vm5044, %v5218, %v5291
  %v5379 = vsel %vm5044, %v5219, %v5293
  %v5380 = vsel %vm5044, %v5220, %v5295
  %v5381 = vsel %vm5044, %v5221, %v5297
  %v5382 = vsel %vm5044, %v5222, %v5299
  %v5383 = vsel %vm5044, %v5223, %v5301
  %v5384 = vsel %vm5044, %v5224, %v5303
  %v5385 = vsel %vm5044, %v5225, %v5305
  %v5386 = vsel %vm5044, %v5226, %v5307
  %v5387 = vsel %vm5044, %v5227, %v5309
  %v5388 = vsel %vm5044, %v5228, %v5311
  %v5389 = vsel %vm5044, %v5229, %v5313
  %v5390 = vsel %vm5044, %v5230, %v5315
  %v5391 = vsel %vm5044, %v5231, %v5317
  %v5392 = vsel %vm5044, %v5232, %v5319
  %v5393 = vsel %vm5044, %v5233, %v5321
  %v5394 = vsel %vm5044, %v5234, %v5323
  %v5395 = vsel %vm5044, %v5235, %v5325
  %v5396 = vsel %vm5044, %v5236, %v5327
  %v5397 = vsel %vm5044, %v5237, %v5329
  %v5398 = vsel %vm5044, %v5238, %v5331
  %v5399 = vsel %vm5044, %v5239, %v5333
  %v5400 = vsel %vm5044, %v5240, %v5335
  %v5401 = vsel %vm5044, %v5241, %v5337
  %v5402 = vpack.c.bf16 %v5371, %v5370
  %v5403 = vpack.c.bf16 %v5373, %v5372
  %v5404 = vpack.c.bf16 %v5375, %v5374
  %v5405 = vpack.c.bf16 %v5377, %v5376
  %v5406 = vpack.c.bf16 %v5379, %v5378
  %v5407 = vpack.c.bf16 %v5381, %v5380
  %v5408 = vpack.c.bf16 %v5383, %v5382
  %v5409 = vpack.c.bf16 %v5385, %v5384
  %v5410 = vpack.c.bf16 %v5387, %v5386
  %v5411 = vpack.c.bf16 %v5389, %v5388
  %v5412 = vpack.c.bf16 %v5391, %v5390
  %v5413 = vpack.c.bf16 %v5393, %v5392
  %v5414 = vpack.c.bf16 %v5395, %v5394
  %v5415 = vpack.c.bf16 %v5397, %v5396
  %v5416 = vpack.c.bf16 %v5399, %v5398
  %v5417 = vpack.c.bf16 %v5401, %v5400
  %5418 = vmatprep.subr.bf16.mxu0 0
  %5419 = vmatpush1.bf16.msra.mxu0 %v5402
  %5420 = vmatprep.subr.bf16.mxu0 0
  %5421 = vmatpush1.bf16.msra.mxu0 %v5403
  %5422 = vmatprep.subr.bf16.mxu0 0
  %5423 = vmatpush1.bf16.msra.mxu0 %v5404
  %5424 = vmatprep.subr.bf16.mxu0 0
  %5425 = vmatpush1.bf16.msra.mxu0 %v5405
  %5426 = vmatprep.subr.bf16.mxu0 0
  %5427 = vmatpush1.bf16.msra.mxu0 %v5406
  %5428 = vmatprep.subr.bf16.mxu0 0
  %5429 = vmatpush1.bf16.msra.mxu0 %v5407
  %5430 = vmatprep.subr.bf16.mxu0 0
  %5431 = vmatpush1.bf16.msra.mxu0 %v5408
  %5432 = vmatprep.subr.bf16.mxu0 0
  %5433 = vmatpush1.bf16.msra.mxu0 %v5409
  %5434 = vmatprep.subr.bf16.mxu0 0
  %5435 = vmatpush1.bf16.msra.mxu0 %v5410
  %5436 = vmatprep.subr.bf16.mxu0 0
  %5437 = vmatpush1.bf16.msra.mxu0 %v5411
  %5438 = vmatprep.subr.bf16.mxu0 0
  %5439 = vmatpush1.bf16.msra.mxu0 %v5412
  %5440 = vmatprep.subr.bf16.mxu0 0
  %5441 = vmatpush1.bf16.msra.mxu0 %v5413
  %5442 = vmatprep.subr.bf16.mxu0 0
  %5443 = vmatpush1.bf16.msra.mxu0 %v5414
  %5444 = vmatprep.subr.bf16.mxu0 0
  %5445 = vmatpush1.bf16.msra.mxu0 %v5415
  %5446 = vmatprep.subr.bf16.mxu0 0
  %5447 = vmatpush1.bf16.msra.mxu0 %v5416
  %5448 = vmatprep.subr.bf16.mxu0 0
  %5449 = vmatpush1.bf16.msra.mxu0 %v5417
  %5450 = vmatprep.mubr.bf16.mxu0 %v1375
  %5451 = vmatmul.mubr.bf16.gmra.mrb[0].mxu0 %v1374
  %v5452 = vpop.f32.mrb[0].mxu0
  %v5453 = vadd.f32 0.0, %v5452
  %v5454 = vpop.f32.mrb[0].mxu0
  %v5455 = vpop.f32.mrb[0].mxu0
  %v5456 = vadd.f32 0.0, %v5455
  %v5457 = vpop.f32.mrb[0].mxu0
  %5458 = vmatprep.mubr.bf16.mxu0 %v1377
  %5459 = vmatmul.mubr.bf16.gmra.mrb[0].mxu0 %v1376
  %v5460 = vpop.f32.mrb[0].mxu0
  %v5461 = vadd.f32 0.0, %v5460
  %v5462 = vpop.f32.mrb[0].mxu0
  %v5463 = vpop.f32.mrb[0].mxu0
  %v5464 = vadd.f32 0.0, %v5463
  %v5465 = vpop.f32.mrb[0].mxu0
  %5466 = vmatprep.mubr.bf16.mxu0 %v1379
  %5467 = vmatmul.mubr.bf16.gmra.mrb[0].mxu0 %v1378
  %v5468 = vpop.f32.mrb[0].mxu0
  %v5469 = vadd.f32 0.0, %v5468
  %v5470 = vpop.f32.mrb[0].mxu0
  %v5471 = vpop.f32.mrb[0].mxu0
  %v5472 = vadd.f32 0.0, %v5471
  %v5473 = vpop.f32.mrb[0].mxu0
  %5474 = vmatprep.mubr.bf16.mxu0 %v1381
  %5475 = vmatmul.mubr.bf16.gmra.mrb[0].mxu0 %v1380
  %v5476 = vpop.f32.mrb[0].mxu0
  %v5477 = vadd.f32 0.0, %v5476
  %v5478 = vpop.f32.mrb[0].mxu0
  %v5479 = vpop.f32.mrb[0].mxu0
  %v5480 = vadd.f32 0.0, %v5479
  %v5481 = vpop.f32.mrb[0].mxu0
  %5482 = vmatprep.mubr.bf16.mxu0 %v1383
  %5483 = vmatmul.mubr.bf16.gmra.mrb[0].mxu0 %v1382
  %v5484 = vpop.f32.mrb[0].mxu0
  %v5485 = vadd.f32 0.0, %v5484
  %v5486 = vpop.f32.mrb[0].mxu0
  %v5487 = vpop.f32.mrb[0].mxu0
  %v5488 = vadd.f32 0.0, %v5487
  %v5489 = vpop.f32.mrb[0].mxu0
  %5490 = vmatprep.mubr.bf16.mxu0 %v1385
  %5491 = vmatmul.mubr.bf16.gmra.mrb[0].mxu0 %v1384
  %v5492 = vpop.f32.mrb[0].mxu0
  %v5493 = vadd.f32 0.0, %v5492
  %v5494 = vpop.f32.mrb[0].mxu0
  %v5495 = vpop.f32.mrb[0].mxu0
  %v5496 = vadd.f32 0.0, %v5495
  %v5497 = vpop.f32.mrb[0].mxu0
  %5498 = vmatprep.mubr.bf16.mxu0 %v1387
  %5499 = vmatmul.mubr.bf16.gmra.mrb[0].mxu0 %v1386
  %v5500 = vpop.f32.mrb[0].mxu0
  %v5501 = vadd.f32 0.0, %v5500
  %v5502 = vpop.f32.mrb[0].mxu0
  %v5503 = vpop.f32.mrb[0].mxu0
  %v5504 = vadd.f32 0.0, %v5503
  %v5505 = vpop.f32.mrb[0].mxu0
  %5506 = vmatprep.mubr.bf16.mxu0 %v1389
  %5507 = vmatmul.mubr.bf16.gmra.mrb[0].mxu0 %v1388
  %v5508 = vpop.f32.mrb[0].mxu0
  %v5509 = vadd.f32 0.0, %v5508
  %v5510 = vpop.f32.mrb[0].mxu0
  %v5511 = vpop.f32.mrb[0].mxu0
  %v5512 = vadd.f32 0.0, %v5511
  %v5513 = vpop.f32.mrb[0].mxu0
  %5514 = vmatprep.mubr.bf16.mxu0 %v1391
  %5515 = vmatmul.mubr.bf16.gmra.mrb[0].mxu0 %v1390
  %v5516 = vpop.f32.mrb[0].mxu0
  %v5517 = vadd.f32 0.0, %v5516
  %v5518 = vpop.f32.mrb[0].mxu0
  %v5519 = vpop.f32.mrb[0].mxu0
  %v5520 = vadd.f32 0.0, %v5519
  %v5521 = vpop.f32.mrb[0].mxu0
  %5522 = vmatprep.mubr.bf16.mxu0 %v1393
  %5523 = vmatmul.mubr.bf16.gmra.mrb[0].mxu0 %v1392
  %v5524 = vpop.f32.mrb[0].mxu0
  %v5525 = vadd.f32 0.0, %v5524
  %v5526 = vpop.f32.mrb[0].mxu0
  %v5527 = vpop.f32.mrb[0].mxu0
  %v5528 = vadd.f32 0.0, %v5527
  %v5529 = vpop.f32.mrb[0].mxu0
  %5530 = vmatprep.mubr.bf16.mxu0 %v1395
  %5531 = vmatmul.mubr.bf16.gmra.mrb[0].mxu0 %v1394
  %v5532 = vpop.f32.mrb[0].mxu0
  %v5533 = vadd.f32 0.0, %v5532
  %v5534 = vpop.f32.mrb[0].mxu0
  %v5535 = vpop.f32.mrb[0].mxu0
  %v5536 = vadd.f32 0.0, %v5535
  %v5537 = vpop.f32.mrb[0].mxu0
  %5538 = vmatprep.mubr.bf16.mxu0 %v1397
  %5539 = vmatmul.mubr.bf16.gmra.mrb[0].mxu0 %v1396
  %v5540 = vpop.f32.mrb[0].mxu0
  %v5541 = vadd.f32 0.0, %v5540
  %v5542 = vpop.f32.mrb[0].mxu0
  %v5543 = vpop.f32.mrb[0].mxu0
  %v5544 = vadd.f32 0.0, %v5543
  %v5545 = vpop.f32.mrb[0].mxu0
  %5546 = vmatprep.mubr.bf16.mxu0 %v1399
  %5547 = vmatmul.mubr.bf16.gmra.mrb[0].mxu0 %v1398
  %v5548 = vpop.f32.mrb[0].mxu0
  %v5549 = vadd.f32 0.0, %v5548
  %v5550 = vpop.f32.mrb[0].mxu0
  %v5551 = vpop.f32.mrb[0].mxu0
  %v5552 = vadd.f32 0.0, %v5551
  %v5553 = vpop.f32.mrb[0].mxu0
  %5554 = vmatprep.mubr.bf16.mxu0 %v1401
  %5555 = vmatmul.mubr.bf16.gmra.mrb[0].mxu0 %v1400
  %v5556 = vpop.f32.mrb[0].mxu0
  %v5557 = vadd.f32 0.0, %v5556
  %v5558 = vpop.f32.mrb[0].mxu0
  %v5559 = vpop.f32.mrb[0].mxu0
  %v5560 = vadd.f32 0.0, %v5559
  %v5561 = vpop.f32.mrb[0].mxu0
  %5562 = vmatprep.mubr.bf16.mxu0 %v1403
  %5563 = vmatmul.mubr.bf16.gmra.mrb[0].mxu0 %v1402
  %v5564 = vpop.f32.mrb[0].mxu0
  %v5565 = vadd.f32 0.0, %v5564
  %v5566 = vpop.f32.mrb[0].mxu0
  %v5567 = vpop.f32.mrb[0].mxu0
  %v5568 = vadd.f32 0.0, %v5567
  %v5569 = vpop.f32.mrb[0].mxu0
  %5570 = vmatprep.mubr.bf16.mxu0 %v1405
  %5571 = vmatmul.mubr.bf16.gmra.mrb[0].mxu0 %v1404
  %v5572 = vpop.f32.mrb[0].mxu0
  %v5573 = vadd.f32 0.0, %v5572
  %v5574 = vpop.f32.mrb[0].mxu0
  %v5575 = vpop.f32.mrb[0].mxu0
  %v5576 = vadd.f32 0.0, %v5575
  %v5577 = vpop.f32.mrb[0].mxu0
  %5578 = vdwg.mxu0
  %v5579 = vadd.f32 %v5453, 1e-12
  %v5580 = vadd.f32 %v5456, 1e-12
  %v5581 = vadd.f32 %v5461, 1e-12
  %v5582 = vadd.f32 %v5464, 1e-12
  %v5583 = vadd.f32 %v5469, 1e-12
  %v5584 = vadd.f32 %v5472, 1e-12
  %v5585 = vadd.f32 %v5477, 1e-12
  %v5586 = vadd.f32 %v5480, 1e-12
  %v5587 = vadd.f32 %v5485, 1e-12
  %v5588 = vadd.f32 %v5488, 1e-12
  %v5589 = vadd.f32 %v5493, 1e-12
  %v5590 = vadd.f32 %v5496, 1e-12
  %v5591 = vadd.f32 %v5501, 1e-12
  %v5592 = vadd.f32 %v5504, 1e-12
  %v5593 = vadd.f32 %v5509, 1e-12
  %v5594 = vadd.f32 %v5512, 1e-12
  %v5595 = vadd.f32 %v5517, 1e-12
  %v5596 = vadd.f32 %v5520, 1e-12
  %v5597 = vadd.f32 %v5525, 1e-12
  %v5598 = vadd.f32 %v5528, 1e-12
  %v5599 = vadd.f32 %v5533, 1e-12
  %v5600 = vadd.f32 %v5536, 1e-12
  %v5601 = vadd.f32 %v5541, 1e-12
  %v5602 = vadd.f32 %v5544, 1e-12
  %v5603 = vadd.f32 %v5549, 1e-12
  %v5604 = vadd.f32 %v5552, 1e-12
  %v5605 = vadd.f32 %v5557, 1e-12
  %v5606 = vadd.f32 %v5560, 1e-12
  %v5607 = vadd.f32 %v5565, 1e-12
  %v5608 = vadd.f32 %v5568, 1e-12
  %v5609 = vadd.f32 %v5573, 1e-12
  %v5610 = vadd.f32 %v5576, 1e-12
  %v5611 = vrcp.pop %v5579
  %v5612 = vrcp.pop %v5580
  %v5613 = vrcp.pop %v5581
  %v5614 = vrcp.pop %v5582
  %v5615 = vrcp.pop %v5583
  %v5616 = vrcp.pop %v5584
  %v5617 = vrcp.pop %v5585
  %v5618 = vrcp.pop %v5586
  %v5619 = vrcp.pop %v5587
  %v5620 = vrcp.pop %v5588
  %v5621 = vrcp.pop %v5589
  %v5622 = vrcp.pop %v5590
  %v5623 = vrcp.pop %v5591
  %v5624 = vrcp.pop %v5592
  %v5625 = vrcp.pop %v5593
  %v5626 = vrcp.pop %v5594
  %v5627 = vrcp.pop %v5595
  %v5628 = vrcp.pop %v5596
  %v5629 = vrcp.pop %v5597
  %v5630 = vrcp.pop %v5598
  %v5631 = vrcp.pop %v5599
  %v5632 = vrcp.pop %v5600
  %v5633 = vrcp.pop %v5601
  %v5634 = vrcp.pop %v5602
  %v5635 = vrcp.pop %v5603
  %v5636 = vrcp.pop %v5604
  %v5637 = vrcp.pop %v5605
  %v5638 = vrcp.pop %v5606
  %v5639 = vrcp.pop %v5607
  %v5640 = vrcp.pop %v5608
  %v5641 = vrcp.pop %v5609
  %v5642 = vrcp.pop %v5610
  %5675 = vrot.lane.b32.xlu0 %v5611, 120
  %v5676 = vpop.permute.xlu0 %5675
  %5677 = vrot.lane.b32.xlu0 %v5612, 120
  %v5678 = vpop.permute.xlu0 %5677
  %5679 = vrot.lane.b32.xlu0 %v5613, 120
  %v5680 = vpop.permute.xlu0 %5679
  %5681 = vrot.lane.b32.xlu0 %v5614, 120
  %v5682 = vpop.permute.xlu0 %5681
  %5683 = vrot.lane.b32.xlu0 %v5615, 120
  %v5684 = vpop.permute.xlu0 %5683
  %5685 = vrot.lane.b32.xlu0 %v5616, 120
  %v5686 = vpop.permute.xlu0 %5685
  %5687 = vrot.lane.b32.xlu0 %v5617, 120
  %v5688 = vpop.permute.xlu0 %5687
  %5689 = vrot.lane.b32.xlu0 %v5618, 120
  %v5690 = vpop.permute.xlu0 %5689
  %5691 = vrot.lane.b32.xlu0 %v5619, 120
  %v5692 = vpop.permute.xlu0 %5691
  %5693 = vrot.lane.b32.xlu0 %v5620, 120
  %v5694 = vpop.permute.xlu0 %5693
  %5695 = vrot.lane.b32.xlu0 %v5621, 120
  %v5696 = vpop.permute.xlu0 %5695
  %5697 = vrot.lane.b32.xlu0 %v5622, 120
  %v5698 = vpop.permute.xlu0 %5697
  %5699 = vrot.lane.b32.xlu0 %v5623, 120
  %v5700 = vpop.permute.xlu0 %5699
  %5701 = vrot.lane.b32.xlu0 %v5624, 120
  %v5702 = vpop.permute.xlu0 %5701
  %5703 = vrot.lane.b32.xlu0 %v5625, 120
  %v5704 = vpop.permute.xlu0 %5703
  %5705 = vrot.lane.b32.xlu0 %v5626, 120
  %v5706 = vpop.permute.xlu0 %5705
  %5707 = vrot.lane.b32.xlu0 %v5627, 120
  %v5708 = vpop.permute.xlu0 %5707
  %5709 = vrot.lane.b32.xlu0 %v5628, 120
  %v5710 = vpop.permute.xlu0 %5709
  %5711 = vrot.lane.b32.xlu0 %v5629, 120
  %v5712 = vpop.permute.xlu0 %5711
  %5713 = vrot.lane.b32.xlu0 %v5630, 120
  %v5714 = vpop.permute.xlu0 %5713
  %5715 = vrot.lane.b32.xlu0 %v5631, 120
  %v5716 = vpop.permute.xlu0 %5715
  %5717 = vrot.lane.b32.xlu0 %v5632, 120
  %v5718 = vpop.permute.xlu0 %5717
  %5719 = vrot.lane.b32.xlu0 %v5633, 120
  %v5720 = vpop.permute.xlu0 %5719
  %5721 = vrot.lane.b32.xlu0 %v5634, 120
  %v5722 = vpop.permute.xlu0 %5721
  %5723 = vrot.lane.b32.xlu0 %v5635, 120
  %v5724 = vpop.permute.xlu0 %5723
  %5725 = vrot.lane.b32.xlu0 %v5636, 120
  %v5726 = vpop.permute.xlu0 %5725
  %5727 = vrot.lane.b32.xlu0 %v5637, 120
  %v5728 = vpop.permute.xlu0 %5727
  %5729 = vrot.lane.b32.xlu0 %v5638, 120
  %v5730 = vpop.permute.xlu0 %5729
  %5731 = vrot.lane.b32.xlu0 %v5639, 120
  %v5732 = vpop.permute.xlu0 %5731
  %5733 = vrot.lane.b32.xlu0 %v5640, 120
  %v5734 = vpop.permute.xlu0 %5733
  %5735 = vrot.lane.b32.xlu0 %v5641, 120
  %v5736 = vpop.permute.xlu0 %5735
  %5737 = vrot.lane.b32.xlu0 %v5642, 120
  %v5738 = vpop.permute.xlu0 %5737
  %v5771 = vmul.f32 %v5453, %v5676
  %v5772 = vmul.f32 %v5456, %v5678
  %v5773 = vmul.f32 %v5461, %v5680
  %v5774 = vmul.f32 %v5464, %v5682
  %v5775 = vmul.f32 %v5469, %v5684
  %v5776 = vmul.f32 %v5472, %v5686
  %v5777 = vmul.f32 %v5477, %v5688
  %v5778 = vmul.f32 %v5480, %v5690
  %v5779 = vmul.f32 %v5485, %v5692
  %v5780 = vmul.f32 %v5488, %v5694
  %v5781 = vmul.f32 %v5493, %v5696
  %v5782 = vmul.f32 %v5496, %v5698
  %v5783 = vmul.f32 %v5501, %v5700
  %v5784 = vmul.f32 %v5504, %v5702
  %v5785 = vmul.f32 %v5509, %v5704
  %v5786 = vmul.f32 %v5512, %v5706
  %v5787 = vmul.f32 %v5517, %v5708
  %v5788 = vmul.f32 %v5520, %v5710
  %v5789 = vmul.f32 %v5525, %v5712
  %v5790 = vmul.f32 %v5528, %v5714
  %v5791 = vmul.f32 %v5533, %v5716
  %v5792 = vmul.f32 %v5536, %v5718
  %v5793 = vmul.f32 %v5541, %v5720
  %v5794 = vmul.f32 %v5544, %v5722
  %v5795 = vmul.f32 %v5549, %v5724
  %v5796 = vmul.f32 %v5552, %v5726
  %v5797 = vmul.f32 %v5557, %v5728
  %v5798 = vmul.f32 %v5560, %v5730
  %v5799 = vmul.f32 %v5565, %v5732
  %v5800 = vmul.f32 %v5568, %v5734
  %v5801 = vmul.f32 %v5573, %v5736
  %v5802 = vmul.f32 %v5576, %v5738
  %5835 = vrot.lane.b32.xlu0 %v4849, 120
  %v5836 = vpop.permute.xlu0 %5835
  %5837 = vrot.lane.b32.xlu0 %v4852, 120
  %v5838 = vpop.permute.xlu0 %5837
  %5839 = vrot.lane.b32.xlu0 %v4857, 120
  %v5840 = vpop.permute.xlu0 %5839
  %5841 = vrot.lane.b32.xlu0 %v4860, 120
  %v5842 = vpop.permute.xlu0 %5841
  %5843 = vrot.lane.b32.xlu0 %v4865, 120
  %v5844 = vpop.permute.xlu0 %5843
  %5845 = vrot.lane.b32.xlu0 %v4868, 120
  %v5846 = vpop.permute.xlu0 %5845
  %5847 = vrot.lane.b32.xlu0 %v4873, 120
  %v5848 = vpop.permute.xlu0 %5847
  %5849 = vrot.lane.b32.xlu0 %v4876, 120
  %v5850 = vpop.permute.xlu0 %5849
  %5851 = vrot.lane.b32.xlu0 %v4881, 120
  %v5852 = vpop.permute.xlu0 %5851
  %5853 = vrot.lane.b32.xlu0 %v4884, 120
  %v5854 = vpop.permute.xlu0 %5853
  %5855 = vrot.lane.b32.xlu0 %v4889, 120
  %v5856 = vpop.permute.xlu0 %5855
  %5857 = vrot.lane.b32.xlu0 %v4892, 120
  %v5858 = vpop.permute.xlu0 %5857
  %5859 = vrot.lane.b32.xlu0 %v4897, 120
  %v5860 = vpop.permute.xlu0 %5859
  %5861 = vrot.lane.b32.xlu0 %v4900, 120
  %v5862 = vpop.permute.xlu0 %5861
  %5863 = vrot.lane.b32.xlu0 %v4905, 120
  %v5864 = vpop.permute.xlu0 %5863
  %5865 = vrot.lane.b32.xlu0 %v4908, 120
  %v5866 = vpop.permute.xlu0 %5865
  %5867 = vrot.lane.b32.xlu0 %v4913, 120
  %v5868 = vpop.permute.xlu0 %5867
  %5869 = vrot.lane.b32.xlu0 %v4916, 120
  %v5870 = vpop.permute.xlu0 %5869
  %5871 = vrot.lane.b32.xlu0 %v4921, 120
  %v5872 = vpop.permute.xlu0 %5871
  %5873 = vrot.lane.b32.xlu0 %v4924, 120
  %v5874 = vpop.permute.xlu0 %5873
  %5875 = vrot.lane.b32.xlu0 %v4929, 120
  %v5876 = vpop.permute.xlu0 %5875
  %5877 = vrot.lane.b32.xlu0 %v4932, 120
  %v5878 = vpop.permute.xlu0 %5877
  %5879 = vrot.lane.b32.xlu0 %v4937, 120
  %v5880 = vpop.permute.xlu0 %5879
  %5881 = vrot.lane.b32.xlu0 %v4940, 120
  %v5882 = vpop.permute.xlu0 %5881
  %5883 = vrot.lane.b32.xlu0 %v4945, 120
  %v5884 = vpop.permute.xlu0 %5883
  %5885 = vrot.lane.b32.xlu0 %v4948, 120
  %v5886 = vpop.permute.xlu0 %5885
  %5887 = vrot.lane.b32.xlu0 %v4953, 120
  %v5888 = vpop.permute.xlu0 %5887
  %5889 = vrot.lane.b32.xlu0 %v4956, 120
  %v5890 = vpop.permute.xlu0 %5889
  %5891 = vrot.lane.b32.xlu0 %v4961, 120
  %v5892 = vpop.permute.xlu0 %5891
  %5893 = vrot.lane.b32.xlu0 %v4964, 120
  %v5894 = vpop.permute.xlu0 %5893
  %5895 = vrot.lane.b32.xlu0 %v4969, 120
  %v5896 = vpop.permute.xlu0 %5895
  %5897 = vrot.lane.b32.xlu0 %v4972, 120
  %v5898 = vpop.permute.xlu0 %5897
  %v5931 = vadd.f32 %v5771, %v5836
  %v5932 = vadd.f32 %v5772, %v5838
  %v5933 = vadd.f32 %v5773, %v5840
  %v5934 = vadd.f32 %v5774, %v5842
  %v5935 = vadd.f32 %v5775, %v5844
  %v5936 = vadd.f32 %v5776, %v5846
  %v5937 = vadd.f32 %v5777, %v5848
  %v5938 = vadd.f32 %v5778, %v5850
  %v5939 = vadd.f32 %v5779, %v5852
  %v5940 = vadd.f32 %v5780, %v5854
  %v5941 = vadd.f32 %v5781, %v5856
  %v5942 = vadd.f32 %v5782, %v5858
  %v5943 = vadd.f32 %v5783, %v5860
  %v5944 = vadd.f32 %v5784, %v5862
  %v5945 = vadd.f32 %v5785, %v5864
  %v5946 = vadd.f32 %v5786, %v5866
  %v5947 = vadd.f32 %v5787, %v5868
  %v5948 = vadd.f32 %v5788, %v5870
  %v5949 = vadd.f32 %v5789, %v5872
  %v5950 = vadd.f32 %v5790, %v5874
  %v5951 = vadd.f32 %v5791, %v5876
  %v5952 = vadd.f32 %v5792, %v5878
  %v5953 = vadd.f32 %v5793, %v5880
  %v5954 = vadd.f32 %v5794, %v5882
  %v5955 = vadd.f32 %v5795, %v5884
  %v5956 = vadd.f32 %v5796, %v5886
  %v5957 = vadd.f32 %v5797, %v5888
  %v5958 = vadd.f32 %v5798, %v5890
  %v5959 = vadd.f32 %v5799, %v5892
  %v5960 = vadd.f32 %v5800, %v5894
  %v5961 = vadd.f32 %v5801, %v5896
  %v5962 = vadd.f32 %v5802, %v5898
  %v5963 = vpack.c.bf16 %v5932, %v5931
  %v5964 = vpack.c.bf16 %v5934, %v5933
  %v5965 = vpack.c.bf16 %v5936, %v5935
  %v5966 = vpack.c.bf16 %v5938, %v5937
  %v5967 = vpack.c.bf16 %v5940, %v5939
  %v5968 = vpack.c.bf16 %v5942, %v5941
  %v5969 = vpack.c.bf16 %v5944, %v5943
  %v5970 = vpack.c.bf16 %v5946, %v5945
  %v5971 = vpack.c.bf16 %v5948, %v5947
  %v5972 = vpack.c.bf16 %v5950, %v5949
  %v5973 = vpack.c.bf16 %v5952, %v5951
  %v5974 = vpack.c.bf16 %v5954, %v5953
  %v5975 = vpack.c.bf16 %v5956, %v5955
  %v5976 = vpack.c.bf16 %v5958, %v5957
  %v5977 = vpack.c.bf16 %v5960, %v5959
  %v5978 = vpack.c.bf16 %v5962, %v5961
  %v5980 = vlaneseq
  %v5981 = vshrl.u32 %v5980, 7
  %v5982 = vsub.s32 0, %v5981
  %v5983 = vrot.slane %v4976, %v5982
  %v5986 = vsel %vm5044, %v5963, 0
  %v5989 = vsel %vm5044, %v5964, 0
  %v5992 = vsel %vm5044, %v5965, 0
  %v5995 = vsel %vm5044, %v5966, 0
  %v5998 = vsel %vm5044, %v5967, 0
  %v6001 = vsel %vm5044, %v5968, 0
  %v6004 = vsel %vm5044, %v5969, 0
  %v6007 = vsel %vm5044, %v5970, 0
  %v6010 = vsel %vm5044, %v5971, 0
  %v6013 = vsel %vm5044, %v5972, 0
  %v6016 = vsel %vm5044, %v5973, 0
  %v6019 = vsel %vm5044, %v5974, 0
  %v6022 = vsel %vm5044, %v5975, 0
  %v6025 = vsel %vm5044, %v5976, 0
  %v6028 = vsel %vm5044, %v5977, 0
  %v6031 = vsel %vm5044, %v5978, 0
  %vm6033 = vcmask 1043456
  %v6035 = vsel %vm6033, %v4975, 0
  %6037 = vmatprep.subr.bf16.mxu0 0
  %6038 = vmatpush1.bf16.msra.mxu0 %v6035
  %6039 = vmatprep.subr.bf16.mxu0 0
  %6040 = vmatpush1.bf16.msra.mxu0 0
  %6041 = vmatprep.subr.bf16.mxu0 0
  %6042 = vmatpush1.bf16.msra.mxu0 0
  %6043 = vmatprep.subr.bf16.mxu0 0
  %6044 = vmatpush1.bf16.msra.mxu0 0
  %6045 = vmatprep.subr.bf16.mxu0 0
  %6046 = vmatpush1.bf16.msra.mxu0 0
  %6047 = vmatprep.subr.bf16.mxu0 0
  %6048 = vmatpush1.bf16.msra.mxu0 0
  %6049 = vmatprep.subr.bf16.mxu0 0
  %6050 = vmatpush1.bf16.msra.mxu0 0
  %6051 = vmatprep.subr.bf16.mxu0 0
  %6052 = vmatpush1.bf16.msra.mxu0 0
  %6053 = vmatprep.subr.bf16.mxu0 0
  %6054 = vmatpush1.bf16.msra.mxu0 0
  %6055 = vmatprep.subr.bf16.mxu0 0
  %6056 = vmatpush1.bf16.msra.mxu0 0
  %6057 = vmatprep.subr.bf16.mxu0 0
  %6058 = vmatpush1.bf16.msra.mxu0 0
  %6059 = vmatprep.subr.bf16.mxu0 0
  %6060 = vmatpush1.bf16.msra.mxu0 0
  %6061 = vmatprep.subr.bf16.mxu0 0
  %6062 = vmatpush1.bf16.msra.mxu0 0
  %6063 = vmatprep.subr.bf16.mxu0 0
  %6064 = vmatpush1.bf16.msra.mxu0 0
  %6065 = vmatprep.subr.bf16.mxu0 0
  %6066 = vmatpush1.bf16.msra.mxu0 0
  %6067 = vmatprep.subr.bf16.mxu0 0
  %6068 = vmatpush1.bf16.msra.mxu0 0
  %6069 = vmatprep.mubr.bf16.mxu0 0
  %6070 = vmatmul.mubr.bf16.gmra.mrb[0].mxu0 %v5986
  %v6071 = vpop.f32.mrb[0].mxu0
  %v6072 = vadd.f32 %v5983, %v6071
  %v6073 = vpop.f32.mrb[0].mxu0
  %v6074 = vpop.f32.mrb[0].mxu0
  %v6075 = vadd.f32 %v5983, %v6074
  %v6076 = vpop.f32.mrb[0].mxu0
  %6077 = vmatprep.mubr.bf16.mxu0 0
  %6078 = vmatmul.mubr.bf16.gmra.mrb[0].mxu0 %v5989
  %v6079 = vpop.f32.mrb[0].mxu0
  %v6080 = vadd.f32 %v5983, %v6079
  %v6081 = vpop.f32.mrb[0].mxu0
  %v6082 = vpop.f32.mrb[0].mxu0
  %v6083 = vadd.f32 %v5983, %v6082
  %v6084 = vpop.f32.mrb[0].mxu0
  %6085 = vmatprep.mubr.bf16.mxu0 0
  %6086 = vmatmul.mubr.bf16.gmra.mrb[0].mxu0 %v5992
  %v6087 = vpop.f32.mrb[0].mxu0
  %v6088 = vadd.f32 %v5983, %v6087
  %v6089 = vpop.f32.mrb[0].mxu0
  %v6090 = vpop.f32.mrb[0].mxu0
  %v6091 = vadd.f32 %v5983, %v6090
  %v6092 = vpop.f32.mrb[0].mxu0
  %6093 = vmatprep.mubr.bf16.mxu0 0
  %6094 = vmatmul.mubr.bf16.gmra.mrb[0].mxu0 %v5995
  %v6095 = vpop.f32.mrb[0].mxu0
  %v6096 = vadd.f32 %v5983, %v6095
  %v6097 = vpop.f32.mrb[0].mxu0
  %v6098 = vpop.f32.mrb[0].mxu0
  %v6099 = vadd.f32 %v5983, %v6098
  %v6100 = vpop.f32.mrb[0].mxu0
  %6101 = vmatprep.mubr.bf16.mxu0 0
  %6102 = vmatmul.mubr.bf16.gmra.mrb[0].mxu0 %v5998
  %v6103 = vpop.f32.mrb[0].mxu0
  %v6104 = vadd.f32 %v5983, %v6103
  %v6105 = vpop.f32.mrb[0].mxu0
  %v6106 = vpop.f32.mrb[0].mxu0
  %v6107 = vadd.f32 %v5983, %v6106
  %v6108 = vpop.f32.mrb[0].mxu0
  %6109 = vmatprep.mubr.bf16.mxu0 0
  %6110 = vmatmul.mubr.bf16.gmra.mrb[0].mxu0 %v6001
  %v6111 = vpop.f32.mrb[0].mxu0
  %v6112 = vadd.f32 %v5983, %v6111
  %v6113 = vpop.f32.mrb[0].mxu0
  %v6114 = vpop.f32.mrb[0].mxu0
  %v6115 = vadd.f32 %v5983, %v6114
  %v6116 = vpop.f32.mrb[0].mxu0
  %6117 = vmatprep.mubr.bf16.mxu0 0
  %6118 = vmatmul.mubr.bf16.gmra.mrb[0].mxu0 %v6004
  %v6119 = vpop.f32.mrb[0].mxu0
  %v6120 = vadd.f32 %v5983, %v6119
  %v6121 = vpop.f32.mrb[0].mxu0
  %v6122 = vpop.f32.mrb[0].mxu0
  %v6123 = vadd.f32 %v5983, %v6122
  %v6124 = vpop.f32.mrb[0].mxu0
  %6125 = vmatprep.mubr.bf16.mxu0 0
  %6126 = vmatmul.mubr.bf16.gmra.mrb[0].mxu0 %v6007
  %v6127 = vpop.f32.mrb[0].mxu0
  %v6128 = vadd.f32 %v5983, %v6127
  %v6129 = vpop.f32.mrb[0].mxu0
  %v6130 = vpop.f32.mrb[0].mxu0
  %v6131 = vadd.f32 %v5983, %v6130
  %v6132 = vpop.f32.mrb[0].mxu0
  %6133 = vmatprep.mubr.bf16.mxu0 0
  %6134 = vmatmul.mubr.bf16.gmra.mrb[0].mxu0 %v6010
  %v6135 = vpop.f32.mrb[0].mxu0
  %v6136 = vadd.f32 %v5983, %v6135
  %v6137 = vpop.f32.mrb[0].mxu0
  %v6138 = vpop.f32.mrb[0].mxu0
  %v6139 = vadd.f32 %v5983, %v6138
  %v6140 = vpop.f32.mrb[0].mxu0
  %6141 = vmatprep.mubr.bf16.mxu0 0
  %6142 = vmatmul.mubr.bf16.gmra.mrb[0].mxu0 %v6013
  %v6143 = vpop.f32.mrb[0].mxu0
  %v6144 = vadd.f32 %v5983, %v6143
  %v6145 = vpop.f32.mrb[0].mxu0
  %v6146 = vpop.f32.mrb[0].mxu0
  %v6147 = vadd.f32 %v5983, %v6146
  %v6148 = vpop.f32.mrb[0].mxu0
  %6149 = vmatprep.mubr.bf16.mxu0 0
  %6150 = vmatmul.mubr.bf16.gmra.mrb[0].mxu0 %v6016
  %v6151 = vpop.f32.mrb[0].mxu0
  %v6152 = vadd.f32 %v5983, %v6151
  %v6153 = vpop.f32.mrb[0].mxu0
  %v6154 = vpop.f32.mrb[0].mxu0
  %v6155 = vadd.f32 %v5983, %v6154
  %v6156 = vpop.f32.mrb[0].mxu0
  %6157 = vmatprep.mubr.bf16.mxu0 0
  %6158 = vmatmul.mubr.bf16.gmra.mrb[0].mxu0 %v6019
  %v6159 = vpop.f32.mrb[0].mxu0
  %v6160 = vadd.f32 %v5983, %v6159
  %v6161 = vpop.f32.mrb[0].mxu0
  %v6162 = vpop.f32.mrb[0].mxu0
  %v6163 = vadd.f32 %v5983, %v6162
  %v6164 = vpop.f32.mrb[0].mxu0
  %6165 = vmatprep.mubr.bf16.mxu0 0
  %6166 = vmatmul.mubr.bf16.gmra.mrb[0].mxu0 %v6022
  %v6167 = vpop.f32.mrb[0].mxu0
  %v6168 = vadd.f32 %v5983, %v6167
  %v6169 = vpop.f32.mrb[0].mxu0
  %v6170 = vpop.f32.mrb[0].mxu0
  %v6171 = vadd.f32 %v5983, %v6170
  %v6172 = vpop.f32.mrb[0].mxu0
  %6173 = vmatprep.mubr.bf16.mxu0 0
  %6174 = vmatmul.mubr.bf16.gmra.mrb[0].mxu0 %v6025
  %v6175 = vpop.f32.mrb[0].mxu0
  %v6176 = vadd.f32 %v5983, %v6175
  %v6177 = vpop.f32.mrb[0].mxu0
  %v6178 = vpop.f32.mrb[0].mxu0
  %v6179 = vadd.f32 %v5983, %v6178
  %v6180 = vpop.f32.mrb[0].mxu0
  %6181 = vmatprep.mubr.bf16.mxu0 0
  %6182 = vmatmul.mubr.bf16.gmra.mrb[0].mxu0 %v6028
  %v6183 = vpop.f32.mrb[0].mxu0
  %v6184 = vadd.f32 %v5983, %v6183
  %v6185 = vpop.f32.mrb[0].mxu0
  %v6186 = vpop.f32.mrb[0].mxu0
  %v6187 = vadd.f32 %v5983, %v6186
  %v6188 = vpop.f32.mrb[0].mxu0
  %6189 = vmatprep.mubr.bf16.mxu0 0
  %6190 = vmatmul.mubr.bf16.gmra.mrb[0].mxu0 %v6031
  %v6191 = vpop.f32.mrb[0].mxu0
  %v6192 = vadd.f32 %v5983, %v6191
  %v6193 = vpop.f32.mrb[0].mxu0
  %v6194 = vpop.f32.mrb[0].mxu0
  %v6195 = vadd.f32 %v5983, %v6194
  %v6196 = vpop.f32.mrb[0].mxu0
  %6197 = vdwg.mxu0
  %vm6198 = vcmask 130048
  %v6199 = vsel %vm6198, %v6072, 0.0
  %v6200 = vsel %vm6198, %v6075, 0.0
  %v6201 = vadd.f32 %v6199, %v6200
  %v6202 = vsel %vm6198, %v6080, 0.0
  %v6203 = vadd.f32 %v6201, %v6202
  %v6204 = vsel %vm6198, %v6083, 0.0
  %v6205 = vadd.f32 %v6203, %v6204
  %v6206 = vsel %vm6198, %v6088, 0.0
  %v6207 = vadd.f32 %v6205, %v6206
  %v6208 = vsel %vm6198, %v6091, 0.0
  %v6209 = vadd.f32 %v6207, %v6208
  %v6210 = vsel %vm6198, %v6096, 0.0
  %v6211 = vadd.f32 %v6209, %v6210
  %v6212 = vsel %vm6198, %v6099, 0.0
  %v6213 = vadd.f32 %v6211, %v6212
  %v6214 = vsel %vm6198, %v6104, 0.0
  %v6215 = vadd.f32 %v6213, %v6214
  %v6216 = vsel %vm6198, %v6107, 0.0
  %v6217 = vadd.f32 %v6215, %v6216
  %v6218 = vsel %vm6198, %v6112, 0.0
  %v6219 = vadd.f32 %v6217, %v6218
  %v6220 = vsel %vm6198, %v6115, 0.0
  %v6221 = vadd.f32 %v6219, %v6220
  %v6222 = vsel %vm6198, %v6120, 0.0
  %v6223 = vadd.f32 %v6221, %v6222
  %v6224 = vsel %vm6198, %v6123, 0.0
  %v6225 = vadd.f32 %v6223, %v6224
  %v6226 = vsel %vm6198, %v6128, 0.0
  %v6227 = vadd.f32 %v6225, %v6226
  %v6228 = vsel %vm6198, %v6131, 0.0
  %v6229 = vadd.f32 %v6227, %v6228
  %v6230 = vsel %vm6198, %v6136, 0.0
  %v6231 = vadd.f32 %v6229, %v6230
  %v6232 = vsel %vm6198, %v6139, 0.0
  %v6233 = vadd.f32 %v6231, %v6232
  %v6234 = vsel %vm6198, %v6144, 0.0
  %v6235 = vadd.f32 %v6233, %v6234
  %v6236 = vsel %vm6198, %v6147, 0.0
  %v6237 = vadd.f32 %v6235, %v6236
  %v6238 = vsel %vm6198, %v6152, 0.0
  %v6239 = vadd.f32 %v6237, %v6238
  %v6240 = vsel %vm6198, %v6155, 0.0
  %v6241 = vadd.f32 %v6239, %v6240
  %v6242 = vsel %vm6198, %v6160, 0.0
  %v6243 = vadd.f32 %v6241, %v6242
  %v6244 = vsel %vm6198, %v6163, 0.0
  %v6245 = vadd.f32 %v6243, %v6244
  %v6246 = vsel %vm6198, %v6168, 0.0
  %v6247 = vadd.f32 %v6245, %v6246
  %v6248 = vsel %vm6198, %v6171, 0.0
  %v6249 = vadd.f32 %v6247, %v6248
  %v6250 = vsel %vm6198, %v6176, 0.0
  %v6251 = vadd.f32 %v6249, %v6250
  %v6252 = vsel %vm6198, %v6179, 0.0
  %v6253 = vadd.f32 %v6251, %v6252
  %v6254 = vsel %vm6198, %v6184, 0.0
  %v6255 = vadd.f32 %v6253, %v6254
  %v6256 = vsel %vm6198, %v6187, 0.0
  %v6257 = vadd.f32 %v6255, %v6256
  %v6258 = vsel %vm6198, %v6192, 0.0
  %v6259 = vadd.f32 %v6257, %v6258
  %v6260 = vsel %vm6198, %v6195, 0.0
  %v6261 = vadd.f32 %v6259, %v6260
  %v6262 = vrot.slane %v6261, 4
  %v6263 = vadd.f32 %v6261, %v6262
  %v6264 = vrot.slane %v6263, 2
  %v6265 = vadd.f32 %v6263, %v6264
  %v6266 = vrot.slane %v6265, 1
  %v6267 = vadd.f32 %v6265, %v6266
  %v6268 = vmul.f32 %v6267, %v2168
  %v6269 = vsub.f32 %v6072, %v6268
  %v6270 = vsub.f32 %v6075, %v6268
  %v6271 = vsub.f32 %v6080, %v6268
  %v6272 = vsub.f32 %v6083, %v6268
  %v6273 = vsub.f32 %v6088, %v6268
  %v6274 = vsub.f32 %v6091, %v6268
  %v6275 = vsub.f32 %v6096, %v6268
  %v6276 = vsub.f32 %v6099, %v6268
  %v6277 = vsub.f32 %v6104, %v6268
  %v6278 = vsub.f32 %v6107, %v6268
  %v6279 = vsub.f32 %v6112, %v6268
  %v6280 = vsub.f32 %v6115, %v6268
  %v6281 = vsub.f32 %v6120, %v6268
  %v6282 = vsub.f32 %v6123, %v6268
  %v6283 = vsub.f32 %v6128, %v6268
  %v6284 = vsub.f32 %v6131, %v6268
  %v6285 = vsub.f32 %v6136, %v6268
  %v6286 = vsub.f32 %v6139, %v6268
  %v6287 = vsub.f32 %v6144, %v6268
  %v6288 = vsub.f32 %v6147, %v6268
  %v6289 = vsub.f32 %v6152, %v6268
  %v6290 = vsub.f32 %v6155, %v6268
  %v6291 = vsub.f32 %v6160, %v6268
  %v6292 = vsub.f32 %v6163, %v6268
  %v6293 = vsub.f32 %v6168, %v6268
  %v6294 = vsub.f32 %v6171, %v6268
  %v6295 = vsub.f32 %v6176, %v6268
  %v6296 = vsub.f32 %v6179, %v6268
  %v6297 = vsub.f32 %v6184, %v6268
  %v6298 = vsub.f32 %v6187, %v6268
  %v6299 = vsub.f32 %v6192, %v6268
  %v6300 = vsub.f32 %v6195, %v6268
  %v6301 = vmul.f32 %v6269, %v6269
  %v6302 = vmul.f32 %v6270, %v6270
  %v6303 = vmul.f32 %v6271, %v6271
  %v6304 = vmul.f32 %v6272, %v6272
  %v6305 = vmul.f32 %v6273, %v6273
  %v6306 = vmul.f32 %v6274, %v6274
  %v6307 = vmul.f32 %v6275, %v6275
  %v6308 = vmul.f32 %v6276, %v6276
  %v6309 = vmul.f32 %v6277, %v6277
  %v6310 = vmul.f32 %v6278, %v6278
  %v6311 = vmul.f32 %v6279, %v6279
  %v6312 = vmul.f32 %v6280, %v6280
  %v6313 = vmul.f32 %v6281, %v6281
  %v6314 = vmul.f32 %v6282, %v6282
  %v6315 = vmul.f32 %v6283, %v6283
  %v6316 = vmul.f32 %v6284, %v6284
  %v6317 = vmul.f32 %v6285, %v6285
  %v6318 = vmul.f32 %v6286, %v6286
  %v6319 = vmul.f32 %v6287, %v6287
  %v6320 = vmul.f32 %v6288, %v6288
  %v6321 = vmul.f32 %v6289, %v6289
  %v6322 = vmul.f32 %v6290, %v6290
  %v6323 = vmul.f32 %v6291, %v6291
  %v6324 = vmul.f32 %v6292, %v6292
  %v6325 = vmul.f32 %v6293, %v6293
  %v6326 = vmul.f32 %v6294, %v6294
  %v6327 = vmul.f32 %v6295, %v6295
  %v6328 = vmul.f32 %v6296, %v6296
  %v6329 = vmul.f32 %v6297, %v6297
  %v6330 = vmul.f32 %v6298, %v6298
  %v6331 = vmul.f32 %v6299, %v6299
  %v6332 = vmul.f32 %v6300, %v6300
  %v6333 = vsel %vm6198, %v6301, 0.0
  %v6334 = vsel %vm6198, %v6302, 0.0
  %v6335 = vadd.f32 %v6333, %v6334
  %v6336 = vsel %vm6198, %v6303, 0.0
  %v6337 = vadd.f32 %v6335, %v6336
  %v6338 = vsel %vm6198, %v6304, 0.0
  %v6339 = vadd.f32 %v6337, %v6338
  %v6340 = vsel %vm6198, %v6305, 0.0
  %v6341 = vadd.f32 %v6339, %v6340
  %v6342 = vsel %vm6198, %v6306, 0.0
  %v6343 = vadd.f32 %v6341, %v6342
  %v6344 = vsel %vm6198, %v6307, 0.0
  %v6345 = vadd.f32 %v6343, %v6344
  %v6346 = vsel %vm6198, %v6308, 0.0
  %v6347 = vadd.f32 %v6345, %v6346
  %v6348 = vsel %vm6198, %v6309, 0.0
  %v6349 = vadd.f32 %v6347, %v6348
  %v6350 = vsel %vm6198, %v6310, 0.0
  %v6351 = vadd.f32 %v6349, %v6350
  %v6352 = vsel %vm6198, %v6311, 0.0
  %v6353 = vadd.f32 %v6351, %v6352
  %v6354 = vsel %vm6198, %v6312, 0.0
  %v6355 = vadd.f32 %v6353, %v6354
  %v6356 = vsel %vm6198, %v6313, 0.0
  %v6357 = vadd.f32 %v6355, %v6356
  %v6358 = vsel %vm6198, %v6314, 0.0
  %v6359 = vadd.f32 %v6357, %v6358
  %v6360 = vsel %vm6198, %v6315, 0.0
  %v6361 = vadd.f32 %v6359, %v6360
  %v6362 = vsel %vm6198, %v6316, 0.0
  %v6363 = vadd.f32 %v6361, %v6362
  %v6364 = vsel %vm6198, %v6317, 0.0
  %v6365 = vadd.f32 %v6363, %v6364
  %v6366 = vsel %vm6198, %v6318, 0.0
  %v6367 = vadd.f32 %v6365, %v6366
  %v6368 = vsel %vm6198, %v6319, 0.0
  %v6369 = vadd.f32 %v6367, %v6368
  %v6370 = vsel %vm6198, %v6320, 0.0
  %v6371 = vadd.f32 %v6369, %v6370
  %v6372 = vsel %vm6198, %v6321, 0.0
  %v6373 = vadd.f32 %v6371, %v6372
  %v6374 = vsel %vm6198, %v6322, 0.0
  %v6375 = vadd.f32 %v6373, %v6374
  %v6376 = vsel %vm6198, %v6323, 0.0
  %v6377 = vadd.f32 %v6375, %v6376
  %v6378 = vsel %vm6198, %v6324, 0.0
  %v6379 = vadd.f32 %v6377, %v6378
  %v6380 = vsel %vm6198, %v6325, 0.0
  %v6381 = vadd.f32 %v6379, %v6380
  %v6382 = vsel %vm6198, %v6326, 0.0
  %v6383 = vadd.f32 %v6381, %v6382
  %v6384 = vsel %vm6198, %v6327, 0.0
  %v6385 = vadd.f32 %v6383, %v6384
  %v6386 = vsel %vm6198, %v6328, 0.0
  %v6387 = vadd.f32 %v6385, %v6386
  %v6388 = vsel %vm6198, %v6329, 0.0
  %v6389 = vadd.f32 %v6387, %v6388
  %v6390 = vsel %vm6198, %v6330, 0.0
  %v6391 = vadd.f32 %v6389, %v6390
  %v6392 = vsel %vm6198, %v6331, 0.0
  %v6393 = vadd.f32 %v6391, %v6392
  %v6394 = vsel %vm6198, %v6332, 0.0
  %v6395 = vadd.f32 %v6393, %v6394
  %v6396 = vrot.slane %v6395, 4
  %v6397 = vadd.f32 %v6395, %v6396
  %v6398 = vrot.slane %v6397, 2
  %v6399 = vadd.f32 %v6397, %v6398
  %v6400 = vrot.slane %v6399, 1
  %v6401 = vadd.f32 %v6399, %v6400
  %v6402 = vmul.f32 %v6401, %v2168
  %v6403 = vadd.f32 %v6402, 1e-05
  %v6404 = vrsqrt.pop %v6403
  %v6405 = vmul.f32 %v6269, %v6404
  %v6406 = vmul.f32 %v6270, %v6404
  %v6407 = vmul.f32 %v6271, %v6404
  %v6408 = vmul.f32 %v6272, %v6404
  %v6409 = vmul.f32 %v6273, %v6404
  %v6410 = vmul.f32 %v6274, %v6404
  %v6411 = vmul.f32 %v6275, %v6404
  %v6412 = vmul.f32 %v6276, %v6404
  %v6413 = vmul.f32 %v6277, %v6404
  %v6414 = vmul.f32 %v6278, %v6404
  %v6415 = vmul.f32 %v6279, %v6404
  %v6416 = vmul.f32 %v6280, %v6404
  %v6417 = vmul.f32 %v6281, %v6404
  %v6418 = vmul.f32 %v6282, %v6404
  %v6419 = vmul.f32 %v6283, %v6404
  %v6420 = vmul.f32 %v6284, %v6404
  %v6421 = vmul.f32 %v6285, %v6404
  %v6422 = vmul.f32 %v6286, %v6404
  %v6423 = vmul.f32 %v6287, %v6404
  %v6424 = vmul.f32 %v6288, %v6404
  %v6425 = vmul.f32 %v6289, %v6404
  %v6426 = vmul.f32 %v6290, %v6404
  %v6427 = vmul.f32 %v6291, %v6404
  %v6428 = vmul.f32 %v6292, %v6404
  %v6429 = vmul.f32 %v6293, %v6404
  %v6430 = vmul.f32 %v6294, %v6404
  %v6431 = vmul.f32 %v6295, %v6404
  %v6432 = vmul.f32 %v6296, %v6404
  %v6433 = vmul.f32 %v6297, %v6404
  %v6434 = vmul.f32 %v6298, %v6404
  %v6435 = vmul.f32 %v6299, %v6404
  %v6436 = vmul.f32 %v6300, %v6404
  %v6437 = vmax.f32 %v6405, 0.0
  %v6438 = vmax.f32 %v6406, 0.0
  %v6439 = vmax.f32 %v6407, 0.0
  %v6440 = vmax.f32 %v6408, 0.0
  %v6441 = vmax.f32 %v6409, 0.0
  %v6442 = vmax.f32 %v6410, 0.0
  %v6443 = vmax.f32 %v6411, 0.0
  %v6444 = vmax.f32 %v6412, 0.0
  %v6445 = vmax.f32 %v6413, 0.0
  %v6446 = vmax.f32 %v6414, 0.0
  %v6447 = vmax.f32 %v6415, 0.0
  %v6448 = vmax.f32 %v6416, 0.0
  %v6449 = vmax.f32 %v6417, 0.0
  %v6450 = vmax.f32 %v6418, 0.0
  %v6451 = vmax.f32 %v6419, 0.0
  %v6452 = vmax.f32 %v6420, 0.0
  %v6453 = vmax.f32 %v6421, 0.0
  %v6454 = vmax.f32 %v6422, 0.0
  %v6455 = vmax.f32 %v6423, 0.0
  %v6456 = vmax.f32 %v6424, 0.0
  %v6457 = vmax.f32 %v6425, 0.0
  %v6458 = vmax.f32 %v6426, 0.0
  %v6459 = vmax.f32 %v6427, 0.0
  %v6460 = vmax.f32 %v6428, 0.0
  %v6461 = vmax.f32 %v6429, 0.0
  %v6462 = vmax.f32 %v6430, 0.0
  %v6463 = vmax.f32 %v6431, 0.0
  %v6464 = vmax.f32 %v6432, 0.0
  %v6465 = vmax.f32 %v6433, 0.0
  %v6466 = vmax.f32 %v6434, 0.0
  %v6467 = vmax.f32 %v6435, 0.0
  %v6468 = vmax.f32 %v6436, 0.0
  %v6469 = vpack.c.bf16 %v6438, %v6437
  %v6470 = vpack.c.bf16 %v6440, %v6439
  %v6471 = vpack.c.bf16 %v6442, %v6441
  %v6472 = vpack.c.bf16 %v6444, %v6443
  %v6473 = vpack.c.bf16 %v6446, %v6445
  %v6474 = vpack.c.bf16 %v6448, %v6447
  %v6475 = vpack.c.bf16 %v6450, %v6449
  %v6476 = vpack.c.bf16 %v6452, %v6451
  %v6477 = vpack.c.bf16 %v6454, %v6453
  %v6478 = vpack.c.bf16 %v6456, %v6455
  %v6479 = vpack.c.bf16 %v6458, %v6457
  %v6480 = vpack.c.bf16 %v6460, %v6459
  %v6481 = vpack.c.bf16 %v6462, %v6461
  %v6482 = vpack.c.bf16 %v6464, %v6463
  %v6483 = vpack.c.bf16 %v6466, %v6465
  %v6484 = vpack.c.bf16 %v6468, %v6467
  %v6486 = vlaneseq
  %v6487 = vshrl.u32 %v6486, 7
  %v6488 = vsub.s32 0, %v6487
  %v6489 = vrot.slane %v4979, %v6488
  %v6493 = vunpack.c.l.b16 %v4977
  %v6494 = vunpack.c.l.b16 %v4978
  %v6495 = vpack.c.b16 %v6494, %v6493
  %v6498 = vsel %vm6198, %v6469, 0
  %v6501 = vsel %vm6198, %v6470, 0
  %v6504 = vsel %vm6198, %v6471, 0
  %v6507 = vsel %vm6198, %v6472, 0
  %v6510 = vsel %vm6198, %v6473, 0
  %v6513 = vsel %vm6198, %v6474, 0
  %v6516 = vsel %vm6198, %v6475, 0
  %v6519 = vsel %vm6198, %v6476, 0
  %v6522 = vsel %vm6198, %v6477, 0
  %v6525 = vsel %vm6198, %v6478, 0
  %v6528 = vsel %vm6198, %v6479, 0
  %v6531 = vsel %vm6198, %v6480, 0
  %v6534 = vsel %vm6198, %v6481, 0
  %v6537 = vsel %vm6198, %v6482, 0
  %v6540 = vsel %vm6198, %v6483, 0
  %v6543 = vsel %vm6198, %v6484, 0
  %6545 = vmatprep.subr.bf16.mxu0 0
  %6546 = vmatpush1.bf16.msra.mxu0 %v6495
  %6547 = vmatprep.subr.bf16.mxu0 0
  %6548 = vmatpush1.bf16.msra.mxu0 0
  %6549 = vmatprep.subr.bf16.mxu0 0
  %6550 = vmatpush1.bf16.msra.mxu0 0
  %6551 = vmatprep.subr.bf16.mxu0 0
  %6552 = vmatpush1.bf16.msra.mxu0 0
  %6553 = vmatprep.subr.bf16.mxu0 0
  %6554 = vmatpush1.bf16.msra.mxu0 0
  %6555 = vmatprep.subr.bf16.mxu0 0
  %6556 = vmatpush1.bf16.msra.mxu0 0
  %6557 = vmatprep.subr.bf16.mxu0 0
  %6558 = vmatpush1.bf16.msra.mxu0 0
  %6559 = vmatprep.subr.bf16.mxu0 0
  %6560 = vmatpush1.bf16.msra.mxu0 0
  %6561 = vmatprep.subr.bf16.mxu0 0
  %6562 = vmatpush1.bf16.msra.mxu0 0
  %6563 = vmatprep.subr.bf16.mxu0 0
  %6564 = vmatpush1.bf16.msra.mxu0 0
  %6565 = vmatprep.subr.bf16.mxu0 0
  %6566 = vmatpush1.bf16.msra.mxu0 0
  %6567 = vmatprep.subr.bf16.mxu0 0
  %6568 = vmatpush1.bf16.msra.mxu0 0
  %6569 = vmatprep.subr.bf16.mxu0 0
  %6570 = vmatpush1.bf16.msra.mxu0 0
  %6571 = vmatprep.subr.bf16.mxu0 0
  %6572 = vmatpush1.bf16.msra.mxu0 0
  %6573 = vmatprep.subr.bf16.mxu0 0
  %6574 = vmatpush1.bf16.msra.mxu0 0
  %6575 = vmatprep.subr.bf16.mxu0 0
  %6576 = vmatpush1.bf16.msra.mxu0 0
  %6577 = vmatprep.mubr.bf16.mxu0 0
  %6578 = vmatmul.mubr.bf16.gmra.mrb[0].mxu0 %v6498
  %v6579 = vpop.f32.mrb[0].mxu0
  %v6580 = vadd.f32 %v6489, %v6579
  %v6581 = vpop.f32.mrb[0].mxu0
  %v6582 = vpop.f32.mrb[0].mxu0
  %v6583 = vadd.f32 %v6489, %v6582
  %v6584 = vpop.f32.mrb[0].mxu0
  %6585 = vmatprep.mubr.bf16.mxu0 0
  %6586 = vmatmul.mubr.bf16.gmra.mrb[0].mxu0 %v6501
  %v6587 = vpop.f32.mrb[0].mxu0
  %v6588 = vadd.f32 %v6489, %v6587
  %v6589 = vpop.f32.mrb[0].mxu0
  %v6590 = vpop.f32.mrb[0].mxu0
  %v6591 = vadd.f32 %v6489, %v6590
  %v6592 = vpop.f32.mrb[0].mxu0
  %6593 = vmatprep.mubr.bf16.mxu0 0
  %6594 = vmatmul.mubr.bf16.gmra.mrb[0].mxu0 %v6504
  %v6595 = vpop.f32.mrb[0].mxu0
  %v6596 = vadd.f32 %v6489, %v6595
  %v6597 = vpop.f32.mrb[0].mxu0
  %v6598 = vpop.f32.mrb[0].mxu0
  %v6599 = vadd.f32 %v6489, %v6598
  %v6600 = vpop.f32.mrb[0].mxu0
  %6601 = vmatprep.mubr.bf16.mxu0 0
  %6602 = vmatmul.mubr.bf16.gmra.mrb[0].mxu0 %v6507
  %v6603 = vpop.f32.mrb[0].mxu0
  %v6604 = vadd.f32 %v6489, %v6603
  %v6605 = vpop.f32.mrb[0].mxu0
  %v6606 = vpop.f32.mrb[0].mxu0
  %v6607 = vadd.f32 %v6489, %v6606
  %v6608 = vpop.f32.mrb[0].mxu0
  %6609 = vmatprep.mubr.bf16.mxu0 0
  %6610 = vmatmul.mubr.bf16.gmra.mrb[0].mxu0 %v6510
  %v6611 = vpop.f32.mrb[0].mxu0
  %v6612 = vadd.f32 %v6489, %v6611
  %v6613 = vpop.f32.mrb[0].mxu0
  %v6614 = vpop.f32.mrb[0].mxu0
  %v6615 = vadd.f32 %v6489, %v6614
  %v6616 = vpop.f32.mrb[0].mxu0
  %6617 = vmatprep.mubr.bf16.mxu0 0
  %6618 = vmatmul.mubr.bf16.gmra.mrb[0].mxu0 %v6513
  %v6619 = vpop.f32.mrb[0].mxu0
  %v6620 = vadd.f32 %v6489, %v6619
  %v6621 = vpop.f32.mrb[0].mxu0
  %v6622 = vpop.f32.mrb[0].mxu0
  %v6623 = vadd.f32 %v6489, %v6622
  %v6624 = vpop.f32.mrb[0].mxu0
  %6625 = vmatprep.mubr.bf16.mxu0 0
  %6626 = vmatmul.mubr.bf16.gmra.mrb[0].mxu0 %v6516
  %v6627 = vpop.f32.mrb[0].mxu0
  %v6628 = vadd.f32 %v6489, %v6627
  %v6629 = vpop.f32.mrb[0].mxu0
  %v6630 = vpop.f32.mrb[0].mxu0
  %v6631 = vadd.f32 %v6489, %v6630
  %v6632 = vpop.f32.mrb[0].mxu0
  %6633 = vmatprep.mubr.bf16.mxu0 0
  %6634 = vmatmul.mubr.bf16.gmra.mrb[0].mxu0 %v6519
  %v6635 = vpop.f32.mrb[0].mxu0
  %v6636 = vadd.f32 %v6489, %v6635
  %v6637 = vpop.f32.mrb[0].mxu0
  %v6638 = vpop.f32.mrb[0].mxu0
  %v6639 = vadd.f32 %v6489, %v6638
  %v6640 = vpop.f32.mrb[0].mxu0
  %6641 = vmatprep.mubr.bf16.mxu0 0
  %6642 = vmatmul.mubr.bf16.gmra.mrb[0].mxu0 %v6522
  %v6643 = vpop.f32.mrb[0].mxu0
  %v6644 = vadd.f32 %v6489, %v6643
  %v6645 = vpop.f32.mrb[0].mxu0
  %v6646 = vpop.f32.mrb[0].mxu0
  %v6647 = vadd.f32 %v6489, %v6646
  %v6648 = vpop.f32.mrb[0].mxu0
  %6649 = vmatprep.mubr.bf16.mxu0 0
  %6650 = vmatmul.mubr.bf16.gmra.mrb[0].mxu0 %v6525
  %v6651 = vpop.f32.mrb[0].mxu0
  %v6652 = vadd.f32 %v6489, %v6651
  %v6653 = vpop.f32.mrb[0].mxu0
  %v6654 = vpop.f32.mrb[0].mxu0
  %v6655 = vadd.f32 %v6489, %v6654
  %v6656 = vpop.f32.mrb[0].mxu0
  %6657 = vmatprep.mubr.bf16.mxu0 0
  %6658 = vmatmul.mubr.bf16.gmra.mrb[0].mxu0 %v6528
  %v6659 = vpop.f32.mrb[0].mxu0
  %v6660 = vadd.f32 %v6489, %v6659
  %v6661 = vpop.f32.mrb[0].mxu0
  %v6662 = vpop.f32.mrb[0].mxu0
  %v6663 = vadd.f32 %v6489, %v6662
  %v6664 = vpop.f32.mrb[0].mxu0
  %6665 = vmatprep.mubr.bf16.mxu0 0
  %6666 = vmatmul.mubr.bf16.gmra.mrb[0].mxu0 %v6531
  %v6667 = vpop.f32.mrb[0].mxu0
  %v6668 = vadd.f32 %v6489, %v6667
  %v6669 = vpop.f32.mrb[0].mxu0
  %v6670 = vpop.f32.mrb[0].mxu0
  %v6671 = vadd.f32 %v6489, %v6670
  %v6672 = vpop.f32.mrb[0].mxu0
  %6673 = vmatprep.mubr.bf16.mxu0 0
  %6674 = vmatmul.mubr.bf16.gmra.mrb[0].mxu0 %v6534
  %v6675 = vpop.f32.mrb[0].mxu0
  %v6676 = vadd.f32 %v6489, %v6675
  %v6677 = vpop.f32.mrb[0].mxu0
  %v6678 = vpop.f32.mrb[0].mxu0
  %v6679 = vadd.f32 %v6489, %v6678
  %v6680 = vpop.f32.mrb[0].mxu0
  %6681 = vmatprep.mubr.bf16.mxu0 0
  %6682 = vmatmul.mubr.bf16.gmra.mrb[0].mxu0 %v6537
  %v6683 = vpop.f32.mrb[0].mxu0
  %v6684 = vadd.f32 %v6489, %v6683
  %v6685 = vpop.f32.mrb[0].mxu0
  %v6686 = vpop.f32.mrb[0].mxu0
  %v6687 = vadd.f32 %v6489, %v6686
  %v6688 = vpop.f32.mrb[0].mxu0
  %6689 = vmatprep.mubr.bf16.mxu0 0
  %6690 = vmatmul.mubr.bf16.gmra.mrb[0].mxu0 %v6540
  %v6691 = vpop.f32.mrb[0].mxu0
  %v6692 = vadd.f32 %v6489, %v6691
  %v6693 = vpop.f32.mrb[0].mxu0
  %v6694 = vpop.f32.mrb[0].mxu0
  %v6695 = vadd.f32 %v6489, %v6694
  %v6696 = vpop.f32.mrb[0].mxu0
  %6697 = vmatprep.mubr.bf16.mxu0 0
  %6698 = vmatmul.mubr.bf16.gmra.mrb[0].mxu0 %v6543
  %v6699 = vpop.f32.mrb[0].mxu0
  %v6700 = vadd.f32 %v6489, %v6699
  %v6701 = vpop.f32.mrb[0].mxu0
  %v6702 = vpop.f32.mrb[0].mxu0
  %v6703 = vadd.f32 %v6489, %v6702
  %v6704 = vpop.f32.mrb[0].mxu0
  %6705 = vdwg.mxu0
  %6706 = vst [vmem:[%s16] sm:$0xff] %v6580
  %6707 = vst [vmem:[%s16 + $0x8] sm:$0xff] %v6583
  %6708 = vst [vmem:[%s16 + $0x10] sm:$0xff] %v6588
  %6709 = vst [vmem:[%s16 + $0x18] sm:$0xff] %v6591
  %6710 = vst [vmem:[%s16 + $0x20] sm:$0xff] %v6596
  %6711 = vst [vmem:[%s16 + $0x28] sm:$0xff] %v6599
  %6712 = vst [vmem:[%s16 + $0x30] sm:$0xff] %v6604
  %6713 = vst [vmem:[%s16 + $0x38] sm:$0xff] %v6607
  %6714 = vst [vmem:[%s16 + $0x40] sm:$0xff] %v6612
  %6715 = vst [vmem:[%s16 + $0x48] sm:$0xff] %v6615
  %6716 = vst [vmem:[%s16 + $0x50] sm:$0xff] %v6620
  %6717 = vst [vmem:[%s16 + $0x58] sm:$0xff] %v6623
  %6718 = vst [vmem:[%s16 + $0x60] sm:$0xff] %v6628
  %6719 = vst [vmem:[%s16 + $0x68] sm:$0xff] %v6631
  %6720 = vst [vmem:[%s16 + $0x70] sm:$0xff] %v6636
  %6721 = vst [vmem:[%s16 + $0x78] sm:$0xff] %v6639
  %6722 = vst [vmem:[%s16 + $0x80] sm:$0xff] %v6644
  %6723 = vst [vmem:[%s16 + $0x88] sm:$0xff] %v6647
  %6724 = vst [vmem:[%s16 + $0x90] sm:$0xff] %v6652
  %6725 = vst [vmem:[%s16 + $0x98] sm:$0xff] %v6655
  %6726 = vst [vmem:[%s16 + $0xa0] sm:$0xff] %v6660
  %6727 = vst [vmem:[%s16 + $0xa8] sm:$0xff] %v6663
  %6728 = vst [vmem:[%s16 + $0xb0] sm:$0xff] %v6668
  %6729 = vst [vmem:[%s16 + $0xb8] sm:$0xff] %v6671
  %6730 = vst [vmem:[%s16 + $0xc0] sm:$0xff] %v6676
  %6731 = vst [vmem:[%s16 + $0xc8] sm:$0xff] %v6679
  %6732 = vst [vmem:[%s16 + $0xd0] sm:$0xff] %v6684
  %6733 = vst [vmem:[%s16 + $0xd8] sm:$0xff] %v6687
  %6734 = vst [vmem:[%s16 + $0xe0] sm:$0xff] %v6692
  %6735 = vst [vmem:[%s16 + $0xe8] sm:$0xff] %v6695
  %6736 = vst [vmem:[%s16 + $0xf0] sm:$0xff] %v6700
  %6737 = vst [vmem:[%s16 + $0xf8] sm:$0xff] %v6703
  // Predicated region
  $region66: #{graphnet_forward.1} parent=0 // pred_check
    _
  $region67: #{graphnet_forward.1} parent=0 // pred_check_branch
    %6739 = sbr.rel (0) target = $region69
  $region68: #{graphnet_forward.1} parent=0 // pred_region
    _
  $region69: #{graphnet_forward.1} parent=0 // pred_fallthru
    _
  // Predicated region
  $region70: #{graphnet_forward.1} parent=0 // pred_check
    _
  $region71: #{graphnet_forward.1} parent=0 // pred_check_branch
    %6741 = sbr.rel (0) target = $region73
  $region72: #{graphnet_forward.1} parent=0 // pred_region
    _
  $region73: #{graphnet_forward.1} parent=0 // pred_fallthru
    _

</llo_original>
